<compile_context>
chip_gen: v5e
topology: v5e:2x2
jax: 0.10.0
libtpu: 0.0.40
codegen_flags: <defaults>
</compile_context>

<pallas_src>
import functools

import jax
import jax.numpy as jnp
from jax import lax
from jax.experimental import pallas as pl
from jax.experimental.pallas import tpu as pltpu

LANE = 128


def _rup(n, m):
    return ((n + m - 1) // m) * m


# -----------------------------------------------------------------------------
# Fused decoder-block kernels
# -----------------------------------------------------------------------------
def _block_kernel_glu(x_ref, f_ref, w1x_ref, w1f_ref, b1_ref, wt_ref, bt_ref,
                      o_ref, xpad, fpad, hpad, *, d, t):
    nh = wt_ref.shape[1]

    # ---- stage 1: dilated Conv1d(k=3, pad=d) over [x | feature] + fused GLU -
    xpad[...] = jnp.zeros_like(xpad)
    fpad[...] = jnp.zeros_like(fpad)
    xpad[d:d + t, :] = x_ref[0]
    fpad[d:d + t, :] = f_ref[0]

    acc = jnp.dot(xpad[0:t, :], w1x_ref[0], preferred_element_type=jnp.float32)
    acc = acc + jnp.dot(fpad[0:t, :], w1f_ref[0],
                        preferred_element_type=jnp.float32)
    for k in (1, 2):
        s = k * d
        acc = acc + jnp.dot(xpad[s:s + t, :], w1x_ref[k],
                            preferred_element_type=jnp.float32)
        acc = acc + jnp.dot(fpad[s:s + t, :], w1f_ref[k],
                            preferred_element_type=jnp.float32)
    acc = acc + b1_ref[...]
    a = acc[:, :nh]
    g = acc[:, nh:]
    # GLU: a * sigmoid(g); divide goes to the EUP via the approx reciprocal.
    h = a * pl.reciprocal(1.0 + jnp.exp(-g), approx=True)

    # ---- stage 2: phase-split ConvTranspose1d(k=4, s=2, p=1) + ReLU ---------
    # even[m] = h[m]@w1 + h[m-1]@w3 ; odd[m] = h[m]@w2 + h[m+1]@w0
    hpad[...] = jnp.zeros_like(hpad)
    hpad[1:1 + t, :] = h.astype(hpad.dtype)
    acc2 = jnp.dot(hpad[0:t, :], wt_ref[0], preferred_element_type=jnp.float32)
    for k in (1, 2):
        acc2 = acc2 + jnp.dot(hpad[k:k + t, :], wt_ref[k],
                              preferred_element_type=jnp.float32)
    acc2 = acc2 + bt_ref[...]
    o_ref[0, :, :] = jnp.maximum(acc2, 0.0).astype(o_ref.dtype)


def _block_kernel_simple(x_ref, f_ref, wtx_ref, wtf_ref, bt_ref,
                         o_ref, xpad, fpad, *, t):
    # phase-split ConvTranspose1d(k=4, s=2, p=1) + ReLU over [x | feature]
    xpad[...] = jnp.zeros_like(xpad)
    fpad[...] = jnp.zeros_like(fpad)
    xpad[1:1 + t, :] = x_ref[0]
    fpad[1:1 + t, :] = f_ref[0]
    acc = jnp.dot(xpad[0:t, :], wtx_ref[0], preferred_element_type=jnp.float32)
    acc = acc + jnp.dot(fpad[0:t, :], wtf_ref[0],
                        preferred_element_type=jnp.float32)
    for k in (1, 2):
        acc = acc + jnp.dot(xpad[k:k + t, :], wtx_ref[k],
                            preferred_element_type=jnp.float32)
        acc = acc + jnp.dot(fpad[k:k + t, :], wtf_ref[k],
                            preferred_element_type=jnp.float32)
    acc = acc + bt_ref[...]
    o_ref[0, :, :] = jnp.maximum(acc, 0.0).astype(o_ref.dtype)


def decoder_block_forward(xp, fp, blk):
    """xp: (B, T, Px) bf16 lane-padded x slab; fp: (B, T, Pf) bf16 lane-padded
    skip-feature slab.  Returns (B, 2T, Np) bf16, valid channels [0:c_out]."""
    B, T, Px = xp.shape
    Pf = fp.shape[2]
    Np = blk["np"]

    if blk["simple"]:
        kernel = functools.partial(_block_kernel_simple, t=T)
        operands = (xp, fp, blk["wtx"], blk["wtf"], blk["bt"])
        in_specs = [
            pl.BlockSpec((1, T, Px), lambda i: (i, 0, 0)),
            pl.BlockSpec((1, T, Pf), lambda i: (i, 0, 0)),
            pl.BlockSpec(blk["wtx"].shape, lambda i: (0, 0, 0)),
            pl.BlockSpec(blk["wtf"].shape, lambda i: (0, 0, 0)),
            pl.BlockSpec(blk["bt"].shape, lambda i: (0, 0)),
        ]
        scratch = [pltpu.VMEM((T + 2, Px), jnp.bfloat16),
                   pltpu.VMEM((T + 2, Pf), jnp.bfloat16)]
    else:
        d = blk["dilation"]
        Nh = blk["nh"]
        kernel = functools.partial(_block_kernel_glu, d=d, t=T)
        operands = (xp, fp, blk["w1x"], blk["w1f"], blk["b1"],
                    blk["wt"], blk["bt"])
        in_specs = [
            pl.BlockSpec((1, T, Px), lambda i: (i, 0, 0)),
            pl.BlockSpec((1, T, Pf), lambda i: (i, 0, 0)),
            pl.BlockSpec(blk["w1x"].shape, lambda i: (0, 0, 0)),
            pl.BlockSpec(blk["w1f"].shape, lambda i: (0, 0, 0)),
            pl.BlockSpec(blk["b1"].shape, lambda i: (0, 0)),
            pl.BlockSpec(blk["wt"].shape, lambda i: (0, 0, 0)),
            pl.BlockSpec(blk["bt"].shape, lambda i: (0, 0)),
        ]
        scratch = [pltpu.VMEM((T + 2 * d, Px), jnp.bfloat16),
                   pltpu.VMEM((T + 2 * d, Pf), jnp.bfloat16),
                   pltpu.VMEM((T + 2, Nh), jnp.bfloat16)]

    y = pl.pallas_call(
        kernel,
        out_shape=jax.ShapeDtypeStruct((B, T, 2 * Np), jnp.bfloat16),
        grid=(B,),
        in_specs=in_specs,
        out_specs=pl.BlockSpec((1, T, 2 * Np), lambda i: (i, 0, 0)),
        scratch_shapes=scratch,
        compiler_params=pltpu.CompilerParams(
            dimension_semantics=("parallel",)),
    )(*operands)

    # [even | odd] phase slabs -> time interleave; both sides are lane-dense
    # (Np multiple of 128), so this is a cheap re-tiling, not a masked store.
    return y.reshape(B, T, 2, Np).reshape(B, 2 * T, Np)


# -----------------------------------------------------------------------------
# RicbeDecoder forward (activations channels-last, bf16, lane-padded)
# -----------------------------------------------------------------------------
def _to_padded_bf16(x_bct, lanes):
    """(B, C, T) f32 -> (B, T, lanes) bf16, channels zero-padded to `lanes`."""
    B, C, T = x_bct.shape
    x = jnp.transpose(x_bct, (0, 2, 1))
    return jnp.pad(x, ((0, 0), (0, 0), (0, lanes - C))).astype(jnp.bfloat16)


def ricbe_decoder_forward(x_bct, features_bct, blocks, *, concatenate_last):
    """Matches RicbeDecoder.forward.  Inputs in PyTorch (B, C, T) f32 layout."""
    xp = _to_padded_bf16(x_bct, blocks[0]["px"])
    i = -1
    for blk in blocks:
        fp = _to_padded_bf16(features_bct[i], blk["pf"])
        xp = decoder_block_forward(xp, fp, blk)      # concat fused in-kernel
        i = i - 1
        xp = xp[:, :features_bct[i].shape[2], :]     # time crop (cheap slice)
    c_out = blocks[-1]["c_out"]
    out = jnp.transpose(xp[:, :, :c_out].astype(jnp.float32), (0, 2, 1))
    if concatenate_last:
        out = jnp.concatenate([out, features_bct[i]], axis=1)
    return out


# -----------------------------------------------------------------------------
# Pure-JAX f32 reference straight from the PyTorch semantics (lax.conv)
# -----------------------------------------------------------------------------
def ricbe_decoder_reference_f32(x, features, blocks, *, concatenate_last):
    i = -1
    for blk in blocks:
        x = jnp.concatenate([x, features[i]], axis=1)
        if not blk["simple"]:
            d = blk["dilation"]
            y = lax.conv_general_dilated(
                x, blk["w1_raw"], window_strides=(1,), padding=[(d, d)],
                rhs_dilation=(d,), dimension_numbers=("NCH", "OIH", "NCH"))
            y = y + blk["b1_raw"][None, :, None]
            c = y.shape[1] // 2
            x = y[:, :c] * jax.nn.sigmoid(y[:, c:])
        # ConvTranspose1d(k=4, s=2, p=1) == lhs-dilated conv with flipped kernel
        wt_conv = jnp.flip(blk["wt_raw"], axis=2).transpose(1, 0, 2)
        y = lax.conv_general_dilated(
            x, wt_conv, window_strides=(1,), padding=[(2, 2)],
            lhs_dilation=(2,), dimension_numbers=("NCH", "OIH", "NCH"))
        x = jnp.maximum(y + blk["bt_raw"][None, :, None], 0.0)
        i = i - 1
        x = x[:, :, :features[i].shape[2]]
    if concatenate_last:
        x = jnp.concatenate([x, features[i]], axis=1)
    return x


# -----------------------------------------------------------------------------
# Parameter construction (mirrors RicbeDecoder.__init__) + TPU weight packing
# -----------------------------------------------------------------------------
def init_decoder(key, block_count, channels_input, channels_decrease_per_layer,
                 dilation, simple_decoder):
    blocks = []
    c_now = channels_input
    px = _rup(channels_input, LANE)          # lane width of the incoming x slab
    for _ in range(block_count):
        c_next = c_now - channels_decrease_per_layer
        cx = cf = c_now                      # real channels in x / feature slabs
        c_in, c_out = 2 * c_now, c_next
        pf = _rup(cf, LANE)
        Np = _rup(c_out, LANE)
        key, k1, k2, k3, k4 = jax.random.split(key, 5)
        blk = {"simple": simple_decoder, "dilation": dilation, "c_in": c_in,
               "c_out": c_out, "cx": cx, "cf": cf, "px": px, "pf": pf,
               "np": Np}

        # --- ConvTranspose1d(c_in, c_out, k=4, stride=2, padding=1) ----------
        wt = 0.1 * jax.random.normal(k3, (c_in, c_out, 4), jnp.float32)
        bt = 0.1 * jax.random.normal(k4, (c_out,), jnp.float32)
        blk["wt_raw"], blk["bt_raw"] = wt, bt
        bt_p = jnp.zeros((1, 2 * Np), jnp.float32)
        blk["bt"] = bt_p.at[0, :c_out].set(bt).at[0, Np:Np + c_out].set(bt)

        def _phase_pack(w_rows, p_rows):
            # even[m]=h[m]@w1 + h[m-1]@w3 ; odd[m]=h[m]@w2 + h[m+1]@w0
            n = w_rows.shape[0]
            W = jnp.zeros((3, p_rows, 2 * Np), jnp.float32)
            W = W.at[0, :n, :c_out].set(w_rows[:, :, 3])
            W = W.at[1, :n, :c_out].set(w_rows[:, :, 1])
            W = W.at[1, :n, Np:Np + c_out].set(w_rows[:, :, 2])
            W = W.at[2, :n, Np:Np + c_out].set(w_rows[:, :, 0])
            return W.astype(jnp.bfloat16)

        if simple_decoder:
            # transpose conv consumes [x | feature] directly (two matmul groups)
            blk["wtx"] = _phase_pack(wt[:cx], px)
            blk["wtf"] = _phase_pack(wt[cx:], pf)
        else:
            Nh = _rup(c_in, LANE)
            blk["nh"] = Nh
            # --- Conv1d(c_in, 2*c_in, k=3, dilation=d, padding=d) + GLU ------
            w1 = 0.1 * jax.random.normal(k1, (2 * c_in, c_in, 3), jnp.float32)
            b1 = 0.1 * jax.random.normal(k2, (2 * c_in,), jnp.float32)
            blk["w1_raw"], blk["b1_raw"] = w1, b1
            w1_kio = jnp.transpose(w1, (2, 1, 0))      # (3, in, out=2*c_in)

            def _glu_pack(rows, p_rows):
                n = rows.shape[1]
                W = jnp.zeros((3, p_rows, 2 * Nh), jnp.float32)
                W = W.at[:, :n, :c_in].set(rows[:, :, :c_in])          # "a"
                W = W.at[:, :n, Nh:Nh + c_in].set(rows[:, :, c_in:])   # gate
                return W.astype(jnp.bfloat16)

            blk["w1x"] = _glu_pack(w1_kio[:, :cx, :], px)
            blk["w1f"] = _glu_pack(w1_kio[:, cx:, :], pf)
            b1_p = jnp.zeros((1, 2 * Nh), jnp.float32)
            blk["b1"] = (b1_p.at[0, :c_in].set(b1[:c_in])
                             .at[0, Nh:Nh + c_in].set(b1[c_in:]))
            # transpose conv consumes GLU output h (Nh lanes, [0:c_in] valid)
            blk["wt"] = _phase_pack(wt, Nh)

        blocks.append(blk)
        c_now = c_next
        px = Np                              # next block's x slab lane layout
    return blocks


# -----------------------------------------------------------------------------
if __name__ == "__main__":
    key = jax.random.PRNGKey(0)

    block_count = 2
    channels_input = 8
    channels_decrease_per_layer = 2
    dilation = 2
    concatenate_last = True

    kx, kf0, kf1, kf2, kp, kp2 = jax.random.split(key, 6)
    # x: (B, C, T); features must have matching channels / lengths per level
    x = jax.random.normal(kx, (2, 8, 8), jnp.float32)
    features = [
        jax.random.normal(kf0, (2, 4, 29), jnp.float32),   # used by last concat
        jax.random.normal(kf1, (2, 6, 15), jnp.float32),
        jax.random.normal(kf2, (2, 8, 8), jnp.float32),
    ]

    for simple_decoder, kparam in ((False, kp), (True, kp2)):
        blocks = init_decoder(kparam, block_count, channels_input,
                              channels_decrease_per_layer, dilation,
                              simple_decoder)
        fwd = jax.jit(functools.partial(ricbe_decoder_forward, blocks=blocks,
                                        concatenate_last=concatenate_last))
        out = jax.block_until_ready(fwd(x, features))
        assert out.shape == (2, 8, 29), out.shape

        ref = ricbe_decoder_reference_f32(x, features, blocks,
                                          concatenate_last=concatenate_last)
        err = float(jnp.max(jnp.abs(out - ref)))
        # bf16 MXU inputs / bf16 inter-block activations vs f32 reference
        assert err < 5e-2, (simple_decoder, err)

    print("KERNEL_OK")
</pallas_src>

<mosaic_0001>
module attributes {stable_mosaic.version = 11 : i64} {
  func.func @_block_kernel_glu(%arg0: i32, %arg1: memref<1x8x128xbf16, #tpu.memory_space<vmem>>, %arg2: memref<1x8x128xbf16, #tpu.memory_space<vmem>>, %arg3: memref<3x128x256xbf16, #tpu.memory_space<vmem>>, %arg4: memref<3x128x256xbf16, #tpu.memory_space<vmem>>, %arg5: memref<1x256xf32, #tpu.memory_space<vmem>>, %arg6: memref<3x128x256xbf16, #tpu.memory_space<vmem>>, %arg7: memref<1x256xf32, #tpu.memory_space<vmem>>, %arg8: memref<1x8x256xbf16, #tpu.memory_space<vmem>>, %arg9: memref<12x128xbf16, #tpu.memory_space<vmem>>, %arg10: memref<12x128xbf16, #tpu.memory_space<vmem>>, %arg11: memref<10x128xbf16, #tpu.memory_space<vmem>>) attributes {dimension_semantics = [#tpu.dimension_semantics<parallel>], iteration_bounds = array<i64: 2>, scalar_prefetch = 0 : i64, scratch_operands = 3 : i64, tpu.core_type = #tpu.core_type<tc>, window_params = [{transform_indices = @transform_0, window_bounds = array<i64: 1, 8, 128>}, {transform_indices = @transform_1, window_bounds = array<i64: 1, 8, 128>}, {pipeline_mode = #tpu.pipeline_mode<synchronous>, transform_indices = @transform_2, window_bounds = array<i64: 3, 128, 256>}, {pipeline_mode = #tpu.pipeline_mode<synchronous>, transform_indices = @transform_3, window_bounds = array<i64: 3, 128, 256>}, {pipeline_mode = #tpu.pipeline_mode<synchronous>, transform_indices = @transform_4, window_bounds = array<i64: 1, 256>}, {pipeline_mode = #tpu.pipeline_mode<synchronous>, transform_indices = @transform_5, window_bounds = array<i64: 3, 128, 256>}, {pipeline_mode = #tpu.pipeline_mode<synchronous>, transform_indices = @transform_6, window_bounds = array<i64: 1, 256>}, {transform_indices = @transform_7, window_bounds = array<i64: 1, 8, 256>}]} {
    %cst = arith.constant 0.000000e+00 : bf16
    %0 = vector.broadcast %cst : bf16 to vector<12x128xbf16>
    %c0 = arith.constant 0 : index
    %c0_0 = arith.constant 0 : index
    %1 = vector.load %arg9[%c0, %c0_0] : memref<12x128xbf16, #tpu.memory_space<vmem>>, vector<12x128xbf16>
    tpu.vector_store %arg9[%c0, %c0_0], %0 {strides = array<i32>} : memref<12x128xbf16, #tpu.memory_space<vmem>>, vector<12x128xbf16>,
    %cst_1 = arith.constant 0.000000e+00 : bf16
    %2 = vector.broadcast %cst_1 : bf16 to vector<12x128xbf16>
    %c0_2 = arith.constant 0 : index
    %c0_3 = arith.constant 0 : index
    %3 = vector.load %arg10[%c0_2, %c0_3] : memref<12x128xbf16, #tpu.memory_space<vmem>>, vector<12x128xbf16>
    tpu.vector_store %arg10[%c0_2, %c0_3], %2 {strides = array<i32>} : memref<12x128xbf16, #tpu.memory_space<vmem>>, vector<12x128xbf16>,
    %c0_4 = arith.constant 0 : index
    %c0_5 = arith.constant 0 : index
    %c0_6 = arith.constant 0 : index
    %4 = vector.load %arg1[%c0_4, %c0_5, %c0_6] : memref<1x8x128xbf16, #tpu.memory_space<vmem>>, vector<1x8x128xbf16>
    %5 = vector.shape_cast %4 : vector<1x8x128xbf16> to vector<8x128xbf16>
    %c2 = arith.constant 2 : index
    %c0_7 = arith.constant 0 : index
    %6 = vector.load %arg9[%c2, %c0_7] : memref<12x128xbf16, #tpu.memory_space<vmem>>, vector<8x128xbf16>
    tpu.vector_store %arg9[%c2, %c0_7], %5 {strides = array<i32>} : memref<12x128xbf16, #tpu.memory_space<vmem>>, vector<8x128xbf16>,
    %c0_8 = arith.constant 0 : index
    %c0_9 = arith.constant 0 : index
    %c0_10 = arith.constant 0 : index
    %7 = vector.load %arg2[%c0_8, %c0_9, %c0_10] : memref<1x8x128xbf16, #tpu.memory_space<vmem>>, vector<1x8x128xbf16>
    %8 = vector.shape_cast %7 : vector<1x8x128xbf16> to vector<8x128xbf16>
    %c2_11 = arith.constant 2 : index
    %c0_12 = arith.constant 0 : index
    %9 = vector.load %arg10[%c2_11, %c0_12] : memref<12x128xbf16, #tpu.memory_space<vmem>>, vector<8x128xbf16>
    tpu.vector_store %arg10[%c2_11, %c0_12], %8 {strides = array<i32>} : memref<12x128xbf16, #tpu.memory_space<vmem>>, vector<8x128xbf16>,
    %c0_13 = arith.constant 0 : index
    %c0_14 = arith.constant 0 : index
    %10 = vector.load %arg9[%c0_13, %c0_14] : memref<12x128xbf16, #tpu.memory_space<vmem>>, vector<8x128xbf16>
    %c0_15 = arith.constant 0 : index
    %c0_16 = arith.constant 0 : index
    %c0_17 = arith.constant 0 : index
    %11 = vector.load %arg3[%c0_15, %c0_16, %c0_17] : memref<3x128x256xbf16, #tpu.memory_space<vmem>>, vector<1x128x256xbf16>
    %12 = vector.shape_cast %11 : vector<1x128x256xbf16> to vector<128x256xbf16>
    %cst_18 = arith.constant dense<0.000000e+00> : vector<8x256xf32>
    %13 = tpu.matmul %10, %12, %cst_18 {dimension_numbers = #tpu.dot_dimension_numbers<[1], [0], [0], [1], [0, 0, 1, 1], [], []>} : vector<8x128xbf16>, vector<128x256xbf16>, vector<8x256xf32> -> vector<8x256xf32>
    %c0_19 = arith.constant 0 : index
    %c0_20 = arith.constant 0 : index
    %14 = vector.load %arg10[%c0_19, %c0_20] : memref<12x128xbf16, #tpu.memory_space<vmem>>, vector<8x128xbf16>
    %c0_21 = arith.constant 0 : index
    %c0_22 = arith.constant 0 : index
    %c0_23 = arith.constant 0 : index
    %15 = vector.load %arg4[%c0_21, %c0_22, %c0_23] : memref<3x128x256xbf16, #tpu.memory_space<vmem>>, vector<1x128x256xbf16>
    %16 = vector.shape_cast %15 : vector<1x128x256xbf16> to vector<128x256xbf16>
    %cst_24 = arith.constant dense<0.000000e+00> : vector<8x256xf32>
    %17 = tpu.matmul %14, %16, %cst_24 {dimension_numbers = #tpu.dot_dimension_numbers<[1], [0], [0], [1], [0, 0, 1, 1], [], []>} : vector<8x128xbf16>, vector<128x256xbf16>, vector<8x256xf32> -> vector<8x256xf32>
    %18 = arith.addf %13, %17 : vector<8x256xf32>
    %c2_25 = arith.constant 2 : index
    %c0_26 = arith.constant 0 : index
    %19 = vector.load %arg9[%c2_25, %c0_26] : memref<12x128xbf16, #tpu.memory_space<vmem>>, vector<8x128xbf16>
    %c1 = arith.constant 1 : index
    %c0_27 = arith.constant 0 : index
    %c0_28 = arith.constant 0 : index
    %20 = vector.load %arg3[%c1, %c0_27, %c0_28] : memref<3x128x256xbf16, #tpu.memory_space<vmem>>, vector<1x128x256xbf16>
    %21 = vector.shape_cast %20 : vector<1x128x256xbf16> to vector<128x256xbf16>
    %cst_29 = arith.constant dense<0.000000e+00> : vector<8x256xf32>
    %22 = tpu.matmul %19, %21, %cst_29 {dimension_numbers = #tpu.dot_dimension_numbers<[1], [0], [0], [1], [0, 0, 1, 1], [], []>} : vector<8x128xbf16>, vector<128x256xbf16>, vector<8x256xf32> -> vector<8x256xf32>
    %23 = arith.addf %18, %22 : vector<8x256xf32>
    %c2_30 = arith.constant 2 : index
    %c0_31 = arith.constant 0 : index
    %24 = vector.load %arg10[%c2_30, %c0_31] : memref<12x128xbf16, #tpu.memory_space<vmem>>, vector<8x128xbf16>
    %c1_32 = arith.constant 1 : index
    %c0_33 = arith.constant 0 : index
    %c0_34 = arith.constant 0 : index
    %25 = vector.load %arg4[%c1_32, %c0_33, %c0_34] : memref<3x128x256xbf16, #tpu.memory_space<vmem>>, vector<1x128x256xbf16>
    %26 = vector.shape_cast %25 : vector<1x128x256xbf16> to vector<128x256xbf16>
    %cst_35 = arith.constant dense<0.000000e+00> : vector<8x256xf32>
    %27 = tpu.matmul %24, %26, %cst_35 {dimension_numbers = #tpu.dot_dimension_numbers<[1], [0], [0], [1], [0, 0, 1, 1], [], []>} : vector<8x128xbf16>, vector<128x256xbf16>, vector<8x256xf32> -> vector<8x256xf32>
    %28 = arith.addf %23, %27 : vector<8x256xf32>
    %c4 = arith.constant 4 : index
    %c0_36 = arith.constant 0 : index
    %29 = vector.load %arg9[%c4, %c0_36] : memref<12x128xbf16, #tpu.memory_space<vmem>>, vector<8x128xbf16>
    %c2_37 = arith.constant 2 : index
    %c0_38 = arith.constant 0 : index
    %c0_39 = arith.constant 0 : index
    %30 = vector.load %arg3[%c2_37, %c0_38, %c0_39] : memref<3x128x256xbf16, #tpu.memory_space<vmem>>, vector<1x128x256xbf16>
    %31 = vector.shape_cast %30 : vector<1x128x256xbf16> to vector<128x256xbf16>
    %cst_40 = arith.constant dense<0.000000e+00> : vector<8x256xf32>
    %32 = tpu.matmul %29, %31, %cst_40 {dimension_numbers = #tpu.dot_dimension_numbers<[1], [0], [0], [1], [0, 0, 1, 1], [], []>} : vector<8x128xbf16>, vector<128x256xbf16>, vector<8x256xf32> -> vector<8x256xf32>
    %33 = arith.addf %28, %32 : vector<8x256xf32>
    %c4_41 = arith.constant 4 : index
    %c0_42 = arith.constant 0 : index
    %34 = vector.load %arg10[%c4_41, %c0_42] : memref<12x128xbf16, #tpu.memory_space<vmem>>, vector<8x128xbf16>
    %c2_43 = arith.constant 2 : index
    %c0_44 = arith.constant 0 : index
    %c0_45 = arith.constant 0 : index
    %35 = vector.load %arg4[%c2_43, %c0_44, %c0_45] : memref<3x128x256xbf16, #tpu.memory_space<vmem>>, vector<1x128x256xbf16>
    %36 = vector.shape_cast %35 : vector<1x128x256xbf16> to vector<128x256xbf16>
    %cst_46 = arith.constant dense<0.000000e+00> : vector<8x256xf32>
    %37 = tpu.matmul %34, %36, %cst_46 {dimension_numbers = #tpu.dot_dimension_numbers<[1], [0], [0], [1], [0, 0, 1, 1], [], []>} : vector<8x128xbf16>, vector<128x256xbf16>, vector<8x256xf32> -> vector<8x256xf32>
    %38 = arith.addf %33, %37 : vector<8x256xf32>
    %c0_47 = arith.constant 0 : index
    %c0_48 = arith.constant 0 : index
    %39 = vector.load %arg5[%c0_47, %c0_48] : memref<1x256xf32, #tpu.memory_space<vmem>>, vector<1x256xf32>
    %40 = vector.broadcast %39 : vector<1x256xf32> to vector<8x256xf32>
    %41 = arith.addf %38, %40 : vector<8x256xf32>
    %42 = vector.extract_strided_slice %41 {offsets = [0, 0], sizes = [8, 128], strides = [1, 1]} : vector<8x256xf32> to vector<8x128xf32>
    %43 = vector.extract_strided_slice %41 {offsets = [0, 128], sizes = [8, 128], strides = [1, 1]} : vector<8x256xf32> to vector<8x128xf32>
    %cst_49 = arith.constant 0.000000e+00 : f32
    %44 = vector.broadcast %cst_49 : f32 to vector<8x128xf32>
    %45 = arith.subf %44, %43 : vector<8x128xf32>
    %46 = math.exp %45 : vector<8x128xf32>
    %cst_50 = arith.constant 1.000000e+00 : f32
    %47 = vector.broadcast %cst_50 : f32 to vector<8x128xf32>
    %48 = arith.addf %47, %46 : vector<8x128xf32>
    %49 = tpu.reciprocal %48 {approx = true} : vector<8x128xf32> -> vector<8x128xf32>
    %50 = arith.mulf %42, %49 : vector<8x128xf32>
    %cst_51 = arith.constant 0.000000e+00 : bf16
    %51 = vector.broadcast %cst_51 : bf16 to vector<10x128xbf16>
    %c0_52 = arith.constant 0 : index
    %c0_53 = arith.constant 0 : index
    %52 = vector.load %arg11[%c0_52, %c0_53] : memref<10x128xbf16, #tpu.memory_space<vmem>>, vector<10x128xbf16>
    tpu.vector_store %arg11[%c0_52, %c0_53], %51 {strides = array<i32>} : memref<10x128xbf16, #tpu.memory_space<vmem>>, vector<10x128xbf16>,
    %53 = arith.truncf %50 : vector<8x128xf32> to vector<8x128xbf16>
    %c1_54 = arith.constant 1 : index
    %c0_55 = arith.constant 0 : index
    %54 = vector.load %arg11[%c1_54, %c0_55] : memref<10x128xbf16, #tpu.memory_space<vmem>>, vector<8x128xbf16>
    tpu.vector_store %arg11[%c1_54, %c0_55], %53 {strides = array<i32>} : memref<10x128xbf16, #tpu.memory_space<vmem>>, vector<8x128xbf16>,
    %c0_56 = arith.constant 0 : index
    %c0_57 = arith.constant 0 : index
    %55 = vector.load %arg11[%c0_56, %c0_57] : memref<10x128xbf16, #tpu.memory_space<vmem>>, vector<8x128xbf16>
    %c0_58 = arith.constant 0 : index
    %c0_59 = arith.constant 0 : index
    %c0_60 = arith.constant 0 : index
    %56 = vector.load %arg6[%c0_58, %c0_59, %c0_60] : memref<3x128x256xbf16, #tpu.memory_space<vmem>>, vector<1x128x256xbf16>
    %57 = vector.shape_cast %56 : vector<1x128x256xbf16> to vector<128x256xbf16>
    %cst_61 = arith.constant dense<0.000000e+00> : vector<8x256xf32>
    %58 = tpu.matmul %55, %57, %cst_61 {dimension_numbers = #tpu.dot_dimension_numbers<[1], [0], [0], [1], [0, 0, 1, 1], [], []>} : vector<8x128xbf16>, vector<128x256xbf16>, vector<8x256xf32> -> vector<8x256xf32>
    %c1_62 = arith.constant 1 : index
    %c0_63 = arith.constant 0 : index
    %59 = vector.load %arg11[%c1_62, %c0_63] : memref<10x128xbf16, #tpu.memory_space<vmem>>, vector<8x128xbf16>
    %c1_64 = arith.constant 1 : index
    %c0_65 = arith.constant 0 : index
    %c0_66 = arith.constant 0 : index
    %60 = vector.load %arg6[%c1_64, %c0_65, %c0_66] : memref<3x128x256xbf16, #tpu.memory_space<vmem>>, vector<1x128x256xbf16>
    %61 = vector.shape_cast %60 : vector<1x128x256xbf16> to vector<128x256xbf16>
    %cst_67 = arith.constant dense<0.000000e+00> : vector<8x256xf32>
    %62 = tpu.matmul %59, %61, %cst_67 {dimension_numbers = #tpu.dot_dimension_numbers<[1], [0], [0], [1], [0, 0, 1, 1], [], []>} : vector<8x128xbf16>, vector<128x256xbf16>, vector<8x256xf32> -> vector<8x256xf32>
    %63 = arith.addf %58, %62 : vector<8x256xf32>
    %c2_68 = arith.constant 2 : index
    %c0_69 = arith.constant 0 : index
    %64 = vector.load %arg11[%c2_68, %c0_69] : memref<10x128xbf16, #tpu.memory_space<vmem>>, vector<8x128xbf16>
    %c2_70 = arith.constant 2 : index
    %c0_71 = arith.constant 0 : index
    %c0_72 = arith.constant 0 : index
    %65 = vector.load %arg6[%c2_70, %c0_71, %c0_72] : memref<3x128x256xbf16, #tpu.memory_space<vmem>>, vector<1x128x256xbf16>
    %66 = vector.shape_cast %65 : vector<1x128x256xbf16> to vector<128x256xbf16>
    %cst_73 = arith.constant dense<0.000000e+00> : vector<8x256xf32>
    %67 = tpu.matmul %64, %66, %cst_73 {dimension_numbers = #tpu.dot_dimension_numbers<[1], [0], [0], [1], [0, 0, 1, 1], [], []>} : vector<8x128xbf16>, vector<128x256xbf16>, vector<8x256xf32> -> vector<8x256xf32>
    %68 = arith.addf %63, %67 : vector<8x256xf32>
    %c0_74 = arith.constant 0 : index
    %c0_75 = arith.constant 0 : index
    %69 = vector.load %arg7[%c0_74, %c0_75] : memref<1x256xf32, #tpu.memory_space<vmem>>, vector<1x256xf32>
    %70 = vector.broadcast %69 : vector<1x256xf32> to vector<8x256xf32>
    %71 = arith.addf %68, %70 : vector<8x256xf32>
    %cst_76 = arith.constant 0.000000e+00 : f32
    %72 = vector.broadcast %cst_76 : f32 to vector<8x256xf32>
    %73 = arith.maximumf %71, %72 : vector<8x256xf32>
    %74 = arith.truncf %73 : vector<8x256xf32> to vector<8x256xbf16>
    %c0_77 = arith.constant 0 : index
    %c0_78 = arith.constant 0 : index
    %c0_79 = arith.constant 0 : index
    %75 = vector.load %arg8[%c0_77, %c0_78, %c0_79] : memref<1x8x256xbf16, #tpu.memory_space<vmem>>, vector<1x8x256xbf16>
    %76 = vector.shape_cast %75 : vector<1x8x256xbf16> to vector<8x256xbf16>
    %77 = vector.shape_cast %74 : vector<8x256xbf16> to vector<1x8x256xbf16>
    tpu.vector_store %arg8[%c0_77, %c0_78, %c0_79], %77 {strides = array<i32>} : memref<1x8x256xbf16, #tpu.memory_space<vmem>>, vector<1x8x256xbf16>,
    return
  }
  func.func @transform_0(%arg0: i32) -> (i32, i32, i32) {
    %c0_i32 = arith.constant 0 : i32
    %c0_i32_0 = arith.constant 0 : i32
    %c0_i32_1 = arith.constant 0 : i32
    return %arg0, %c0_i32, %c0_i32_0 : i32, i32, i32
  }
  func.func @transform_1(%arg0: i32) -> (i32, i32, i32) {
    %c0_i32 = arith.constant 0 : i32
    %c0_i32_0 = arith.constant 0 : i32
    %c0_i32_1 = arith.constant 0 : i32
    return %arg0, %c0_i32, %c0_i32_0 : i32, i32, i32
  }
  func.func @transform_2(%arg0: i32) -> (i32, i32, i32) {
    %c0_i32 = arith.constant 0 : i32
    %c0_i32_0 = arith.constant 0 : i32
    %c0_i32_1 = arith.constant 0 : i32
    %c0_i32_2 = arith.constant 0 : i32
    return %c0_i32, %c0_i32_0, %c0_i32_1 : i32, i32, i32
  }
  func.func @transform_3(%arg0: i32) -> (i32, i32, i32) {
    %c0_i32 = arith.constant 0 : i32
    %c0_i32_0 = arith.constant 0 : i32
    %c0_i32_1 = arith.constant 0 : i32
    %c0_i32_2 = arith.constant 0 : i32
    return %c0_i32, %c0_i32_0, %c0_i32_1 : i32, i32, i32
  }
  func.func @transform_4(%arg0: i32) -> (i32, i32) {
    %c0_i32 = arith.constant 0 : i32
    %c0_i32_0 = arith.constant 0 : i32
    %c0_i32_1 = arith.constant 0 : i32
    return %c0_i32, %c0_i32_0 : i32, i32
  }
  func.func @transform_5(%arg0: i32) -> (i32, i32, i32) {
    %c0_i32 = arith.constant 0 : i32
    %c0_i32_0 = arith.constant 0 : i32
    %c0_i32_1 = arith.constant 0 : i32
    %c0_i32_2 = arith.constant 0 : i32
    return %c0_i32, %c0_i32_0, %c0_i32_1 : i32, i32, i32
  }
  func.func @transform_6(%arg0: i32) -> (i32, i32) {
    %c0_i32 = arith.constant 0 : i32
    %c0_i32_0 = arith.constant 0 : i32
    %c0_i32_1 = arith.constant 0 : i32
    return %c0_i32, %c0_i32_0 : i32, i32
  }
  func.func @transform_7(%arg0: i32) -> (i32, i32, i32) {
    %c0_i32 = arith.constant 0 : i32
    %c0_i32_0 = arith.constant 0 : i32
    %c0_i32_1 = arith.constant 0 : i32
    return %arg0, %c0_i32, %c0_i32_0 : i32, i32, i32
  }
}

module attributes {stable_mosaic.version = 11 : i64} {
  func.func @_block_kernel_glu(%arg0: i32, %arg1: memref<1x15x128xbf16, #tpu.memory_space<vmem>>, %arg2: memref<1x15x128xbf16, #tpu.memory_space<vmem>>, %arg3: memref<3x128x256xbf16, #tpu.memory_space<vmem>>, %arg4: memref<3x128x256xbf16, #tpu.memory_space<vmem>>, %arg5: memref<1x256xf32, #tpu.memory_space<vmem>>, %arg6: memref<3x128x256xbf16, #tpu.memory_space<vmem>>, %arg7: memref<1x256xf32, #tpu.memory_space<vmem>>, %arg8: memref<1x15x256xbf16, #tpu.memory_space<vmem>>, %arg9: memref<19x128xbf16, #tpu.memory_space<vmem>>, %arg10: memref<19x128xbf16, #tpu.memory_space<vmem>>, %arg11: memref<17x128xbf16, #tpu.memory_space<vmem>>) attributes {dimension_semantics = [#tpu.dimension_semantics<parallel>], iteration_bounds = array<i64: 2>, scalar_prefetch = 0 : i64, scratch_operands = 3 : i64, tpu.core_type = #tpu.core_type<tc>, window_params = [{transform_indices = @transform_0, window_bounds = array<i64: 1, 15, 128>}, {transform_indices = @transform_1, window_bounds = array<i64: 1, 15, 128>}, {pipeline_mode = #tpu.pipeline_mode<synchronous>, transform_indices = @transform_2, window_bounds = array<i64: 3, 128, 256>}, {pipeline_mode = #tpu.pipeline_mode<synchronous>, transform_indices = @transform_3, window_bounds = array<i64: 3, 128, 256>}, {pipeline_mode = #tpu.pipeline_mode<synchronous>, transform_indices = @transform_4, window_bounds = array<i64: 1, 256>}, {pipeline_mode = #tpu.pipeline_mode<synchronous>, transform_indices = @transform_5, window_bounds = array<i64: 3, 128, 256>}, {pipeline_mode = #tpu.pipeline_mode<synchronous>, transform_indices = @transform_6, window_bounds = array<i64: 1, 256>}, {transform_indices = @transform_7, window_bounds = array<i64: 1, 15, 256>}]} {
    %cst = arith.constant 0.000000e+00 : bf16
    %0 = vector.broadcast %cst : bf16 to vector<19x128xbf16>
    %c0 = arith.constant 0 : index
    %c0_0 = arith.constant 0 : index
    %1 = vector.load %arg9[%c0, %c0_0] : memref<19x128xbf16, #tpu.memory_space<vmem>>, vector<19x128xbf16>
    tpu.vector_store %arg9[%c0, %c0_0], %0 {strides = array<i32>} : memref<19x128xbf16, #tpu.memory_space<vmem>>, vector<19x128xbf16>,
    %cst_1 = arith.constant 0.000000e+00 : bf16
    %2 = vector.broadcast %cst_1 : bf16 to vector<19x128xbf16>
    %c0_2 = arith.constant 0 : index
    %c0_3 = arith.constant 0 : index
    %3 = vector.load %arg10[%c0_2, %c0_3] : memref<19x128xbf16, #tpu.memory_space<vmem>>, vector<19x128xbf16>
    tpu.vector_store %arg10[%c0_2, %c0_3], %2 {strides = array<i32>} : memref<19x128xbf16, #tpu.memory_space<vmem>>, vector<19x128xbf16>,
    %c0_4 = arith.constant 0 : index
    %c0_5 = arith.constant 0 : index
    %c0_6 = arith.constant 0 : index
    %4 = vector.load %arg1[%c0_4, %c0_5, %c0_6] : memref<1x15x128xbf16, #tpu.memory_space<vmem>>, vector<1x15x128xbf16>
    %5 = vector.shape_cast %4 : vector<1x15x128xbf16> to vector<15x128xbf16>
    %c2 = arith.constant 2 : index
    %c0_7 = arith.constant 0 : index
    %6 = vector.load %arg9[%c2, %c0_7] : memref<19x128xbf16, #tpu.memory_space<vmem>>, vector<15x128xbf16>
    tpu.vector_store %arg9[%c2, %c0_7], %5 {strides = array<i32>} : memref<19x128xbf16, #tpu.memory_space<vmem>>, vector<15x128xbf16>,
    %c0_8 = arith.constant 0 : index
    %c0_9 = arith.constant 0 : index
    %c0_10 = arith.constant 0 : index
    %7 = vector.load %arg2[%c0_8, %c0_9, %c0_10] : memref<1x15x128xbf16, #tpu.memory_space<vmem>>, vector<1x15x128xbf16>
    %8 = vector.shape_cast %7 : vector<1x15x128xbf16> to vector<15x128xbf16>
    %c2_11 = arith.constant 2 : index
    %c0_12 = arith.constant 0 : index
    %9 = vector.load %arg10[%c2_11, %c0_12] : memref<19x128xbf16, #tpu.memory_space<vmem>>, vector<15x128xbf16>
    tpu.vector_store %arg10[%c2_11, %c0_12], %8 {strides = array<i32>} : memref<19x128xbf16, #tpu.memory_space<vmem>>, vector<15x128xbf16>,
    %c0_13 = arith.constant 0 : index
    %c0_14 = arith.constant 0 : index
    %10 = vector.load %arg9[%c0_13, %c0_14] : memref<19x128xbf16, #tpu.memory_space<vmem>>, vector<15x128xbf16>
    %c0_15 = arith.constant 0 : index
    %c0_16 = arith.constant 0 : index
    %c0_17 = arith.constant 0 : index
    %11 = vector.load %arg3[%c0_15, %c0_16, %c0_17] : memref<3x128x256xbf16, #tpu.memory_space<vmem>>, vector<1x128x256xbf16>
    %12 = vector.shape_cast %11 : vector<1x128x256xbf16> to vector<128x256xbf16>
    %cst_18 = arith.constant dense<0.000000e+00> : vector<15x256xf32>
    %13 = tpu.matmul %10, %12, %cst_18 {dimension_numbers = #tpu.dot_dimension_numbers<[1], [0], [0], [1], [0, 0, 1, 1], [], []>} : vector<15x128xbf16>, vector<128x256xbf16>, vector<15x256xf32> -> vector<15x256xf32>
    %c0_19 = arith.constant 0 : index
    %c0_20 = arith.constant 0 : index
    %14 = vector.load %arg10[%c0_19, %c0_20] : memref<19x128xbf16, #tpu.memory_space<vmem>>, vector<15x128xbf16>
    %c0_21 = arith.constant 0 : index
    %c0_22 = arith.constant 0 : index
    %c0_23 = arith.constant 0 : index
    %15 = vector.load %arg4[%c0_21, %c0_22, %c0_23] : memref<3x128x256xbf16, #tpu.memory_space<vmem>>, vector<1x128x256xbf16>
    %16 = vector.shape_cast %15 : vector<1x128x256xbf16> to vector<128x256xbf16>
    %cst_24 = arith.constant dense<0.000000e+00> : vector<15x256xf32>
    %17 = tpu.matmul %14, %16, %cst_24 {dimension_numbers = #tpu.dot_dimension_numbers<[1], [0], [0], [1], [0, 0, 1, 1], [], []>} : vector<15x128xbf16>, vector<128x256xbf16>, vector<15x256xf32> -> vector<15x256xf32>
    %18 = arith.addf %13, %17 : vector<15x256xf32>
    %c2_25 = arith.constant 2 : index
    %c0_26 = arith.constant 0 : index
    %19 = vector.load %arg9[%c2_25, %c0_26] : memref<19x128xbf16, #tpu.memory_space<vmem>>, vector<15x128xbf16>
    %c1 = arith.constant 1 : index
    %c0_27 = arith.constant 0 : index
    %c0_28 = arith.constant 0 : index
    %20 = vector.load %arg3[%c1, %c0_27, %c0_28] : memref<3x128x256xbf16, #tpu.memory_space<vmem>>, vector<1x128x256xbf16>
    %21 = vector.shape_cast %20 : vector<1x128x256xbf16> to vector<128x256xbf16>
    %cst_29 = arith.constant dense<0.000000e+00> : vector<15x256xf32>
    %22 = tpu.matmul %19, %21, %cst_29 {dimension_numbers = #tpu.dot_dimension_numbers<[1], [0], [0], [1], [0, 0, 1, 1], [], []>} : vector<15x128xbf16>, vector<128x256xbf16>, vector<15x256xf32> -> vector<15x256xf32>
    %23 = arith.addf %18, %22 : vector<15x256xf32>
    %c2_30 = arith.constant 2 : index
    %c0_31 = arith.constant 0 : index
    %24 = vector.load %arg10[%c2_30, %c0_31] : memref<19x128xbf16, #tpu.memory_space<vmem>>, vector<15x128xbf16>
    %c1_32 = arith.constant 1 : index
    %c0_33 = arith.constant 0 : index
    %c0_34 = arith.constant 0 : index
    %25 = vector.load %arg4[%c1_32, %c0_33, %c0_34] : memref<3x128x256xbf16, #tpu.memory_space<vmem>>, vector<1x128x256xbf16>
    %26 = vector.shape_cast %25 : vector<1x128x256xbf16> to vector<128x256xbf16>
    %cst_35 = arith.constant dense<0.000000e+00> : vector<15x256xf32>
    %27 = tpu.matmul %24, %26, %cst_35 {dimension_numbers = #tpu.dot_dimension_numbers<[1], [0], [0], [1], [0, 0, 1, 1], [], []>} : vector<15x128xbf16>, vector<128x256xbf16>, vector<15x256xf32> -> vector<15x256xf32>
    %28 = arith.addf %23, %27 : vector<15x256xf32>
    %c4 = arith.constant 4 : index
    %c0_36 = arith.constant 0 : index
    %29 = vector.load %arg9[%c4, %c0_36] : memref<19x128xbf16, #tpu.memory_space<vmem>>, vector<15x128xbf16>
    %c2_37 = arith.constant 2 : index
    %c0_38 = arith.constant 0 : index
    %c0_39 = arith.constant 0 : index
    %30 = vector.load %arg3[%c2_37, %c0_38, %c0_39] : memref<3x128x256xbf16, #tpu.memory_space<vmem>>, vector<1x128x256xbf16>
    %31 = vector.shape_cast %30 : vector<1x128x256xbf16> to vector<128x256xbf16>
    %cst_40 = arith.constant dense<0.000000e+00> : vector<15x256xf32>
    %32 = tpu.matmul %29, %31, %cst_40 {dimension_numbers = #tpu.dot_dimension_numbers<[1], [0], [0], [1], [0, 0, 1, 1], [], []>} : vector<15x128xbf16>, vector<128x256xbf16>, vector<15x256xf32> -> vector<15x256xf32>
    %33 = arith.addf %28, %32 : vector<15x256xf32>
    %c4_41 = arith.constant 4 : index
    %c0_42 = arith.constant 0 : index
    %34 = vector.load %arg10[%c4_41, %c0_42] : memref<19x128xbf16, #tpu.memory_space<vmem>>, vector<15x128xbf16>
    %c2_43 = arith.constant 2 : index
    %c0_44 = arith.constant 0 : index
    %c0_45 = arith.constant 0 : index
    %35 = vector.load %arg4[%c2_43, %c0_44, %c0_45] : memref<3x128x256xbf16, #tpu.memory_space<vmem>>, vector<1x128x256xbf16>
    %36 = vector.shape_cast %35 : vector<1x128x256xbf16> to vector<128x256xbf16>
    %cst_46 = arith.constant dense<0.000000e+00> : vector<15x256xf32>
    %37 = tpu.matmul %34, %36, %cst_46 {dimension_numbers = #tpu.dot_dimension_numbers<[1], [0], [0], [1], [0, 0, 1, 1], [], []>} : vector<15x128xbf16>, vector<128x256xbf16>, vector<15x256xf32> -> vector<15x256xf32>
    %38 = arith.addf %33, %37 : vector<15x256xf32>
    %c0_47 = arith.constant 0 : index
    %c0_48 = arith.constant 0 : index
    %39 = vector.load %arg5[%c0_47, %c0_48] : memref<1x256xf32, #tpu.memory_space<vmem>>, vector<1x256xf32>
    %40 = vector.broadcast %39 : vector<1x256xf32> to vector<15x256xf32>
    %41 = arith.addf %38, %40 : vector<15x256xf32>
    %42 = vector.extract_strided_slice %41 {offsets = [0, 0], sizes = [15, 128], strides = [1, 1]} : vector<15x256xf32> to vector<15x128xf32>
    %43 = vector.extract_strided_slice %41 {offsets = [0, 128], sizes = [15, 128], strides = [1, 1]} : vector<15x256xf32> to vector<15x128xf32>
    %cst_49 = arith.constant 0.000000e+00 : f32
    %44 = vector.broadcast %cst_49 : f32 to vector<15x128xf32>
    %45 = arith.subf %44, %43 : vector<15x128xf32>
    %46 = math.exp %45 : vector<15x128xf32>
    %cst_50 = arith.constant 1.000000e+00 : f32
    %47 = vector.broadcast %cst_50 : f32 to vector<15x128xf32>
    %48 = arith.addf %47, %46 : vector<15x128xf32>
    %49 = tpu.reciprocal %48 {approx = true} : vector<15x128xf32> -> vector<15x128xf32>
    %50 = arith.mulf %42, %49 : vector<15x128xf32>
    %cst_51 = arith.constant 0.000000e+00 : bf16
    %51 = vector.broadcast %cst_51 : bf16 to vector<17x128xbf16>
    %c0_52 = arith.constant 0 : index
    %c0_53 = arith.constant 0 : index
    %52 = vector.load %arg11[%c0_52, %c0_53] : memref<17x128xbf16, #tpu.memory_space<vmem>>, vector<17x128xbf16>
    tpu.vector_store %arg11[%c0_52, %c0_53], %51 {strides = array<i32>} : memref<17x128xbf16, #tpu.memory_space<vmem>>, vector<17x128xbf16>,
    %53 = arith.truncf %50 : vector<15x128xf32> to vector<15x128xbf16>
    %c1_54 = arith.constant 1 : index
    %c0_55 = arith.constant 0 : index
    %54 = vector.load %arg11[%c1_54, %c0_55] : memref<17x128xbf16, #tpu.memory_space<vmem>>, vector<15x128xbf16>
    tpu.vector_store %arg11[%c1_54, %c0_55], %53 {strides = array<i32>} : memref<17x128xbf16, #tpu.memory_space<vmem>>, vector<15x128xbf16>,
    %c0_56 = arith.constant 0 : index
    %c0_57 = arith.constant 0 : index
    %55 = vector.load %arg11[%c0_56, %c0_57] : memref<17x128xbf16, #tpu.memory_space<vmem>>, vector<15x128xbf16>
    %c0_58 = arith.constant 0 : index
    %c0_59 = arith.constant 0 : index
    %c0_60 = arith.constant 0 : index
    %56 = vector.load %arg6[%c0_58, %c0_59, %c0_60] : memref<3x128x256xbf16, #tpu.memory_space<vmem>>, vector<1x128x256xbf16>
    %57 = vector.shape_cast %56 : vector<1x128x256xbf16> to vector<128x256xbf16>
    %cst_61 = arith.constant dense<0.000000e+00> : vector<15x256xf32>
    %58 = tpu.matmul %55, %57, %cst_61 {dimension_numbers = #tpu.dot_dimension_numbers<[1], [0], [0], [1], [0, 0, 1, 1], [], []>} : vector<15x128xbf16>, vector<128x256xbf16>, vector<15x256xf32> -> vector<15x256xf32>
    %c1_62 = arith.constant 1 : index
    %c0_63 = arith.constant 0 : index
    %59 = vector.load %arg11[%c1_62, %c0_63] : memref<17x128xbf16, #tpu.memory_space<vmem>>, vector<15x128xbf16>
    %c1_64 = arith.constant 1 : index
    %c0_65 = arith.constant 0 : index
    %c0_66 = arith.constant 0 : index
    %60 = vector.load %arg6[%c1_64, %c0_65, %c0_66] : memref<3x128x256xbf16, #tpu.memory_space<vmem>>, vector<1x128x256xbf16>
    %61 = vector.shape_cast %60 : vector<1x128x256xbf16> to vector<128x256xbf16>
    %cst_67 = arith.constant dense<0.000000e+00> : vector<15x256xf32>
    %62 = tpu.matmul %59, %61, %cst_67 {dimension_numbers = #tpu.dot_dimension_numbers<[1], [0], [0], [1], [0, 0, 1, 1], [], []>} : vector<15x128xbf16>, vector<128x256xbf16>, vector<15x256xf32> -> vector<15x256xf32>
    %63 = arith.addf %58, %62 : vector<15x256xf32>
    %c2_68 = arith.constant 2 : index
    %c0_69 = arith.constant 0 : index
    %64 = vector.load %arg11[%c2_68, %c0_69] : memref<17x128xbf16, #tpu.memory_space<vmem>>, vector<15x128xbf16>
    %c2_70 = arith.constant 2 : index
    %c0_71 = arith.constant 0 : index
    %c0_72 = arith.constant 0 : index
    %65 = vector.load %arg6[%c2_70, %c0_71, %c0_72] : memref<3x128x256xbf16, #tpu.memory_space<vmem>>, vector<1x128x256xbf16>
    %66 = vector.shape_cast %65 : vector<1x128x256xbf16> to vector<128x256xbf16>
    %cst_73 = arith.constant dense<0.000000e+00> : vector<15x256xf32>
    %67 = tpu.matmul %64, %66, %cst_73 {dimension_numbers = #tpu.dot_dimension_numbers<[1], [0], [0], [1], [0, 0, 1, 1], [], []>} : vector<15x128xbf16>, vector<128x256xbf16>, vector<15x256xf32> -> vector<15x256xf32>
    %68 = arith.addf %63, %67 : vector<15x256xf32>
    %c0_74 = arith.constant 0 : index
    %c0_75 = arith.constant 0 : index
    %69 = vector.load %arg7[%c0_74, %c0_75] : memref<1x256xf32, #tpu.memory_space<vmem>>, vector<1x256xf32>
    %70 = vector.broadcast %69 : vector<1x256xf32> to vector<15x256xf32>
    %71 = arith.addf %68, %70 : vector<15x256xf32>
    %cst_76 = arith.constant 0.000000e+00 : f32
    %72 = vector.broadcast %cst_76 : f32 to vector<15x256xf32>
    %73 = arith.maximumf %71, %72 : vector<15x256xf32>
    %74 = arith.truncf %73 : vector<15x256xf32> to vector<15x256xbf16>
    %c0_77 = arith.constant 0 : index
    %c0_78 = arith.constant 0 : index
    %c0_79 = arith.constant 0 : index
    %75 = vector.load %arg8[%c0_77, %c0_78, %c0_79] : memref<1x15x256xbf16, #tpu.memory_space<vmem>>, vector<1x15x256xbf16>
    %76 = vector.shape_cast %75 : vector<1x15x256xbf16> to vector<15x256xbf16>
    %77 = vector.shape_cast %74 : vector<15x256xbf16> to vector<1x15x256xbf16>
    tpu.vector_store %arg8[%c0_77, %c0_78, %c0_79], %77 {strides = array<i32>} : memref<1x15x256xbf16, #tpu.memory_space<vmem>>, vector<1x15x256xbf16>,
    return
  }
  func.func @transform_0(%arg0: i32) -> (i32, i32, i32) {
    %c0_i32 = arith.constant 0 : i32
    %c0_i32_0 = arith.constant 0 : i32
    %c0_i32_1 = arith.constant 0 : i32
    return %arg0, %c0_i32, %c0_i32_0 : i32, i32, i32
  }
  func.func @transform_1(%arg0: i32) -> (i32, i32, i32) {
    %c0_i32 = arith.constant 0 : i32
    %c0_i32_0 = arith.constant 0 : i32
    %c0_i32_1 = arith.constant 0 : i32
    return %arg0, %c0_i32, %c0_i32_0 : i32, i32, i32
  }
  func.func @transform_2(%arg0: i32) -> (i32, i32, i32) {
    %c0_i32 = arith.constant 0 : i32
    %c0_i32_0 = arith.constant 0 : i32
    %c0_i32_1 = arith.constant 0 : i32
    %c0_i32_2 = arith.constant 0 : i32
    return %c0_i32, %c0_i32_0, %c0_i32_1 : i32, i32, i32
  }
  func.func @transform_3(%arg0: i32) -> (i32, i32, i32) {
    %c0_i32 = arith.constant 0 : i32
    %c0_i32_0 = arith.constant 0 : i32
    %c0_i32_1 = arith.constant 0 : i32
    %c0_i32_2 = arith.constant 0 : i32
    return %c0_i32, %c0_i32_0, %c0_i32_1 : i32, i32, i32
  }
  func.func @transform_4(%arg0: i32) -> (i32, i32) {
    %c0_i32 = arith.constant 0 : i32
    %c0_i32_0 = arith.constant 0 : i32
    %c0_i32_1 = arith.constant 0 : i32
    return %c0_i32, %c0_i32_0 : i32, i32
  }
  func.func @transform_5(%arg0: i32) -> (i32, i32, i32) {
    %c0_i32 = arith.constant 0 : i32
    %c0_i32_0 = arith.constant 0 : i32
    %c0_i32_1 = arith.constant 0 : i32
    %c0_i32_2 = arith.constant 0 : i32
    return %c0_i32, %c0_i32_0, %c0_i32_1 : i32, i32, i32
  }
  func.func @transform_6(%arg0: i32) -> (i32, i32) {
    %c0_i32 = arith.constant 0 : i32
    %c0_i32_0 = arith.constant 0 : i32
    %c0_i32_1 = arith.constant 0 : i32
    return %c0_i32, %c0_i32_0 : i32, i32
  }
  func.func @transform_7(%arg0: i32) -> (i32, i32, i32) {
    %c0_i32 = arith.constant 0 : i32
    %c0_i32_0 = arith.constant 0 : i32
    %c0_i32_1 = arith.constant 0 : i32
    return %arg0, %c0_i32, %c0_i32_0 : i32, i32, i32
  }
}

</mosaic_0001>

<llo_original>
// kernel: ricbe_decoder_forward.2
$region0: #{ricbe_decoder_forward.2}
  #allocation0 [shape = 'u32[]', space=smem, size = 0x4, offset = 0x4, fixed_abs, tag = 'smem constant byte address 0x4 - core index']
  #allocation1 [shape = 'u32[72,128]{1,0:T(1,128)}', space=vmem, size = 0x9000, scoped, tag = 'internal scratch']
  #allocation2 [shape = 'bf16[12,128]{1,0:T(8,128)(2,1)}', space=vmem, size = 0x1000, scoped, tag = 'scratch operand']
  #allocation3 [shape = 'bf16[12,128]{1,0:T(8,128)(2,1)}', space=vmem, size = 0x1000, scoped, tag = 'scratch operand']
  #allocation4 [shape = 'bf16[10,128]{1,0:T(8,128)(2,1)}', space=vmem, size = 0x1000, scoped, tag = 'scratch operand']
  %s0 = inlined_call_operand.vmem [shape: bf16[2,8,128], index: 0, kind: input, shape index: {}]
  %s1 = inlined_call_operand.vmem [shape: bf16[2,8,128], index: 1, kind: input, shape index: {}]
  %s2 = inlined_call_operand.hbm [shape: bf16[3,128,256], index: 2, kind: input, shape index: {}]
  %s3 = inlined_call_operand.hbm [shape: bf16[3,128,256], index: 3, kind: input, shape index: {}]
  %s4 = inlined_call_operand.vmem [shape: f32[1,256], index: 4, kind: input, shape index: {}]
  %s5 = inlined_call_operand.hbm [shape: bf16[3,128,256], index: 5, kind: input, shape index: {}]
  %s6 = inlined_call_operand.vmem [shape: f32[1,256], index: 6, kind: input, shape index: {}]
  %s7 = inlined_call_operand.vmem [shape: bf16[2,8,256], index: 7, kind: output, shape index: {}]
  %s8 = sld [smem:[#allocation0]]
  $region73: #{ricbe_decoder_forward.2} parent=0
    _
  %s10 = ssub.s32 1, %s8
  %s11 = scalar_select 0, %s10, %s8
  $region1: #{ricbe_decoder_forward.2} parent=0
    #allocation5 [shape = 'u8[196608]{0}', space=vmem, size = 0x30000, scoped, tag = 'input window, operand 2, single buffered']
    #allocation6 [shape = 's32[2]{0}', space=sflag, size = 0x8, scoped, tag = 'scoped memory for ricbe_decoder_forward.2']
    #allocation7 [shape = 'u8[196608]{0}', space=vmem, size = 0x30000, scoped, tag = 'input window, operand 3, single buffered']
    #allocation8 [shape = 's32[1]{0}', space=sflag, size = 0x4, scoped, tag = 'scoped memory for ricbe_decoder_forward.2']
    #allocation9 [shape = 'u8[196608]{0}', space=vmem, size = 0x30000, scoped, tag = 'input window, operand 5, single buffered']
    %12 = vsyncpa [#allocation6], 0
    %13 = vsyncpa [#allocation8], 0
    loop: start=0, step=1, limit=4
    $region2: #{ricbe_decoder_forward.2} parent=1 // loop_pre_header
      _
    $region3: #{ricbe_decoder_forward.2} parent=1 // loop_header
      %s15 = sphi 0, %s19
      %p16 = scmp.ge.s32.totalorder %s15, 4
      %s25 = sphi 0, %s27
      %s28 = sphi 0, %s25
      %s29 = sphi 0, %s28
      %s45 = sphi 0, %s29
      %s51 = sphi 0, %s53
      %s54 = sphi 0, %s51
      %s55 = sphi 0, %s54
      %s71 = sphi 0, %s55
      %s75 = sphi 0, %s75
      %s77 = sphi 0, %s75
      %s78 = sphi 0, %s77
      %s92 = sphi 0, %s78
      %s96 = sphi 0, %s96
      %s98 = sphi 0, %s96
      %s99 = sphi 0, %s98
      %s113 = sphi 0, %s99
      %s117 = sphi 0, %s117
      %s119 = sphi 0, %s117
      %s120 = sphi 0, %s119
      %s134 = sphi 0, %s120
      %s138 = sphi 0, %s138
      %s140 = sphi 0, %s138
      %s141 = sphi 0, %s140
      %s155 = sphi 0, %s141
      %s159 = sphi 0, %s159
      %s161 = sphi 0, %s159
      %s162 = sphi 0, %s161
      %s176 = sphi 0, %s162
      %s182 = sphi 0, %s184
      %s185 = sphi 0, %s182
      %s186 = sphi 0, %s185
      %s202 = sphi 0, %s186
    $region4: #{ricbe_decoder_forward.2} parent=1 // loop_header_branch
      %18 = sbr.rel (%p16) target = $region8
    $region5: #{ricbe_decoder_forward.2} parent=1 // loop_body
      %s20 = ssub.s32 %s15, 1
      %s21 = ssub.s32 %s15, 2
      %s22 = sadd.s32 %s15, 1
      %s23 = ssub.s32 %s15, %s22
      %p24 = scmp.eq.s32.totalorder %s23, 0
      %s26 = sadd.s32 %s25, 1
      %s27 = scalar_select %p24, %s25, %s26
      %p30 = pneg %p24
      %p31 = scmp.eq.s32.totalorder %s15, 1
      %p32 = por %p30, %p31
      %p33 = scmp.ne.s32.totalorder %s25, %s28
      %p34 = scmp.eq.s32.totalorder %s15, 0
      %p35 = por %p33, %p34
      %p36 = scmp.ne.s32.totalorder %s25, %s28
      %p37 = scmp.eq.s32.totalorder %s20, 1
      %p38 = por %p36, %p37
      %p39 = scmp.ne.s32.totalorder %s28, %s29
      %p40 = scmp.eq.s32.totalorder %s20, 0
      %p41 = por %p39, %p40
      %p42 = scmp.ne.s32.totalorder %s28, %s29
      %p43 = scmp.eq.s32.totalorder %s21, 1
      %p44 = por %p42, %p43
      %p46 = scmp.ne.s32.totalorder %s29, %s45
      %p47 = scmp.eq.s32.totalorder %s21, 0
      %p48 = por %p46, %p47
      %s49 = ssub.s32 %s15, %s22
      %p50 = scmp.eq.s32.totalorder %s49, 0
      %s52 = sadd.s32 %s51, 1
      %s53 = scalar_select %p50, %s51, %s52
      %p56 = pneg %p50
      %p57 = scmp.eq.s32.totalorder %s15, 1
      %p58 = por %p56, %p57
      %p59 = scmp.ne.s32.totalorder %s51, %s54
      %p60 = scmp.eq.s32.totalorder %s15, 0
      %p61 = por %p59, %p60
      %p62 = scmp.ne.s32.totalorder %s51, %s54
      %p63 = scmp.eq.s32.totalorder %s20, 1
      %p64 = por %p62, %p63
      %p65 = scmp.ne.s32.totalorder %s54, %s55
      %p66 = scmp.eq.s32.totalorder %s20, 0
      %p67 = por %p65, %p66
      %p68 = scmp.ne.s32.totalorder %s54, %s55
      %p69 = scmp.eq.s32.totalorder %s21, 1
      %p70 = por %p68, %p69
      %p72 = scmp.ne.s32.totalorder %s55, %s71
      %p73 = scmp.eq.s32.totalorder %s21, 0
      %p74 = por %p72, %p73
      %s76 = sadd.s32 %s75, 1
      %p79 = scmp.eq.s32.totalorder %s15, 1
      %p80 = scmp.ne.s32.totalorder %s75, %s77
      %p81 = scmp.eq.s32.totalorder %s15, 0
      %p82 = por %p80, %p81
      %p83 = scmp.ne.s32.totalorder %s75, %s77
      %p84 = scmp.eq.s32.totalorder %s20, 1
      %p85 = por %p83, %p84
      %p86 = scmp.ne.s32.totalorder %s77, %s78
      %p87 = scmp.eq.s32.totalorder %s20, 0
      %p88 = por %p86, %p87
      %p89 = scmp.ne.s32.totalorder %s77, %s78
      %p90 = scmp.eq.s32.totalorder %s21, 1
      %p91 = por %p89, %p90
      %p93 = scmp.ne.s32.totalorder %s78, %s92
      %p94 = scmp.eq.s32.totalorder %s21, 0
      %p95 = por %p93, %p94
      %s97 = sadd.s32 %s96, 1
      %p100 = scmp.eq.s32.totalorder %s15, 1
      %p101 = scmp.ne.s32.totalorder %s96, %s98
      %p102 = scmp.eq.s32.totalorder %s15, 0
      %p103 = por %p101, %p102
      %p104 = scmp.ne.s32.totalorder %s96, %s98
      %p105 = scmp.eq.s32.totalorder %s20, 1
      %p106 = por %p104, %p105
      %p107 = scmp.ne.s32.totalorder %s98, %s99
      %p108 = scmp.eq.s32.totalorder %s20, 0
      %p109 = por %p107, %p108
      %p110 = scmp.ne.s32.totalorder %s98, %s99
      %p111 = scmp.eq.s32.totalorder %s21, 1
      %p112 = por %p110, %p111
      %p114 = scmp.ne.s32.totalorder %s99, %s113
      %p115 = scmp.eq.s32.totalorder %s21, 0
      %p116 = por %p114, %p115
      %s118 = sadd.s32 %s117, 1
      %p121 = scmp.eq.s32.totalorder %s15, 1
      %p122 = scmp.ne.s32.totalorder %s117, %s119
      %p123 = scmp.eq.s32.totalorder %s15, 0
      %p124 = por %p122, %p123
      %p125 = scmp.ne.s32.totalorder %s117, %s119
      %p126 = scmp.eq.s32.totalorder %s20, 1
      %p127 = por %p125, %p126
      %p128 = scmp.ne.s32.totalorder %s119, %s120
      %p129 = scmp.eq.s32.totalorder %s20, 0
      %p130 = por %p128, %p129
      %p131 = scmp.ne.s32.totalorder %s119, %s120
      %p132 = scmp.eq.s32.totalorder %s21, 1
      %p133 = por %p131, %p132
      %p135 = scmp.ne.s32.totalorder %s120, %s134
      %p136 = scmp.eq.s32.totalorder %s21, 0
      %p137 = por %p135, %p136
      %s139 = sadd.s32 %s138, 1
      %p142 = scmp.eq.s32.totalorder %s15, 1
      %p143 = scmp.ne.s32.totalorder %s138, %s140
      %p144 = scmp.eq.s32.totalorder %s15, 0
      %p145 = por %p143, %p144
      %p146 = scmp.ne.s32.totalorder %s138, %s140
      %p147 = scmp.eq.s32.totalorder %s20, 1
      %p148 = por %p146, %p147
      %p149 = scmp.ne.s32.totalorder %s140, %s141
      %p150 = scmp.eq.s32.totalorder %s20, 0
      %p151 = por %p149, %p150
      %p152 = scmp.ne.s32.totalorder %s140, %s141
      %p153 = scmp.eq.s32.totalorder %s21, 1
      %p154 = por %p152, %p153
      %p156 = scmp.ne.s32.totalorder %s141, %s155
      %p157 = scmp.eq.s32.totalorder %s21, 0
      %p158 = por %p156, %p157
      %s160 = sadd.s32 %s159, 1
      %p163 = scmp.eq.s32.totalorder %s15, 1
      %p164 = scmp.ne.s32.totalorder %s159, %s161
      %p165 = scmp.eq.s32.totalorder %s15, 0
      %p166 = por %p164, %p165
      %p167 = scmp.ne.s32.totalorder %s159, %s161
      %p168 = scmp.eq.s32.totalorder %s20, 1
      %p169 = por %p167, %p168
      %p170 = scmp.ne.s32.totalorder %s161, %s162
      %p171 = scmp.eq.s32.totalorder %s20, 0
      %p172 = por %p170, %p171
      %p173 = scmp.ne.s32.totalorder %s161, %s162
      %p174 = scmp.eq.s32.totalorder %s21, 1
      %p175 = por %p173, %p174
      %p177 = scmp.ne.s32.totalorder %s162, %s176
      %p178 = scmp.eq.s32.totalorder %s21, 0
      %p179 = por %p177, %p178
      %s180 = ssub.s32 %s15, %s22
      %p181 = scmp.eq.s32.totalorder %s180, 0
      %s183 = sadd.s32 %s182, 1
      %s184 = scalar_select %p181, %s182, %s183
      %p187 = pneg %p181
      %p188 = scmp.eq.s32.totalorder %s15, 1
      %p189 = por %p187, %p188
      %p190 = scmp.ne.s32.totalorder %s182, %s185
      %p191 = scmp.eq.s32.totalorder %s15, 0
      %p192 = por %p190, %p191
      %p193 = scmp.ne.s32.totalorder %s182, %s185
      %p194 = scmp.eq.s32.totalorder %s20, 1
      %p195 = por %p193, %p194
      %p196 = scmp.ne.s32.totalorder %s185, %s186
      %p197 = scmp.eq.s32.totalorder %s20, 0
      %p198 = por %p196, %p197
      %p199 = scmp.ne.s32.totalorder %s185, %s186
      %p200 = scmp.eq.s32.totalorder %s21, 1
      %p201 = por %p199, %p200
      %p203 = scmp.ne.s32.totalorder %s186, %s202
      %p204 = scmp.eq.s32.totalorder %s21, 0
      %p205 = por %p203, %p204
      %p206 = scmp.le.s32.totalorder 1, %s15
      %p207 = scmp.lt.s32.totalorder %s15, 3
      %p208 = pnand %p206, %p207
      %p209 = pneg %p208
      // Predicated region
      $region9: #{ricbe_decoder_forward.2} parent=5 // pred_check
        _
      $region10: #{ricbe_decoder_forward.2} parent=5 // pred_check_branch
        %211 = sbr.rel (%p208) target = $region12
      $region11: #{ricbe_decoder_forward.2} parent=5 // pred_region
        %s212 = ssub.s32 %s15, 1
        // Predicated region
        $region13: #{ricbe_decoder_forward.2} parent=11 // pred_check
          %p213 = pneg %p88
        $region14: #{ricbe_decoder_forward.2} parent=11 // pred_check_branch
          %215 = sbr.rel (%p213) target = $region16
        $region15: #{ricbe_decoder_forward.2} parent=11 // pred_region
          %217 = vsyncadd [#allocation6], 0
          %s218 = sshll.u32 %s2, 4
          %s219 = int_to_ptr.hbm [resolvable:$true] %s218
          %s220 = sshll.u32 [#allocation5], 4
          %s221 = int_to_ptr.vmem [resolvable:$true] %s220
          %226 = dma.hbm_to_vmem [thread:$0]  %s219, 6144, %s221, [#allocation6], 128, 128, 8
        $region16: #{ricbe_decoder_forward.2} parent=11 // pred_fallthru
          _
        // Predicated region
        $region17: #{ricbe_decoder_forward.2} parent=11 // pred_check
          %p227 = pneg %p109
        $region18: #{ricbe_decoder_forward.2} parent=11 // pred_check_branch
          %229 = sbr.rel (%p227) target = $region20
        $region19: #{ricbe_decoder_forward.2} parent=11 // pred_region
          %231 = vsyncadd [#allocation8], 0
          %s232 = sshll.u32 %s3, 4
          %s233 = int_to_ptr.hbm [resolvable:$true] %s232
          %s234 = sshll.u32 [#allocation7], 4
          %s235 = int_to_ptr.vmem [resolvable:$true] %s234
          %240 = dma.hbm_to_vmem [thread:$0]  %s233, 6144, %s235, [#allocation8], 128, 128, 8
        $region20: #{ricbe_decoder_forward.2} parent=11 // pred_fallthru
          _
        // Predicated region
        $region21: #{ricbe_decoder_forward.2} parent=11 // pred_check
          %p241 = pneg %p130
        $region22: #{ricbe_decoder_forward.2} parent=11 // pred_check_branch
          %243 = sbr.rel (%p241) target = $region24
        $region23: #{ricbe_decoder_forward.2} parent=11 // pred_region
          _
        $region24: #{ricbe_decoder_forward.2} parent=11 // pred_fallthru
          _
        // Predicated region
        $region25: #{ricbe_decoder_forward.2} parent=11 // pred_check
          %p244 = pneg %p151
        $region26: #{ricbe_decoder_forward.2} parent=11 // pred_check_branch
          %246 = sbr.rel (%p244) target = $region28
        $region27: #{ricbe_decoder_forward.2} parent=11 // pred_region
          %248 = vsyncadd [#allocation8], 0
          %s249 = sshll.u32 %s5, 4
          %s250 = int_to_ptr.hbm [resolvable:$true] %s249
          %s251 = sshll.u32 [#allocation9], 4
          %s252 = int_to_ptr.vmem [resolvable:$true] %s251
          %257 = dma.hbm_to_vmem [thread:$0]  %s250, 6144, %s252, [#allocation8], 128, 128, 8
        $region28: #{ricbe_decoder_forward.2} parent=11 // pred_fallthru
          _
        // Predicated region
        $region29: #{ricbe_decoder_forward.2} parent=11 // pred_check
          %p258 = pneg %p172
        $region30: #{ricbe_decoder_forward.2} parent=11 // pred_check_branch
          %260 = sbr.rel (%p258) target = $region32
        $region31: #{ricbe_decoder_forward.2} parent=11 // pred_region
          _
        $region32: #{ricbe_decoder_forward.2} parent=11 // pred_fallthru
          _
      $region12: #{ricbe_decoder_forward.2} parent=5 // pred_fallthru
        _
      %p261 = scmp.lt.s32.totalorder %s15, 2
      // Predicated region
      $region33: #{ricbe_decoder_forward.2} parent=5 // pred_check
        %p262 = pneg %p261
      $region34: #{ricbe_decoder_forward.2} parent=5 // pred_check_branch
        %264 = sbr.rel (%p262) target = $region36
      $region35: #{ricbe_decoder_forward.2} parent=5 // pred_region
        // Predicated region
        $region37: #{ricbe_decoder_forward.2} parent=35 // pred_check
          %p265 = pneg %p35
        $region38: #{ricbe_decoder_forward.2} parent=35 // pred_check_branch
          %267 = sbr.rel (%p265) target = $region40
        $region39: #{ricbe_decoder_forward.2} parent=35 // pred_region
          %p268 = scmp.lt.s32.totalorder %s15, 1
          %s269 = scalar_select %p268, %s15, 1
          %s270 = smul.addr %s269, 4
          %s271 = scalar_lea.vmem %s0, %s270
        $region40: #{ricbe_decoder_forward.2} parent=35 // pred_fallthru
          _
        // Predicated region
        $region41: #{ricbe_decoder_forward.2} parent=35 // pred_check
          %p272 = pneg %p61
        $region42: #{ricbe_decoder_forward.2} parent=35 // pred_check_branch
          %274 = sbr.rel (%p272) target = $region44
        $region43: #{ricbe_decoder_forward.2} parent=35 // pred_region
          %p275 = scmp.lt.s32.totalorder %s15, 1
          %s276 = scalar_select %p275, %s15, 1
          %s277 = smul.addr %s276, 4
          %s278 = scalar_lea.vmem %s1, %s277
        $region44: #{ricbe_decoder_forward.2} parent=35 // pred_fallthru
          _
      $region36: #{ricbe_decoder_forward.2} parent=5 // pred_fallthru
        _
      %p279 = scmp.le.s32.totalorder 1, %s15
      %p280 = scmp.lt.s32.totalorder %s15, 3
      %p281 = pnand %p279, %p280
      %p282 = pneg %p281
      // Predicated region
      $region45: #{ricbe_decoder_forward.2} parent=5 // pred_check
        _
      $region46: #{ricbe_decoder_forward.2} parent=5 // pred_check_branch
        %284 = sbr.rel (%p281) target = $region48
      $region47: #{ricbe_decoder_forward.2} parent=5 // pred_region
        %s285 = ssub.s32 %s15, 1
        // Predicated region
        $region49: #{ricbe_decoder_forward.2} parent=47 // pred_check
          %p286 = pneg %p88
        $region50: #{ricbe_decoder_forward.2} parent=47 // pred_check_branch
          %288 = sbr.rel (%p286) target = $region52
        $region51: #{ricbe_decoder_forward.2} parent=47 // pred_region
          %290 = dma.done [#allocation6], 6144
        $region52: #{ricbe_decoder_forward.2} parent=47 // pred_fallthru
          _
        // Predicated region
        $region53: #{ricbe_decoder_forward.2} parent=47 // pred_check
          %p291 = pneg %p109
        $region54: #{ricbe_decoder_forward.2} parent=47 // pred_check_branch
          %293 = sbr.rel (%p291) target = $region56
        $region55: #{ricbe_decoder_forward.2} parent=47 // pred_region
          %295 = dma.done [#allocation8], 6144
        $region56: #{ricbe_decoder_forward.2} parent=47 // pred_fallthru
          _
        // Predicated region
        $region57: #{ricbe_decoder_forward.2} parent=47 // pred_check
          %p296 = pneg %p151
        $region58: #{ricbe_decoder_forward.2} parent=47 // pred_check_branch
          %298 = sbr.rel (%p296) target = $region60
        $region59: #{ricbe_decoder_forward.2} parent=47 // pred_region
          %300 = dma.done [#allocation8], 6144
        $region60: #{ricbe_decoder_forward.2} parent=47 // pred_fallthru
          _
        %p301 = scmp.lt.s32.totalorder %s20, 1
        %s302 = scalar_select %p301, %s20, 1
        %s303 = smul.addr %s302, 4
        %s304 = scalar_lea.vmem %s0, %s303
        %p305 = pneg %p41
        %p306 = pneg %p38
        %p307 = scmp.lt.s32.totalorder %s20, 1
        %s308 = scalar_select %p307, %s20, 1
        %s309 = smul.addr %s308, 4
        %s310 = scalar_lea.vmem %s1, %s309
        %p311 = pneg %p67
        %p312 = pneg %p64
        %p313 = pneg %p88
        %p314 = pneg %p85
        %p315 = pneg %p109
        %p316 = pneg %p106
        %p317 = pneg %p130
        %p318 = pneg %p127
        %p319 = pneg %p151
        %p320 = pneg %p148
        %p321 = pneg %p172
        %p322 = pneg %p169
        %p323 = pneg %p198
        %p324 = pneg %p195
        %p325 = scmp.lt.s32.totalorder %s20, 1
        %s326 = scalar_select %p325, %s20, 1
        %s327 = smul.addr %s326, 2
        %s328 = smul.addr %s327, 4
        %s329 = scalar_lea.vmem %s7, %s328
        %p330 = scmp.lt.s32.totalorder %s20, 1
        %s331 = scalar_select %p330, %s20, 1
        %s332 = smul.addr %s331, 4
        %s333 = scalar_lea.vmem %s0, %s332
        %p334 = scmp.lt.s32.totalorder %s20, 1
        %s335 = scalar_select %p334, %s20, 1
        %s336 = smul.addr %s335, 4
        %s337 = scalar_lea.vmem %s1, %s336
        %p338 = scmp.lt.s32.totalorder %s20, 1
        %s339 = scalar_select %p338, %s20, 1
        %s340 = smul.addr %s339, 2
        %s341 = smul.addr %s340, 4
        %s342 = scalar_lea.vmem %s7, %s341
        %344 = vst [vmem:[#allocation2] sm:$0xf] 0
        %345 = vst [vmem:[#allocation2 + $0x4] sm:$0x3] 0
        %346 = vst [vmem:[#allocation3] sm:$0xf] 0
        %347 = vst [vmem:[#allocation3 + $0x4] sm:$0x3] 0
        %v348 = vld [vmem:[%s333] sm:$0xf]
        %v350 = vrot.slane %v348, 7
        %v351 = vrot.slane %v350, 4
        %354 = vst [vmem:[#allocation2] sm:$0xe] %v350
        %355 = vst [vmem:[#allocation2 + $0x4] sm:$0x1] %v351
        %v356 = vld [vmem:[%s337] sm:$0xf]
        %v358 = vrot.slane %v356, 7
        %v359 = vrot.slane %v358, 4
        %362 = vst [vmem:[#allocation3] sm:$0xe] %v358
        %363 = vst [vmem:[#allocation3 + $0x4] sm:$0x1] %v359
        %v364 = vld [vmem:[#allocation2] sm:$0xf]
        %v365 = vld [vmem:[#allocation5] sm:$0xff]
        %v366 = vld [vmem:[#allocation5 + $0x8] sm:$0xff]
        %v367 = vld [vmem:[#allocation5 + $0x10] sm:$0xff]
        %v368 = vld [vmem:[#allocation5 + $0x18] sm:$0xff]
        %v369 = vld [vmem:[#allocation5 + $0x20] sm:$0xff]
        %v370 = vld [vmem:[#allocation5 + $0x28] sm:$0xff]
        %v371 = vld [vmem:[#allocation5 + $0x30] sm:$0xff]
        %v372 = vld [vmem:[#allocation5 + $0x38] sm:$0xff]
        %v373 = vld [vmem:[#allocation5 + $0x40] sm:$0xff]
        %v374 = vld [vmem:[#allocation5 + $0x48] sm:$0xff]
        %v375 = vld [vmem:[#allocation5 + $0x50] sm:$0xff]
        %v376 = vld [vmem:[#allocation5 + $0x58] sm:$0xff]
        %v377 = vld [vmem:[#allocation5 + $0x60] sm:$0xff]
        %v378 = vld [vmem:[#allocation5 + $0x68] sm:$0xff]
        %v379 = vld [vmem:[#allocation5 + $0x70] sm:$0xff]
        %v380 = vld [vmem:[#allocation5 + $0x78] sm:$0xff]
        %v381 = vld [vmem:[#allocation3] sm:$0xf]
        %v382 = vld [vmem:[#allocation7] sm:$0xff]
        %v383 = vld [vmem:[#allocation7 + $0x8] sm:$0xff]
        %v384 = vld [vmem:[#allocation7 + $0x10] sm:$0xff]
        %v385 = vld [vmem:[#allocation7 + $0x18] sm:$0xff]
        %v386 = vld [vmem:[#allocation7 + $0x20] sm:$0xff]
        %v387 = vld [vmem:[#allocation7 + $0x28] sm:$0xff]
        %v388 = vld [vmem:[#allocation7 + $0x30] sm:$0xff]
        %v389 = vld [vmem:[#allocation7 + $0x38] sm:$0xff]
        %v390 = vld [vmem:[#allocation7 + $0x40] sm:$0xff]
        %v391 = vld [vmem:[#allocation7 + $0x48] sm:$0xff]
        %v392 = vld [vmem:[#allocation7 + $0x50] sm:$0xff]
        %v393 = vld [vmem:[#allocation7 + $0x58] sm:$0xff]
        %v394 = vld [vmem:[#allocation7 + $0x60] sm:$0xff]
        %v395 = vld [vmem:[#allocation7 + $0x68] sm:$0xff]
        %v396 = vld [vmem:[#allocation7 + $0x70] sm:$0xff]
        %v397 = vld [vmem:[#allocation7 + $0x78] sm:$0xff]
        %v414 = vunpack.c.l.b16 %v382
        %v415 = vunpack.c.h.b16 %v382
        %v416 = vunpack.c.l.b16 %v383
        %v417 = vunpack.c.h.b16 %v383
        %v418 = vunpack.c.l.b16 %v384
        %v419 = vunpack.c.h.b16 %v384
        %v420 = vunpack.c.l.b16 %v385
        %v421 = vunpack.c.h.b16 %v385
        %v422 = vunpack.c.l.b16 %v386
        %v423 = vunpack.c.h.b16 %v386
        %v424 = vunpack.c.l.b16 %v387
        %v425 = vunpack.c.h.b16 %v387
        %v426 = vunpack.c.l.b16 %v388
        %v427 = vunpack.c.h.b16 %v388
        %v428 = vunpack.c.l.b16 %v389
        %v429 = vunpack.c.h.b16 %v389
        %v430 = vunpack.c.l.b16 %v390
        %v431 = vunpack.c.h.b16 %v390
        %v432 = vunpack.c.l.b16 %v391
        %v433 = vunpack.c.h.b16 %v391
        %v434 = vunpack.c.l.b16 %v392
        %v435 = vunpack.c.h.b16 %v392
        %v436 = vunpack.c.l.b16 %v393
        %v437 = vunpack.c.h.b16 %v393
        %v438 = vunpack.c.l.b16 %v394
        %v439 = vunpack.c.h.b16 %v394
        %v440 = vunpack.c.l.b16 %v395
        %v441 = vunpack.c.h.b16 %v395
        %v442 = vunpack.c.l.b16 %v396
        %v443 = vunpack.c.h.b16 %v396
        %v444 = vunpack.c.l.b16 %v397
        %v445 = vunpack.c.h.b16 %v397
        %v446 = vpack.c.b16 %v416, %v414
        %v447 = vpack.c.b16 %v417, %v415
        %v448 = vpack.c.b16 %v420, %v418
        %v449 = vpack.c.b16 %v421, %v419
        %v450 = vpack.c.b16 %v424, %v422
        %v451 = vpack.c.b16 %v425, %v423
        %v452 = vpack.c.b16 %v428, %v426
        %v453 = vpack.c.b16 %v429, %v427
        %v454 = vpack.c.b16 %v432, %v430
        %v455 = vpack.c.b16 %v433, %v431
        %v456 = vpack.c.b16 %v436, %v434
        %v457 = vpack.c.b16 %v437, %v435
        %v458 = vpack.c.b16 %v440, %v438
        %v459 = vpack.c.b16 %v441, %v439
        %v460 = vpack.c.b16 %v444, %v442
        %v461 = vpack.c.b16 %v445, %v443
        %478 = vmatpush.bf16.msra.mxu0 %v460
        %479 = vmatpush.bf16.msra.mxu0 %v458
        %480 = vmatpush.bf16.msra.mxu0 %v456
        %481 = vmatpush.bf16.msra.mxu0 %v454
        %482 = vmatpush.bf16.msra.mxu0 %v452
        %483 = vmatpush.bf16.msra.mxu0 %v450
        %484 = vmatpush.bf16.msra.mxu0 %v448
        %485 = vmatpush.bf16.msra.mxu0 %v446
        %486 = vmatmul.bf16.gmra.mxu0 %v381
        %v487 = vpop.f32.mrf.mxu0
        %v488 = vadd.f32 0.0, %v487
        %v489 = vpop.f32.mrf.mxu0
        %490 = vdwg.mxu0
        %491 = vmatpush.bf16.msra.mxu0 %v461
        %492 = vmatpush.bf16.msra.mxu0 %v459
        %493 = vmatpush.bf16.msra.mxu0 %v457
        %494 = vmatpush.bf16.msra.mxu0 %v455
        %495 = vmatpush.bf16.msra.mxu0 %v453
        %496 = vmatpush.bf16.msra.mxu0 %v451
        %497 = vmatpush.bf16.msra.mxu0 %v449
        %498 = vmatpush.bf16.msra.mxu0 %v447
        %499 = vmatmul.bf16.gmra.mxu0 %v381
        %v500 = vpop.f32.mrf.mxu0
        %v501 = vadd.f32 0.0, %v500
        %v502 = vpop.f32.mrf.mxu0
        %503 = vdwg.mxu0
        %v520 = vunpack.c.l.b16 %v365
        %v521 = vunpack.c.h.b16 %v365
        %v522 = vunpack.c.l.b16 %v366
        %v523 = vunpack.c.h.b16 %v366
        %v524 = vunpack.c.l.b16 %v367
        %v525 = vunpack.c.h.b16 %v367
        %v526 = vunpack.c.l.b16 %v368
        %v527 = vunpack.c.h.b16 %v368
        %v528 = vunpack.c.l.b16 %v369
        %v529 = vunpack.c.h.b16 %v369
        %v530 = vunpack.c.l.b16 %v370
        %v531 = vunpack.c.h.b16 %v370
        %v532 = vunpack.c.l.b16 %v371
        %v533 = vunpack.c.h.b16 %v371
        %v534 = vunpack.c.l.b16 %v372
        %v535 = vunpack.c.h.b16 %v372
        %v536 = vunpack.c.l.b16 %v373
        %v537 = vunpack.c.h.b16 %v373
        %v538 = vunpack.c.l.b16 %v374
        %v539 = vunpack.c.h.b16 %v374
        %v540 = vunpack.c.l.b16 %v375
        %v541 = vunpack.c.h.b16 %v375
        %v542 = vunpack.c.l.b16 %v376
        %v543 = vunpack.c.h.b16 %v376
        %v544 = vunpack.c.l.b16 %v377
        %v545 = vunpack.c.h.b16 %v377
        %v546 = vunpack.c.l.b16 %v378
        %v547 = vunpack.c.h.b16 %v378
        %v548 = vunpack.c.l.b16 %v379
        %v549 = vunpack.c.h.b16 %v379
        %v550 = vunpack.c.l.b16 %v380
        %v551 = vunpack.c.h.b16 %v380
        %v552 = vpack.c.b16 %v522, %v520
        %v553 = vpack.c.b16 %v523, %v521
        %v554 = vpack.c.b16 %v526, %v524
        %v555 = vpack.c.b16 %v527, %v525
        %v556 = vpack.c.b16 %v530, %v528
        %v557 = vpack.c.b16 %v531, %v529
        %v558 = vpack.c.b16 %v534, %v532
        %v559 = vpack.c.b16 %v535, %v533
        %v560 = vpack.c.b16 %v538, %v536
        %v561 = vpack.c.b16 %v539, %v537
        %v562 = vpack.c.b16 %v542, %v540
        %v563 = vpack.c.b16 %v543, %v541
        %v564 = vpack.c.b16 %v546, %v544
        %v565 = vpack.c.b16 %v547, %v545
        %v566 = vpack.c.b16 %v550, %v548
        %v567 = vpack.c.b16 %v551, %v549
        %584 = vmatpush.bf16.msra.mxu0 %v566
        %585 = vmatpush.bf16.msra.mxu0 %v564
        %586 = vmatpush.bf16.msra.mxu0 %v562
        %587 = vmatpush.bf16.msra.mxu0 %v560
        %588 = vmatpush.bf16.msra.mxu0 %v558
        %589 = vmatpush.bf16.msra.mxu0 %v556
        %590 = vmatpush.bf16.msra.mxu0 %v554
        %591 = vmatpush.bf16.msra.mxu0 %v552
        %592 = vmatmul.bf16.gmra.mxu0 %v364
        %v593 = vpop.f32.mrf.mxu0
        %v594 = vadd.f32 %v488, %v593
        %v595 = vpop.f32.mrf.mxu0
        %596 = vdwg.mxu0
        %597 = vmatpush.bf16.msra.mxu0 %v567
        %598 = vmatpush.bf16.msra.mxu0 %v565
        %599 = vmatpush.bf16.msra.mxu0 %v563
        %600 = vmatpush.bf16.msra.mxu0 %v561
        %601 = vmatpush.bf16.msra.mxu0 %v559
        %602 = vmatpush.bf16.msra.mxu0 %v557
        %603 = vmatpush.bf16.msra.mxu0 %v555
        %604 = vmatpush.bf16.msra.mxu0 %v553
        %605 = vmatmul.bf16.gmra.mxu0 %v364
        %v606 = vpop.f32.mrf.mxu0
        %v607 = vadd.f32 %v501, %v606
        %v608 = vpop.f32.mrf.mxu0
        %609 = vdwg.mxu0
        %v610 = vld [vmem:[#allocation2] sm:$0xe]
        %v611 = vld [vmem:[#allocation2 + $0x4] sm:$0x1]
        %s612 = scalar_lea.vmem [#allocation5], 128
        %v613 = vld [vmem:[%s612] sm:$0xff]
        %v614 = vld [vmem:[%s612 + $0x8] sm:$0xff]
        %v615 = vld [vmem:[%s612 + $0x10] sm:$0xff]
        %v616 = vld [vmem:[%s612 + $0x18] sm:$0xff]
        %v617 = vld [vmem:[%s612 + $0x20] sm:$0xff]
        %v618 = vld [vmem:[%s612 + $0x28] sm:$0xff]
        %v619 = vld [vmem:[%s612 + $0x30] sm:$0xff]
        %v620 = vld [vmem:[%s612 + $0x38] sm:$0xff]
        %v621 = vld [vmem:[%s612 + $0x40] sm:$0xff]
        %v622 = vld [vmem:[%s612 + $0x48] sm:$0xff]
        %v623 = vld [vmem:[%s612 + $0x50] sm:$0xff]
        %v624 = vld [vmem:[%s612 + $0x58] sm:$0xff]
        %v625 = vld [vmem:[%s612 + $0x60] sm:$0xff]
        %v626 = vld [vmem:[%s612 + $0x68] sm:$0xff]
        %v627 = vld [vmem:[%s612 + $0x70] sm:$0xff]
        %v628 = vld [vmem:[%s612 + $0x78] sm:$0xff]
        %v631 = vunpack.c.l.b16 %v610
        %v632 = vunpack.c.l.b16 %v611
        %v633 = vpack.c.b16 %v632, %v631
        %v634 = vrot.slane %v633, 1
        %v652 = vunpack.c.l.b16 %v613
        %v653 = vunpack.c.h.b16 %v613
        %v654 = vunpack.c.l.b16 %v614
        %v655 = vunpack.c.h.b16 %v614
        %v656 = vunpack.c.l.b16 %v615
        %v657 = vunpack.c.h.b16 %v615
        %v658 = vunpack.c.l.b16 %v616
        %v659 = vunpack.c.h.b16 %v616
        %v660 = vunpack.c.l.b16 %v617
        %v661 = vunpack.c.h.b16 %v617
        %v662 = vunpack.c.l.b16 %v618
        %v663 = vunpack.c.h.b16 %v618
        %v664 = vunpack.c.l.b16 %v619
        %v665 = vunpack.c.h.b16 %v619
        %v666 = vunpack.c.l.b16 %v620
        %v667 = vunpack.c.h.b16 %v620
        %v668 = vunpack.c.l.b16 %v621
        %v669 = vunpack.c.h.b16 %v621
        %v670 = vunpack.c.l.b16 %v622
        %v671 = vunpack.c.h.b16 %v622
        %v672 = vunpack.c.l.b16 %v623
        %v673 = vunpack.c.h.b16 %v623
        %v674 = vunpack.c.l.b16 %v624
        %v675 = vunpack.c.h.b16 %v624
        %v676 = vunpack.c.l.b16 %v625
        %v677 = vunpack.c.h.b16 %v625
        %v678 = vunpack.c.l.b16 %v626
        %v679 = vunpack.c.h.b16 %v626
        %v680 = vunpack.c.l.b16 %v627
        %v681 = vunpack.c.h.b16 %v627
        %v682 = vunpack.c.l.b16 %v628
        %v683 = vunpack.c.h.b16 %v628
        %v684 = vpack.c.b16 %v654, %v652
        %v685 = vpack.c.b16 %v655, %v653
        %v686 = vpack.c.b16 %v658, %v656
        %v687 = vpack.c.b16 %v659, %v657
        %v688 = vpack.c.b16 %v662, %v660
        %v689 = vpack.c.b16 %v663, %v661
        %v690 = vpack.c.b16 %v666, %v664
        %v691 = vpack.c.b16 %v667, %v665
        %v692 = vpack.c.b16 %v670, %v668
        %v693 = vpack.c.b16 %v671, %v669
        %v694 = vpack.c.b16 %v674, %v672
        %v695 = vpack.c.b16 %v675, %v673
        %v696 = vpack.c.b16 %v678, %v676
        %v697 = vpack.c.b16 %v679, %v677
        %v698 = vpack.c.b16 %v682, %v680
        %v699 = vpack.c.b16 %v683, %v681
        %716 = vmatpush.bf16.msra.mxu0 %v698
        %717 = vmatpush.bf16.msra.mxu0 %v696
        %718 = vmatpush.bf16.msra.mxu0 %v694
        %719 = vmatpush.bf16.msra.mxu0 %v692
        %720 = vmatpush.bf16.msra.mxu0 %v690
        %721 = vmatpush.bf16.msra.mxu0 %v688
        %722 = vmatpush.bf16.msra.mxu0 %v686
        %723 = vmatpush.bf16.msra.mxu0 %v684
        %724 = vmatmul.bf16.gmra.mxu0 %v634
        %v725 = vpop.f32.mrf.mxu0
        %v726 = vadd.f32 0.0, %v725
        %v727 = vpop.f32.mrf.mxu0
        %728 = vdwg.mxu0
        %729 = vmatpush.bf16.msra.mxu0 %v699
        %730 = vmatpush.bf16.msra.mxu0 %v697
        %731 = vmatpush.bf16.msra.mxu0 %v695
        %732 = vmatpush.bf16.msra.mxu0 %v693
        %733 = vmatpush.bf16.msra.mxu0 %v691
        %734 = vmatpush.bf16.msra.mxu0 %v689
        %735 = vmatpush.bf16.msra.mxu0 %v687
        %736 = vmatpush.bf16.msra.mxu0 %v685
        %737 = vmatmul.bf16.gmra.mxu0 %v634
        %v738 = vpop.f32.mrf.mxu0
        %v739 = vadd.f32 0.0, %v738
        %v740 = vpop.f32.mrf.mxu0
        %741 = vdwg.mxu0
        %v742 = vadd.f32 %v594, %v726
        %v743 = vadd.f32 %v607, %v739
        %v744 = vld [vmem:[#allocation3] sm:$0xe]
        %v745 = vld [vmem:[#allocation3 + $0x4] sm:$0x1]
        %s746 = scalar_lea.vmem [#allocation7], 128
        %v747 = vld [vmem:[%s746] sm:$0xff]
        %v748 = vld [vmem:[%s746 + $0x8] sm:$0xff]
        %v749 = vld [vmem:[%s746 + $0x10] sm:$0xff]
        %v750 = vld [vmem:[%s746 + $0x18] sm:$0xff]
        %v751 = vld [vmem:[%s746 + $0x20] sm:$0xff]
        %v752 = vld [vmem:[%s746 + $0x28] sm:$0xff]
        %v753 = vld [vmem:[%s746 + $0x30] sm:$0xff]
        %v754 = vld [vmem:[%s746 + $0x38] sm:$0xff]
        %v755 = vld [vmem:[%s746 + $0x40] sm:$0xff]
        %v756 = vld [vmem:[%s746 + $0x48] sm:$0xff]
        %v757 = vld [vmem:[%s746 + $0x50] sm:$0xff]
        %v758 = vld [vmem:[%s746 + $0x58] sm:$0xff]
        %v759 = vld [vmem:[%s746 + $0x60] sm:$0xff]
        %v760 = vld [vmem:[%s746 + $0x68] sm:$0xff]
        %v761 = vld [vmem:[%s746 + $0x70] sm:$0xff]
        %v762 = vld [vmem:[%s746 + $0x78] sm:$0xff]
        %v765 = vunpack.c.l.b16 %v744
        %v766 = vunpack.c.l.b16 %v745
        %v767 = vpack.c.b16 %v766, %v765
        %v768 = vrot.slane %v767, 1
        %v786 = vunpack.c.l.b16 %v747
        %v787 = vunpack.c.h.b16 %v747
        %v788 = vunpack.c.l.b16 %v748
        %v789 = vunpack.c.h.b16 %v748
        %v790 = vunpack.c.l.b16 %v749
        %v791 = vunpack.c.h.b16 %v749
        %v792 = vunpack.c.l.b16 %v750
        %v793 = vunpack.c.h.b16 %v750
        %v794 = vunpack.c.l.b16 %v751
        %v795 = vunpack.c.h.b16 %v751
        %v796 = vunpack.c.l.b16 %v752
        %v797 = vunpack.c.h.b16 %v752
        %v798 = vunpack.c.l.b16 %v753
        %v799 = vunpack.c.h.b16 %v753
        %v800 = vunpack.c.l.b16 %v754
        %v801 = vunpack.c.h.b16 %v754
        %v802 = vunpack.c.l.b16 %v755
        %v803 = vunpack.c.h.b16 %v755
        %v804 = vunpack.c.l.b16 %v756
        %v805 = vunpack.c.h.b16 %v756
        %v806 = vunpack.c.l.b16 %v757
        %v807 = vunpack.c.h.b16 %v757
        %v808 = vunpack.c.l.b16 %v758
        %v809 = vunpack.c.h.b16 %v758
        %v810 = vunpack.c.l.b16 %v759
        %v811 = vunpack.c.h.b16 %v759
        %v812 = vunpack.c.l.b16 %v760
        %v813 = vunpack.c.h.b16 %v760
        %v814 = vunpack.c.l.b16 %v761
        %v815 = vunpack.c.h.b16 %v761
        %v816 = vunpack.c.l.b16 %v762
        %v817 = vunpack.c.h.b16 %v762
        %v818 = vpack.c.b16 %v788, %v786
        %v819 = vpack.c.b16 %v789, %v787
        %v820 = vpack.c.b16 %v792, %v790
        %v821 = vpack.c.b16 %v793, %v791
        %v822 = vpack.c.b16 %v796, %v794
        %v823 = vpack.c.b16 %v797, %v795
        %v824 = vpack.c.b16 %v800, %v798
        %v825 = vpack.c.b16 %v801, %v799
        %v826 = vpack.c.b16 %v804, %v802
        %v827 = vpack.c.b16 %v805, %v803
        %v828 = vpack.c.b16 %v808, %v806
        %v829 = vpack.c.b16 %v809, %v807
        %v830 = vpack.c.b16 %v812, %v810
        %v831 = vpack.c.b16 %v813, %v811
        %v832 = vpack.c.b16 %v816, %v814
        %v833 = vpack.c.b16 %v817, %v815
        %850 = vmatpush.bf16.msra.mxu0 %v832
        %851 = vmatpush.bf16.msra.mxu0 %v830
        %852 = vmatpush.bf16.msra.mxu0 %v828
        %853 = vmatpush.bf16.msra.mxu0 %v826
        %854 = vmatpush.bf16.msra.mxu0 %v824
        %855 = vmatpush.bf16.msra.mxu0 %v822
        %856 = vmatpush.bf16.msra.mxu0 %v820
        %857 = vmatpush.bf16.msra.mxu0 %v818
        %858 = vmatmul.bf16.gmra.mxu0 %v768
        %v859 = vpop.f32.mrf.mxu0
        %v860 = vadd.f32 0.0, %v859
        %v861 = vpop.f32.mrf.mxu0
        %862 = vdwg.mxu0
        %863 = vmatpush.bf16.msra.mxu0 %v833
        %864 = vmatpush.bf16.msra.mxu0 %v831
        %865 = vmatpush.bf16.msra.mxu0 %v829
        %866 = vmatpush.bf16.msra.mxu0 %v827
        %867 = vmatpush.bf16.msra.mxu0 %v825
        %868 = vmatpush.bf16.msra.mxu0 %v823
        %869 = vmatpush.bf16.msra.mxu0 %v821
        %870 = vmatpush.bf16.msra.mxu0 %v819
        %871 = vmatmul.bf16.gmra.mxu0 %v768
        %v872 = vpop.f32.mrf.mxu0
        %v873 = vadd.f32 0.0, %v872
        %v874 = vpop.f32.mrf.mxu0
        %875 = vdwg.mxu0
        %v876 = vadd.f32 %v742, %v860
        %v877 = vadd.f32 %v743, %v873
        %v878 = vld [vmem:[#allocation2] sm:$0xc]
        %v879 = vld [vmem:[#allocation2 + $0x4] sm:$0x3]
        %s880 = scalar_lea.vmem [#allocation5], 256
        %v881 = vld [vmem:[%s880] sm:$0xff]
        %v882 = vld [vmem:[%s880 + $0x8] sm:$0xff]
        %v883 = vld [vmem:[%s880 + $0x10] sm:$0xff]
        %v884 = vld [vmem:[%s880 + $0x18] sm:$0xff]
        %v885 = vld [vmem:[%s880 + $0x20] sm:$0xff]
        %v886 = vld [vmem:[%s880 + $0x28] sm:$0xff]
        %v887 = vld [vmem:[%s880 + $0x30] sm:$0xff]
        %v888 = vld [vmem:[%s880 + $0x38] sm:$0xff]
        %v889 = vld [vmem:[%s880 + $0x40] sm:$0xff]
        %v890 = vld [vmem:[%s880 + $0x48] sm:$0xff]
        %v891 = vld [vmem:[%s880 + $0x50] sm:$0xff]
        %v892 = vld [vmem:[%s880 + $0x58] sm:$0xff]
        %v893 = vld [vmem:[%s880 + $0x60] sm:$0xff]
        %v894 = vld [vmem:[%s880 + $0x68] sm:$0xff]
        %v895 = vld [vmem:[%s880 + $0x70] sm:$0xff]
        %v896 = vld [vmem:[%s880 + $0x78] sm:$0xff]
        %v899 = vunpack.c.l.b16 %v878
        %v900 = vunpack.c.l.b16 %v879
        %v901 = vpack.c.b16 %v900, %v899
        %v902 = vrot.slane %v901, 2
        %v920 = vunpack.c.l.b16 %v881
        %v921 = vunpack.c.h.b16 %v881
        %v922 = vunpack.c.l.b16 %v882
        %v923 = vunpack.c.h.b16 %v882
        %v924 = vunpack.c.l.b16 %v883
        %v925 = vunpack.c.h.b16 %v883
        %v926 = vunpack.c.l.b16 %v884
        %v927 = vunpack.c.h.b16 %v884
        %v928 = vunpack.c.l.b16 %v885
        %v929 = vunpack.c.h.b16 %v885
        %v930 = vunpack.c.l.b16 %v886
        %v931 = vunpack.c.h.b16 %v886
        %v932 = vunpack.c.l.b16 %v887
        %v933 = vunpack.c.h.b16 %v887
        %v934 = vunpack.c.l.b16 %v888
        %v935 = vunpack.c.h.b16 %v888
        %v936 = vunpack.c.l.b16 %v889
        %v937 = vunpack.c.h.b16 %v889
        %v938 = vunpack.c.l.b16 %v890
        %v939 = vunpack.c.h.b16 %v890
        %v940 = vunpack.c.l.b16 %v891
        %v941 = vunpack.c.h.b16 %v891
        %v942 = vunpack.c.l.b16 %v892
        %v943 = vunpack.c.h.b16 %v892
        %v944 = vunpack.c.l.b16 %v893
        %v945 = vunpack.c.h.b16 %v893
        %v946 = vunpack.c.l.b16 %v894
        %v947 = vunpack.c.h.b16 %v894
        %v948 = vunpack.c.l.b16 %v895
        %v949 = vunpack.c.h.b16 %v895
        %v950 = vunpack.c.l.b16 %v896
        %v951 = vunpack.c.h.b16 %v896
        %v952 = vpack.c.b16 %v922, %v920
        %v953 = vpack.c.b16 %v923, %v921
        %v954 = vpack.c.b16 %v926, %v924
        %v955 = vpack.c.b16 %v927, %v925
        %v956 = vpack.c.b16 %v930, %v928
        %v957 = vpack.c.b16 %v931, %v929
        %v958 = vpack.c.b16 %v934, %v932
        %v959 = vpack.c.b16 %v935, %v933
        %v960 = vpack.c.b16 %v938, %v936
        %v961 = vpack.c.b16 %v939, %v937
        %v962 = vpack.c.b16 %v942, %v940
        %v963 = vpack.c.b16 %v943, %v941
        %v964 = vpack.c.b16 %v946, %v944
        %v965 = vpack.c.b16 %v947, %v945
        %v966 = vpack.c.b16 %v950, %v948
        %v967 = vpack.c.b16 %v951, %v949
        %984 = vmatpush.bf16.msra.mxu0 %v966
        %985 = vmatpush.bf16.msra.mxu0 %v964
        %986 = vmatpush.bf16.msra.mxu0 %v962
        %987 = vmatpush.bf16.msra.mxu0 %v960
        %988 = vmatpush.bf16.msra.mxu0 %v958
        %989 = vmatpush.bf16.msra.mxu0 %v956
        %990 = vmatpush.bf16.msra.mxu0 %v954
        %991 = vmatpush.bf16.msra.mxu0 %v952
        %992 = vmatmul.bf16.gmra.mxu0 %v902
        %v993 = vpop.f32.mrf.mxu0
        %v994 = vadd.f32 0.0, %v993
        %v995 = vpop.f32.mrf.mxu0
        %996 = vdwg.mxu0
        %997 = vmatpush.bf16.msra.mxu0 %v967
        %998 = vmatpush.bf16.msra.mxu0 %v965
        %999 = vmatpush.bf16.msra.mxu0 %v963
        %1000 = vmatpush.bf16.msra.mxu0 %v961
        %1001 = vmatpush.bf16.msra.mxu0 %v959
        %1002 = vmatpush.bf16.msra.mxu0 %v957
        %1003 = vmatpush.bf16.msra.mxu0 %v955
        %1004 = vmatpush.bf16.msra.mxu0 %v953
        %1005 = vmatmul.bf16.gmra.mxu0 %v902
        %v1006 = vpop.f32.mrf.mxu0
        %v1007 = vadd.f32 0.0, %v1006
        %v1008 = vpop.f32.mrf.mxu0
        %1009 = vdwg.mxu0
        %v1010 = vadd.f32 %v876, %v994
        %v1011 = vadd.f32 %v877, %v1007
        %v1012 = vld [vmem:[#allocation3] sm:$0xc]
        %v1013 = vld [vmem:[#allocation3 + $0x4] sm:$0x3]
        %s1014 = scalar_lea.vmem [#allocation7], 256
        %v1015 = vld [vmem:[%s1014] sm:$0xff]
        %v1016 = vld [vmem:[%s1014 + $0x8] sm:$0xff]
        %v1017 = vld [vmem:[%s1014 + $0x10] sm:$0xff]
        %v1018 = vld [vmem:[%s1014 + $0x18] sm:$0xff]
        %v1019 = vld [vmem:[%s1014 + $0x20] sm:$0xff]
        %v1020 = vld [vmem:[%s1014 + $0x28] sm:$0xff]
        %v1021 = vld [vmem:[%s1014 + $0x30] sm:$0xff]
        %v1022 = vld [vmem:[%s1014 + $0x38] sm:$0xff]
        %v1023 = vld [vmem:[%s1014 + $0x40] sm:$0xff]
        %v1024 = vld [vmem:[%s1014 + $0x48] sm:$0xff]
        %v1025 = vld [vmem:[%s1014 + $0x50] sm:$0xff]
        %v1026 = vld [vmem:[%s1014 + $0x58] sm:$0xff]
        %v1027 = vld [vmem:[%s1014 + $0x60] sm:$0xff]
        %v1028 = vld [vmem:[%s1014 + $0x68] sm:$0xff]
        %v1029 = vld [vmem:[%s1014 + $0x70] sm:$0xff]
        %v1030 = vld [vmem:[%s1014 + $0x78] sm:$0xff]
        %v1033 = vunpack.c.l.b16 %v1012
        %v1034 = vunpack.c.l.b16 %v1013
        %v1035 = vpack.c.b16 %v1034, %v1033
        %v1036 = vrot.slane %v1035, 2
        %v1054 = vunpack.c.l.b16 %v1015
        %v1055 = vunpack.c.h.b16 %v1015
        %v1056 = vunpack.c.l.b16 %v1016
        %v1057 = vunpack.c.h.b16 %v1016
        %v1058 = vunpack.c.l.b16 %v1017
        %v1059 = vunpack.c.h.b16 %v1017
        %v1060 = vunpack.c.l.b16 %v1018
        %v1061 = vunpack.c.h.b16 %v1018
        %v1062 = vunpack.c.l.b16 %v1019
        %v1063 = vunpack.c.h.b16 %v1019
        %v1064 = vunpack.c.l.b16 %v1020
        %v1065 = vunpack.c.h.b16 %v1020
        %v1066 = vunpack.c.l.b16 %v1021
        %v1067 = vunpack.c.h.b16 %v1021
        %v1068 = vunpack.c.l.b16 %v1022
        %v1069 = vunpack.c.h.b16 %v1022
        %v1070 = vunpack.c.l.b16 %v1023
        %v1071 = vunpack.c.h.b16 %v1023
        %v1072 = vunpack.c.l.b16 %v1024
        %v1073 = vunpack.c.h.b16 %v1024
        %v1074 = vunpack.c.l.b16 %v1025
        %v1075 = vunpack.c.h.b16 %v1025
        %v1076 = vunpack.c.l.b16 %v1026
        %v1077 = vunpack.c.h.b16 %v1026
        %v1078 = vunpack.c.l.b16 %v1027
        %v1079 = vunpack.c.h.b16 %v1027
        %v1080 = vunpack.c.l.b16 %v1028
        %v1081 = vunpack.c.h.b16 %v1028
        %v1082 = vunpack.c.l.b16 %v1029
        %v1083 = vunpack.c.h.b16 %v1029
        %v1084 = vunpack.c.l.b16 %v1030
        %v1085 = vunpack.c.h.b16 %v1030
        %v1086 = vpack.c.b16 %v1056, %v1054
        %v1087 = vpack.c.b16 %v1057, %v1055
        %v1088 = vpack.c.b16 %v1060, %v1058
        %v1089 = vpack.c.b16 %v1061, %v1059
        %v1090 = vpack.c.b16 %v1064, %v1062
        %v1091 = vpack.c.b16 %v1065, %v1063
        %v1092 = vpack.c.b16 %v1068, %v1066
        %v1093 = vpack.c.b16 %v1069, %v1067
        %v1094 = vpack.c.b16 %v1072, %v1070
        %v1095 = vpack.c.b16 %v1073, %v1071
        %v1096 = vpack.c.b16 %v1076, %v1074
        %v1097 = vpack.c.b16 %v1077, %v1075
        %v1098 = vpack.c.b16 %v1080, %v1078
        %v1099 = vpack.c.b16 %v1081, %v1079
        %v1100 = vpack.c.b16 %v1084, %v1082
        %v1101 = vpack.c.b16 %v1085, %v1083
        %1118 = vmatpush.bf16.msra.mxu0 %v1100
        %1119 = vmatpush.bf16.msra.mxu0 %v1098
        %1120 = vmatpush.bf16.msra.mxu0 %v1096
        %1121 = vmatpush.bf16.msra.mxu0 %v1094
        %1122 = vmatpush.bf16.msra.mxu0 %v1092
        %1123 = vmatpush.bf16.msra.mxu0 %v1090
        %1124 = vmatpush.bf16.msra.mxu0 %v1088
        %1125 = vmatpush.bf16.msra.mxu0 %v1086
        %1126 = vmatmul.bf16.gmra.mxu0 %v1036
        %v1127 = vpop.f32.mrf.mxu0
        %v1128 = vadd.f32 0.0, %v1127
        %v1129 = vpop.f32.mrf.mxu0
        %1130 = vdwg.mxu0
        %1131 = vmatpush.bf16.msra.mxu0 %v1101
        %1132 = vmatpush.bf16.msra.mxu0 %v1099
        %1133 = vmatpush.bf16.msra.mxu0 %v1097
        %1134 = vmatpush.bf16.msra.mxu0 %v1095
        %1135 = vmatpush.bf16.msra.mxu0 %v1093
        %1136 = vmatpush.bf16.msra.mxu0 %v1091
        %1137 = vmatpush.bf16.msra.mxu0 %v1089
        %1138 = vmatpush.bf16.msra.mxu0 %v1087
        %1139 = vmatmul.bf16.gmra.mxu0 %v1036
        %v1140 = vpop.f32.mrf.mxu0
        %v1141 = vadd.f32 0.0, %v1140
        %v1142 = vpop.f32.mrf.mxu0
        %1143 = vdwg.mxu0
        %v1144 = vadd.f32 %v1010, %v1128
        %v1145 = vadd.f32 %v1011, %v1141
        %v1146 = vld [vmem:[%s4] sm:$0x3]
        %v1148 = vperm.slane %v1146, 0
        %v1149 = vperm.slane %v1146, 1
        %v1152 = vadd.f32 %v1144, %v1148
        %v1153 = vadd.f32 %v1145, %v1149
        %v1154 = vsub.f32 0.0, %v1153
        %v1155 = vmul.f32 %v1154, 1.442695
        %v1156 = vpow.pop %v1155
        %v1157 = vadd.f32 %v1156, 1.0
        %v1158 = vrcp.pop %v1157
        %v1159 = vmul.f32 %v1152, %v1158
        %1160 = vst [vmem:[#allocation4] sm:$0xf] 0
        %1161 = vst [vmem:[#allocation4 + $0x4] sm:$0x1] 0
        %v1162 = vpack.c.bf16 %v1159, %v1159
        %v1164 = vshrl.u32 %v1162, 16
        %v1166 = vrot.slane %v1164, 7
        %v1167 = vshll.u32 %v1162, 16
        %v1169 = vor.u32 %v1166, %v1167
        %v1170 = vrot.slane %v1166, 4
        %vm1173 = vcmask 1043456
        %vm1174 = vsmask.f32 7938
        %vm1175 = vmand %vm1173, %vm1174
        %v1176 = vld [vmem:[#allocation4] sm:$0xf]
        %v1177 = vsel %vm1175, %v1169, %v1176
        %1178 = vst [vmem:[#allocation4] sm:$0xf] %v1177
        %vm1179 = vcmask 1040384
        %vm1180 = vsmask.f32 256
        %vm1181 = vmand %vm1179, %vm1180
        %v1182 = vld [vmem:[#allocation4 + $0x4] sm:$0x1]
        %v1183 = vsel %vm1181, %v1170, %v1182
        %1184 = vst [vmem:[#allocation4 + $0x4] sm:$0x1] %v1183
        %v1185 = vld [vmem:[#allocation4] sm:$0xf]
        %v1186 = vld [vmem:[#allocation9] sm:$0xff]
        %v1187 = vld [vmem:[#allocation9 + $0x8] sm:$0xff]
        %v1188 = vld [vmem:[#allocation9 + $0x10] sm:$0xff]
        %v1189 = vld [vmem:[#allocation9 + $0x18] sm:$0xff]
        %v1190 = vld [vmem:[#allocation9 + $0x20] sm:$0xff]
        %v1191 = vld [vmem:[#allocation9 + $0x28] sm:$0xff]
        %v1192 = vld [vmem:[#allocation9 + $0x30] sm:$0xff]
        %v1193 = vld [vmem:[#allocation9 + $0x38] sm:$0xff]
        %v1194 = vld [vmem:[#allocation9 + $0x40] sm:$0xff]
        %v1195 = vld [vmem:[#allocation9 + $0x48] sm:$0xff]
        %v1196 = vld [vmem:[#allocation9 + $0x50] sm:$0xff]
        %v1197 = vld [vmem:[#allocation9 + $0x58] sm:$0xff]
        %v1198 = vld [vmem:[#allocation9 + $0x60] sm:$0xff]
        %v1199 = vld [vmem:[#allocation9 + $0x68] sm:$0xff]
        %v1200 = vld [vmem:[#allocation9 + $0x70] sm:$0xff]
        %v1201 = vld [vmem:[#allocation9 + $0x78] sm:$0xff]
        %v1202 = vld [vmem:[#allocation4 + $0x4] sm:$0x1]
        %s1203 = scalar_lea.vmem [#allocation9], 128
        %v1204 = vld [vmem:[%s1203] sm:$0xff]
        %v1205 = vld [vmem:[%s1203 + $0x8] sm:$0xff]
        %v1206 = vld [vmem:[%s1203 + $0x10] sm:$0xff]
        %v1207 = vld [vmem:[%s1203 + $0x18] sm:$0xff]
        %v1208 = vld [vmem:[%s1203 + $0x20] sm:$0xff]
        %v1209 = vld [vmem:[%s1203 + $0x28] sm:$0xff]
        %v1210 = vld [vmem:[%s1203 + $0x30] sm:$0xff]
        %v1211 = vld [vmem:[%s1203 + $0x38] sm:$0xff]
        %v1212 = vld [vmem:[%s1203 + $0x40] sm:$0xff]
        %v1213 = vld [vmem:[%s1203 + $0x48] sm:$0xff]
        %v1214 = vld [vmem:[%s1203 + $0x50] sm:$0xff]
        %v1215 = vld [vmem:[%s1203 + $0x58] sm:$0xff]
        %v1216 = vld [vmem:[%s1203 + $0x60] sm:$0xff]
        %v1217 = vld [vmem:[%s1203 + $0x68] sm:$0xff]
        %v1218 = vld [vmem:[%s1203 + $0x70] sm:$0xff]
        %v1219 = vld [vmem:[%s1203 + $0x78] sm:$0xff]
        %v1222 = vunpack.c.l.b16 %v1185
        %v1223 = vunpack.c.l.b16 %v1202
        %v1224 = vpack.c.b16 %v1223, %v1222
        %v1226 = vshrl.u32 %v1224, 16
        %v1228 = vshll.u32 %v1224, 16
        %v1230 = vrot.slane %v1228, 1
        %v1231 = vor.u32 %v1226, %v1230
        %v1249 = vunpack.c.l.b16 %v1204
        %v1250 = vunpack.c.h.b16 %v1204
        %v1251 = vunpack.c.l.b16 %v1205
        %v1252 = vunpack.c.h.b16 %v1205
        %v1253 = vunpack.c.l.b16 %v1206
        %v1254 = vunpack.c.h.b16 %v1206
        %v1255 = vunpack.c.l.b16 %v1207
        %v1256 = vunpack.c.h.b16 %v1207
        %v1257 = vunpack.c.l.b16 %v1208
        %v1258 = vunpack.c.h.b16 %v1208
        %v1259 = vunpack.c.l.b16 %v1209
        %v1260 = vunpack.c.h.b16 %v1209
        %v1261 = vunpack.c.l.b16 %v1210
        %v1262 = vunpack.c.h.b16 %v1210
        %v1263 = vunpack.c.l.b16 %v1211
        %v1264 = vunpack.c.h.b16 %v1211
        %v1265 = vunpack.c.l.b16 %v1212
        %v1266 = vunpack.c.h.b16 %v1212
        %v1267 = vunpack.c.l.b16 %v1213
        %v1268 = vunpack.c.h.b16 %v1213
        %v1269 = vunpack.c.l.b16 %v1214
        %v1270 = vunpack.c.h.b16 %v1214
        %v1271 = vunpack.c.l.b16 %v1215
        %v1272 = vunpack.c.h.b16 %v1215
        %v1273 = vunpack.c.l.b16 %v1216
        %v1274 = vunpack.c.h.b16 %v1216
        %v1275 = vunpack.c.l.b16 %v1217
        %v1276 = vunpack.c.h.b16 %v1217
        %v1277 = vunpack.c.l.b16 %v1218
        %v1278 = vunpack.c.h.b16 %v1218
        %v1279 = vunpack.c.l.b16 %v1219
        %v1280 = vunpack.c.h.b16 %v1219
        %v1281 = vpack.c.b16 %v1251, %v1249
        %v1282 = vpack.c.b16 %v1252, %v1250
        %v1283 = vpack.c.b16 %v1255, %v1253
        %v1284 = vpack.c.b16 %v1256, %v1254
        %v1285 = vpack.c.b16 %v1259, %v1257
        %v1286 = vpack.c.b16 %v1260, %v1258
        %v1287 = vpack.c.b16 %v1263, %v1261
        %v1288 = vpack.c.b16 %v1264, %v1262
        %v1289 = vpack.c.b16 %v1267, %v1265
        %v1290 = vpack.c.b16 %v1268, %v1266
        %v1291 = vpack.c.b16 %v1271, %v1269
        %v1292 = vpack.c.b16 %v1272, %v1270
        %v1293 = vpack.c.b16 %v1275, %v1273
        %v1294 = vpack.c.b16 %v1276, %v1274
        %v1295 = vpack.c.b16 %v1279, %v1277
        %v1296 = vpack.c.b16 %v1280, %v1278
        %1313 = vmatpush.bf16.msra.mxu0 %v1295
        %1314 = vmatpush.bf16.msra.mxu0 %v1293
        %1315 = vmatpush.bf16.msra.mxu0 %v1291
        %1316 = vmatpush.bf16.msra.mxu0 %v1289
        %1317 = vmatpush.bf16.msra.mxu0 %v1287
        %1318 = vmatpush.bf16.msra.mxu0 %v1285
        %1319 = vmatpush.bf16.msra.mxu0 %v1283
        %1320 = vmatpush.bf16.msra.mxu0 %v1281
        %1321 = vmatmul.bf16.gmra.mxu0 %v1231
        %v1322 = vpop.f32.mrf.mxu0
        %v1323 = vadd.f32 0.0, %v1322
        %v1324 = vpop.f32.mrf.mxu0
        %1325 = vdwg.mxu0
        %1326 = vmatpush.bf16.msra.mxu0 %v1296
        %1327 = vmatpush.bf16.msra.mxu0 %v1294
        %1328 = vmatpush.bf16.msra.mxu0 %v1292
        %1329 = vmatpush.bf16.msra.mxu0 %v1290
        %1330 = vmatpush.bf16.msra.mxu0 %v1288
        %1331 = vmatpush.bf16.msra.mxu0 %v1286
        %1332 = vmatpush.bf16.msra.mxu0 %v1284
        %1333 = vmatpush.bf16.msra.mxu0 %v1282
        %1334 = vmatmul.bf16.gmra.mxu0 %v1231
        %v1335 = vpop.f32.mrf.mxu0
        %v1336 = vadd.f32 0.0, %v1335
        %v1337 = vpop.f32.mrf.mxu0
        %1338 = vdwg.mxu0
        %v1355 = vunpack.c.l.b16 %v1186
        %v1356 = vunpack.c.h.b16 %v1186
        %v1357 = vunpack.c.l.b16 %v1187
        %v1358 = vunpack.c.h.b16 %v1187
        %v1359 = vunpack.c.l.b16 %v1188
        %v1360 = vunpack.c.h.b16 %v1188
        %v1361 = vunpack.c.l.b16 %v1189
        %v1362 = vunpack.c.h.b16 %v1189
        %v1363 = vunpack.c.l.b16 %v1190
        %v1364 = vunpack.c.h.b16 %v1190
        %v1365 = vunpack.c.l.b16 %v1191
        %v1366 = vunpack.c.h.b16 %v1191
        %v1367 = vunpack.c.l.b16 %v1192
        %v1368 = vunpack.c.h.b16 %v1192
        %v1369 = vunpack.c.l.b16 %v1193
        %v1370 = vunpack.c.h.b16 %v1193
        %v1371 = vunpack.c.l.b16 %v1194
        %v1372 = vunpack.c.h.b16 %v1194
        %v1373 = vunpack.c.l.b16 %v1195
        %v1374 = vunpack.c.h.b16 %v1195
        %v1375 = vunpack.c.l.b16 %v1196
        %v1376 = vunpack.c.h.b16 %v1196
        %v1377 = vunpack.c.l.b16 %v1197
        %v1378 = vunpack.c.h.b16 %v1197
        %v1379 = vunpack.c.l.b16 %v1198
        %v1380 = vunpack.c.h.b16 %v1198
        %v1381 = vunpack.c.l.b16 %v1199
        %v1382 = vunpack.c.h.b16 %v1199
        %v1383 = vunpack.c.l.b16 %v1200
        %v1384 = vunpack.c.h.b16 %v1200
        %v1385 = vunpack.c.l.b16 %v1201
        %v1386 = vunpack.c.h.b16 %v1201
        %v1387 = vpack.c.b16 %v1357, %v1355
        %v1388 = vpack.c.b16 %v1358, %v1356
        %v1389 = vpack.c.b16 %v1361, %v1359
        %v1390 = vpack.c.b16 %v1362, %v1360
        %v1391 = vpack.c.b16 %v1365, %v1363
        %v1392 = vpack.c.b16 %v1366, %v1364
        %v1393 = vpack.c.b16 %v1369, %v1367
        %v1394 = vpack.c.b16 %v1370, %v1368
        %v1395 = vpack.c.b16 %v1373, %v1371
        %v1396 = vpack.c.b16 %v1374, %v1372
        %v1397 = vpack.c.b16 %v1377, %v1375
        %v1398 = vpack.c.b16 %v1378, %v1376
        %v1399 = vpack.c.b16 %v1381, %v1379
        %v1400 = vpack.c.b16 %v1382, %v1380
        %v1401 = vpack.c.b16 %v1385, %v1383
        %v1402 = vpack.c.b16 %v1386, %v1384
        %1419 = vmatpush.bf16.msra.mxu0 %v1401
        %1420 = vmatpush.bf16.msra.mxu0 %v1399
        %1421 = vmatpush.bf16.msra.mxu0 %v1397
        %1422 = vmatpush.bf16.msra.mxu0 %v1395
        %1423 = vmatpush.bf16.msra.mxu0 %v1393
        %1424 = vmatpush.bf16.msra.mxu0 %v1391
        %1425 = vmatpush.bf16.msra.mxu0 %v1389
        %1426 = vmatpush.bf16.msra.mxu0 %v1387
        %1427 = vmatmul.bf16.gmra.mxu0 %v1185
        %v1428 = vpop.f32.mrf.mxu0
        %v1429 = vadd.f32 %v1323, %v1428
        %v1430 = vpop.f32.mrf.mxu0
        %1431 = vdwg.mxu0
        %1432 = vmatpush.bf16.msra.mxu0 %v1402
        %1433 = vmatpush.bf16.msra.mxu0 %v1400
        %1434 = vmatpush.bf16.msra.mxu0 %v1398
        %1435 = vmatpush.bf16.msra.mxu0 %v1396
        %1436 = vmatpush.bf16.msra.mxu0 %v1394
        %1437 = vmatpush.bf16.msra.mxu0 %v1392
        %1438 = vmatpush.bf16.msra.mxu0 %v1390
        %1439 = vmatpush.bf16.msra.mxu0 %v1388
        %1440 = vmatmul.bf16.gmra.mxu0 %v1185
        %v1441 = vpop.f32.mrf.mxu0
        %v1442 = vadd.f32 %v1336, %v1441
        %v1443 = vpop.f32.mrf.mxu0
        %1444 = vdwg.mxu0
        %v1445 = vld [vmem:[#allocation4] sm:$0xe]
        %s1446 = scalar_lea.vmem [#allocation9], 256
        %v1447 = vld [vmem:[%s1446] sm:$0xff]
        %v1448 = vld [vmem:[%s1446 + $0x8] sm:$0xff]
        %v1449 = vld [vmem:[%s1446 + $0x10] sm:$0xff]
        %v1450 = vld [vmem:[%s1446 + $0x18] sm:$0xff]
        %v1451 = vld [vmem:[%s1446 + $0x20] sm:$0xff]
        %v1452 = vld [vmem:[%s1446 + $0x28] sm:$0xff]
        %v1453 = vld [vmem:[%s1446 + $0x30] sm:$0xff]
        %v1454 = vld [vmem:[%s1446 + $0x38] sm:$0xff]
        %v1455 = vld [vmem:[%s1446 + $0x40] sm:$0xff]
        %v1456 = vld [vmem:[%s1446 + $0x48] sm:$0xff]
        %v1457 = vld [vmem:[%s1446 + $0x50] sm:$0xff]
        %v1458 = vld [vmem:[%s1446 + $0x58] sm:$0xff]
        %v1459 = vld [vmem:[%s1446 + $0x60] sm:$0xff]
        %v1460 = vld [vmem:[%s1446 + $0x68] sm:$0xff]
        %v1461 = vld [vmem:[%s1446 + $0x70] sm:$0xff]
        %v1462 = vld [vmem:[%s1446 + $0x78] sm:$0xff]
        %v1464 = vunpack.c.l.b16 %v1445
        %v1465 = vpack.c.b16 %v1223, %v1464
        %v1466 = vrot.slane %v1465, 1
        %v1484 = vunpack.c.l.b16 %v1447
        %v1485 = vunpack.c.h.b16 %v1447
        %v1486 = vunpack.c.l.b16 %v1448
        %v1487 = vunpack.c.h.b16 %v1448
        %v1488 = vunpack.c.l.b16 %v1449
        %v1489 = vunpack.c.h.b16 %v1449
        %v1490 = vunpack.c.l.b16 %v1450
        %v1491 = vunpack.c.h.b16 %v1450
        %v1492 = vunpack.c.l.b16 %v1451
        %v1493 = vunpack.c.h.b16 %v1451
        %v1494 = vunpack.c.l.b16 %v1452
        %v1495 = vunpack.c.h.b16 %v1452
        %v1496 = vunpack.c.l.b16 %v1453
        %v1497 = vunpack.c.h.b16 %v1453
        %v1498 = vunpack.c.l.b16 %v1454
        %v1499 = vunpack.c.h.b16 %v1454
        %v1500 = vunpack.c.l.b16 %v1455
        %v1501 = vunpack.c.h.b16 %v1455
        %v1502 = vunpack.c.l.b16 %v1456
        %v1503 = vunpack.c.h.b16 %v1456
        %v1504 = vunpack.c.l.b16 %v1457
        %v1505 = vunpack.c.h.b16 %v1457
        %v1506 = vunpack.c.l.b16 %v1458
        %v1507 = vunpack.c.h.b16 %v1458
        %v1508 = vunpack.c.l.b16 %v1459
        %v1509 = vunpack.c.h.b16 %v1459
        %v1510 = vunpack.c.l.b16 %v1460
        %v1511 = vunpack.c.h.b16 %v1460
        %v1512 = vunpack.c.l.b16 %v1461
        %v1513 = vunpack.c.h.b16 %v1461
        %v1514 = vunpack.c.l.b16 %v1462
        %v1515 = vunpack.c.h.b16 %v1462
        %v1516 = vpack.c.b16 %v1486, %v1484
        %v1517 = vpack.c.b16 %v1487, %v1485
        %v1518 = vpack.c.b16 %v1490, %v1488
        %v1519 = vpack.c.b16 %v1491, %v1489
        %v1520 = vpack.c.b16 %v1494, %v1492
        %v1521 = vpack.c.b16 %v1495, %v1493
        %v1522 = vpack.c.b16 %v1498, %v1496
        %v1523 = vpack.c.b16 %v1499, %v1497
        %v1524 = vpack.c.b16 %v1502, %v1500
        %v1525 = vpack.c.b16 %v1503, %v1501
        %v1526 = vpack.c.b16 %v1506, %v1504
        %v1527 = vpack.c.b16 %v1507, %v1505
        %v1528 = vpack.c.b16 %v1510, %v1508
        %v1529 = vpack.c.b16 %v1511, %v1509
        %v1530 = vpack.c.b16 %v1514, %v1512
        %v1531 = vpack.c.b16 %v1515, %v1513
        %1548 = vmatpush.bf16.msra.mxu0 %v1530
        %1549 = vmatpush.bf16.msra.mxu0 %v1528
        %1550 = vmatpush.bf16.msra.mxu0 %v1526
        %1551 = vmatpush.bf16.msra.mxu0 %v1524
        %1552 = vmatpush.bf16.msra.mxu0 %v1522
        %1553 = vmatpush.bf16.msra.mxu0 %v1520
        %1554 = vmatpush.bf16.msra.mxu0 %v1518
        %1555 = vmatpush.bf16.msra.mxu0 %v1516
        %1556 = vmatmul.bf16.gmra.mxu0 %v1466
        %v1557 = vpop.f32.mrf.mxu0
        %v1558 = vadd.f32 0.0, %v1557
        %v1559 = vpop.f32.mrf.mxu0
        %1560 = vdwg.mxu0
        %1561 = vmatpush.bf16.msra.mxu0 %v1531
        %1562 = vmatpush.bf16.msra.mxu0 %v1529
        %1563 = vmatpush.bf16.msra.mxu0 %v1527
        %1564 = vmatpush.bf16.msra.mxu0 %v1525
        %1565 = vmatpush.bf16.msra.mxu0 %v1523
        %1566 = vmatpush.bf16.msra.mxu0 %v1521
        %1567 = vmatpush.bf16.msra.mxu0 %v1519
        %1568 = vmatpush.bf16.msra.mxu0 %v1517
        %1569 = vmatmul.bf16.gmra.mxu0 %v1466
        %v1570 = vpop.f32.mrf.mxu0
        %v1571 = vadd.f32 0.0, %v1570
        %v1572 = vpop.f32.mrf.mxu0
        %1573 = vdwg.mxu0
        %v1574 = vadd.f32 %v1429, %v1558
        %v1575 = vadd.f32 %v1442, %v1571
        %v1576 = vld [vmem:[%s6] sm:$0x3]
        %v1578 = vperm.slane %v1576, 0
        %v1579 = vperm.slane %v1576, 1
        %v1582 = vadd.f32 %v1574, %v1578
        %v1583 = vadd.f32 %v1575, %v1579
        %v1584 = vmax.f32 %v1582, 0.0
        %v1585 = vmax.f32 %v1583, 0.0
        %v1586 = vpack.c.bf16 %v1585, %v1584
        %1587 = vst [vmem:[%s342] sm:$0xff] %v1586
        %p1588 = scmp.lt.s32.totalorder %s20, 1
        %s1589 = scalar_select %p1588, %s20, 1
        %s1590 = smul.addr %s1589, 2
        %s1591 = smul.addr %s1590, 4
        %s1592 = scalar_lea.vmem %s7, %s1591
        // Predicated region
        $region61: #{ricbe_decoder_forward.2} parent=47 // pred_check
          %p1593 = pneg %p195
        $region62: #{ricbe_decoder_forward.2} parent=47 // pred_check_branch
          %1595 = sbr.rel (%p1593) target = $region64
        $region63: #{ricbe_decoder_forward.2} parent=47 // pred_region
          _
        $region64: #{ricbe_decoder_forward.2} parent=47 // pred_fallthru
          _
      $region48: #{ricbe_decoder_forward.2} parent=5 // pred_fallthru
        _
      %p1596 = scmp.le.s32.totalorder 2, %s15
      // Predicated region
      $region65: #{ricbe_decoder_forward.2} parent=5 // pred_check
        %p1597 = pneg %p1596
      $region66: #{ricbe_decoder_forward.2} parent=5 // pred_check_branch
        %1599 = sbr.rel (%p1597) target = $region68
      $region67: #{ricbe_decoder_forward.2} parent=5 // pred_region
        %s1600 = ssub.s32 %s15, 2
        // Predicated region
        $region69: #{ricbe_decoder_forward.2} parent=67 // pred_check
          %p1601 = pneg %p201
        $region70: #{ricbe_decoder_forward.2} parent=67 // pred_check_branch
          %1603 = sbr.rel (%p1601) target = $region72
        $region71: #{ricbe_decoder_forward.2} parent=67 // pred_region
          %p1604 = scmp.lt.s32.totalorder %s21, 1
          %s1605 = scalar_select %p1604, %s21, 1
          %s1606 = smul.addr %s1605, 2
          %s1607 = smul.addr %s1606, 4
          %s1608 = scalar_lea.vmem %s7, %s1607
        $region72: #{ricbe_decoder_forward.2} parent=67 // pred_fallthru
          _
      $region68: #{ricbe_decoder_forward.2} parent=5 // pred_fallthru
        _
    $region6: #{ricbe_decoder_forward.2} parent=1 // loop_footer
      %s19 = sadd.s32 1, %s15
    $region7: #{ricbe_decoder_forward.2} parent=1 // loop_footer_branch
      %14 = sbr.rel target = $region3
    $region8: #{ricbe_decoder_forward.2} parent=1 // loop_exit
      _
    %1609 = vsyncpa [#allocation6], 1
    %s1610 = scalar_lea.sflag [#allocation6], 1
    %1611 = vsyncpa %s1610, 1
    %1612 = vsyncpa [#allocation8], 1

// kernel: ricbe_decoder_forward.3
$region0: #{ricbe_decoder_forward.3}
  #allocation0 [shape = 'u32[]', space=smem, size = 0x4, offset = 0x4, fixed_abs, tag = 'smem constant byte address 0x4 - core index']
  #allocation1 [shape = 'u32[72,128]{1,0:T(1,128)}', space=vmem, size = 0x9000, scoped, tag = 'internal scratch']
  #allocation2 [shape = 'bf16[19,128]{1,0:T(8,128)(2,1)}', space=vmem, size = 0x1800, scoped, tag = 'scratch operand']
  #allocation3 [shape = 'bf16[19,128]{1,0:T(8,128)(2,1)}', space=vmem, size = 0x1800, scoped, tag = 'scratch operand']
  #allocation4 [shape = 'bf16[17,128]{1,0:T(8,128)(2,1)}', space=vmem, size = 0x1800, scoped, tag = 'scratch operand']
  %s0 = inlined_call_operand.vmem [shape: bf16[2,15,128], index: 0, kind: input, shape index: {}]
  %s1 = inlined_call_operand.vmem [shape: bf16[2,15,128], index: 1, kind: input, shape index: {}]
  %s2 = inlined_call_operand.hbm [shape: bf16[3,128,256], index: 2, kind: input, shape index: {}]
  %s3 = inlined_call_operand.hbm [shape: bf16[3,128,256], index: 3, kind: input, shape index: {}]
  %s4 = inlined_call_operand.vmem [shape: f32[1,256], index: 4, kind: input, shape index: {}]
  %s5 = inlined_call_operand.hbm [shape: bf16[3,128,256], index: 5, kind: input, shape index: {}]
  %s6 = inlined_call_operand.vmem [shape: f32[1,256], index: 6, kind: input, shape index: {}]
  %s7 = inlined_call_operand.vmem [shape: bf16[2,15,256], index: 7, kind: output, shape index: {}]
  %s8 = sld [smem:[#allocation0]]
  $region73: #{ricbe_decoder_forward.3} parent=0
    _
  %s10 = ssub.s32 1, %s8
  %s11 = scalar_select 0, %s10, %s8
  $region1: #{ricbe_decoder_forward.3} parent=0
    #allocation5 [shape = 'u8[196608]{0}', space=vmem, size = 0x30000, scoped, tag = 'input window, operand 2, single buffered']
    #allocation6 [shape = 's32[2]{0}', space=sflag, size = 0x8, scoped, tag = 'scoped memory for ricbe_decoder_forward.3']
    #allocation7 [shape = 'u8[196608]{0}', space=vmem, size = 0x30000, scoped, tag = 'input window, operand 3, single buffered']
    #allocation8 [shape = 's32[1]{0}', space=sflag, size = 0x4, scoped, tag = 'scoped memory for ricbe_decoder_forward.3']
    #allocation9 [shape = 'u8[196608]{0}', space=vmem, size = 0x30000, scoped, tag = 'input window, operand 5, single buffered']
    %12 = vsyncpa [#allocation6], 0
    %13 = vsyncpa [#allocation8], 0
    loop: start=0, step=1, limit=4
    $region2: #{ricbe_decoder_forward.3} parent=1 // loop_pre_header
      _
    $region3: #{ricbe_decoder_forward.3} parent=1 // loop_header
      %s15 = sphi 0, %s19
      %p16 = scmp.ge.s32.totalorder %s15, 4
      %s25 = sphi 0, %s27
      %s28 = sphi 0, %s25
      %s29 = sphi 0, %s28
      %s45 = sphi 0, %s29
      %s51 = sphi 0, %s53
      %s54 = sphi 0, %s51
      %s55 = sphi 0, %s54
      %s71 = sphi 0, %s55
      %s75 = sphi 0, %s75
      %s77 = sphi 0, %s75
      %s78 = sphi 0, %s77
      %s92 = sphi 0, %s78
      %s96 = sphi 0, %s96
      %s98 = sphi 0, %s96
      %s99 = sphi 0, %s98
      %s113 = sphi 0, %s99
      %s117 = sphi 0, %s117
      %s119 = sphi 0, %s117
      %s120 = sphi 0, %s119
      %s134 = sphi 0, %s120
      %s138 = sphi 0, %s138
      %s140 = sphi 0, %s138
      %s141 = sphi 0, %s140
      %s155 = sphi 0, %s141
      %s159 = sphi 0, %s159
      %s161 = sphi 0, %s159
      %s162 = sphi 0, %s161
      %s176 = sphi 0, %s162
      %s182 = sphi 0, %s184
      %s185 = sphi 0, %s182
      %s186 = sphi 0, %s185
      %s202 = sphi 0, %s186
    $region4: #{ricbe_decoder_forward.3} parent=1 // loop_header_branch
      %18 = sbr.rel (%p16) target = $region8
    $region5: #{ricbe_decoder_forward.3} parent=1 // loop_body
      %s20 = ssub.s32 %s15, 1
      %s21 = ssub.s32 %s15, 2
      %s22 = sadd.s32 %s15, 1
      %s23 = ssub.s32 %s15, %s22
      %p24 = scmp.eq.s32.totalorder %s23, 0
      %s26 = sadd.s32 %s25, 1
      %s27 = scalar_select %p24, %s25, %s26
      %p30 = pneg %p24
      %p31 = scmp.eq.s32.totalorder %s15, 1
      %p32 = por %p30, %p31
      %p33 = scmp.ne.s32.totalorder %s25, %s28
      %p34 = scmp.eq.s32.totalorder %s15, 0
      %p35 = por %p33, %p34
      %p36 = scmp.ne.s32.totalorder %s25, %s28
      %p37 = scmp.eq.s32.totalorder %s20, 1
      %p38 = por %p36, %p37
      %p39 = scmp.ne.s32.totalorder %s28, %s29
      %p40 = scmp.eq.s32.totalorder %s20, 0
      %p41 = por %p39, %p40
      %p42 = scmp.ne.s32.totalorder %s28, %s29
      %p43 = scmp.eq.s32.totalorder %s21, 1
      %p44 = por %p42, %p43
      %p46 = scmp.ne.s32.totalorder %s29, %s45
      %p47 = scmp.eq.s32.totalorder %s21, 0
      %p48 = por %p46, %p47
      %s49 = ssub.s32 %s15, %s22
      %p50 = scmp.eq.s32.totalorder %s49, 0
      %s52 = sadd.s32 %s51, 1
      %s53 = scalar_select %p50, %s51, %s52
      %p56 = pneg %p50
      %p57 = scmp.eq.s32.totalorder %s15, 1
      %p58 = por %p56, %p57
      %p59 = scmp.ne.s32.totalorder %s51, %s54
      %p60 = scmp.eq.s32.totalorder %s15, 0
      %p61 = por %p59, %p60
      %p62 = scmp.ne.s32.totalorder %s51, %s54
      %p63 = scmp.eq.s32.totalorder %s20, 1
      %p64 = por %p62, %p63
      %p65 = scmp.ne.s32.totalorder %s54, %s55
      %p66 = scmp.eq.s32.totalorder %s20, 0
      %p67 = por %p65, %p66
      %p68 = scmp.ne.s32.totalorder %s54, %s55
      %p69 = scmp.eq.s32.totalorder %s21, 1
      %p70 = por %p68, %p69
      %p72 = scmp.ne.s32.totalorder %s55, %s71
      %p73 = scmp.eq.s32.totalorder %s21, 0
      %p74 = por %p72, %p73
      %s76 = sadd.s32 %s75, 1
      %p79 = scmp.eq.s32.totalorder %s15, 1
      %p80 = scmp.ne.s32.totalorder %s75, %s77
      %p81 = scmp.eq.s32.totalorder %s15, 0
      %p82 = por %p80, %p81
      %p83 = scmp.ne.s32.totalorder %s75, %s77
      %p84 = scmp.eq.s32.totalorder %s20, 1
      %p85 = por %p83, %p84
      %p86 = scmp.ne.s32.totalorder %s77, %s78
      %p87 = scmp.eq.s32.totalorder %s20, 0
      %p88 = por %p86, %p87
      %p89 = scmp.ne.s32.totalorder %s77, %s78
      %p90 = scmp.eq.s32.totalorder %s21, 1
      %p91 = por %p89, %p90
      %p93 = scmp.ne.s32.totalorder %s78, %s92
      %p94 = scmp.eq.s32.totalorder %s21, 0
      %p95 = por %p93, %p94
      %s97 = sadd.s32 %s96, 1
      %p100 = scmp.eq.s32.totalorder %s15, 1
      %p101 = scmp.ne.s32.totalorder %s96, %s98
      %p102 = scmp.eq.s32.totalorder %s15, 0
      %p103 = por %p101, %p102
      %p104 = scmp.ne.s32.totalorder %s96, %s98
      %p105 = scmp.eq.s32.totalorder %s20, 1
      %p106 = por %p104, %p105
      %p107 = scmp.ne.s32.totalorder %s98, %s99
      %p108 = scmp.eq.s32.totalorder %s20, 0
      %p109 = por %p107, %p108
      %p110 = scmp.ne.s32.totalorder %s98, %s99
      %p111 = scmp.eq.s32.totalorder %s21, 1
      %p112 = por %p110, %p111
      %p114 = scmp.ne.s32.totalorder %s99, %s113
      %p115 = scmp.eq.s32.totalorder %s21, 0
      %p116 = por %p114, %p115
      %s118 = sadd.s32 %s117, 1
      %p121 = scmp.eq.s32.totalorder %s15, 1
      %p122 = scmp.ne.s32.totalorder %s117, %s119
      %p123 = scmp.eq.s32.totalorder %s15, 0
      %p124 = por %p122, %p123
      %p125 = scmp.ne.s32.totalorder %s117, %s119
      %p126 = scmp.eq.s32.totalorder %s20, 1
      %p127 = por %p125, %p126
      %p128 = scmp.ne.s32.totalorder %s119, %s120
      %p129 = scmp.eq.s32.totalorder %s20, 0
      %p130 = por %p128, %p129
      %p131 = scmp.ne.s32.totalorder %s119, %s120
      %p132 = scmp.eq.s32.totalorder %s21, 1
      %p133 = por %p131, %p132
      %p135 = scmp.ne.s32.totalorder %s120, %s134
      %p136 = scmp.eq.s32.totalorder %s21, 0
      %p137 = por %p135, %p136
      %s139 = sadd.s32 %s138, 1
      %p142 = scmp.eq.s32.totalorder %s15, 1
      %p143 = scmp.ne.s32.totalorder %s138, %s140
      %p144 = scmp.eq.s32.totalorder %s15, 0
      %p145 = por %p143, %p144
      %p146 = scmp.ne.s32.totalorder %s138, %s140
      %p147 = scmp.eq.s32.totalorder %s20, 1
      %p148 = por %p146, %p147
      %p149 = scmp.ne.s32.totalorder %s140, %s141
      %p150 = scmp.eq.s32.totalorder %s20, 0
      %p151 = por %p149, %p150
      %p152 = scmp.ne.s32.totalorder %s140, %s141
      %p153 = scmp.eq.s32.totalorder %s21, 1
      %p154 = por %p152, %p153
      %p156 = scmp.ne.s32.totalorder %s141, %s155
      %p157 = scmp.eq.s32.totalorder %s21, 0
      %p158 = por %p156, %p157
      %s160 = sadd.s32 %s159, 1
      %p163 = scmp.eq.s32.totalorder %s15, 1
      %p164 = scmp.ne.s32.totalorder %s159, %s161
      %p165 = scmp.eq.s32.totalorder %s15, 0
      %p166 = por %p164, %p165
      %p167 = scmp.ne.s32.totalorder %s159, %s161
      %p168 = scmp.eq.s32.totalorder %s20, 1
      %p169 = por %p167, %p168
      %p170 = scmp.ne.s32.totalorder %s161, %s162
      %p171 = scmp.eq.s32.totalorder %s20, 0
      %p172 = por %p170, %p171
      %p173 = scmp.ne.s32.totalorder %s161, %s162
      %p174 = scmp.eq.s32.totalorder %s21, 1
      %p175 = por %p173, %p174
      %p177 = scmp.ne.s32.totalorder %s162, %s176
      %p178 = scmp.eq.s32.totalorder %s21, 0
      %p179 = por %p177, %p178
      %s180 = ssub.s32 %s15, %s22
      %p181 = scmp.eq.s32.totalorder %s180, 0
      %s183 = sadd.s32 %s182, 1
      %s184 = scalar_select %p181, %s182, %s183
      %p187 = pneg %p181
      %p188 = scmp.eq.s32.totalorder %s15, 1
      %p189 = por %p187, %p188
      %p190 = scmp.ne.s32.totalorder %s182, %s185
      %p191 = scmp.eq.s32.totalorder %s15, 0
      %p192 = por %p190, %p191
      %p193 = scmp.ne.s32.totalorder %s182, %s185
      %p194 = scmp.eq.s32.totalorder %s20, 1
      %p195 = por %p193, %p194
      %p196 = scmp.ne.s32.totalorder %s185, %s186
      %p197 = scmp.eq.s32.totalorder %s20, 0
      %p198 = por %p196, %p197
      %p199 = scmp.ne.s32.totalorder %s185, %s186
      %p200 = scmp.eq.s32.totalorder %s21, 1
      %p201 = por %p199, %p200
      %p203 = scmp.ne.s32.totalorder %s186, %s202
      %p204 = scmp.eq.s32.totalorder %s21, 0
      %p205 = por %p203, %p204
      %p206 = scmp.le.s32.totalorder 1, %s15
      %p207 = scmp.lt.s32.totalorder %s15, 3
      %p208 = pnand %p206, %p207
      %p209 = pneg %p208
      // Predicated region
      $region9: #{ricbe_decoder_forward.3} parent=5 // pred_check
        _
      $region10: #{ricbe_decoder_forward.3} parent=5 // pred_check_branch
        %211 = sbr.rel (%p208) target = $region12
      $region11: #{ricbe_decoder_forward.3} parent=5 // pred_region
        %s212 = ssub.s32 %s15, 1
        // Predicated region
        $region13: #{ricbe_decoder_forward.3} parent=11 // pred_check
          %p213 = pneg %p88
        $region14: #{ricbe_decoder_forward.3} parent=11 // pred_check_branch
          %215 = sbr.rel (%p213) target = $region16
        $region15: #{ricbe_decoder_forward.3} parent=11 // pred_region
          %217 = vsyncadd [#allocation6], 0
          %s218 = sshll.u32 %s2, 4
          %s219 = int_to_ptr.hbm [resolvable:$true] %s218
          %s220 = sshll.u32 [#allocation5], 4
          %s221 = int_to_ptr.vmem [resolvable:$true] %s220
          %226 = dma.hbm_to_vmem [thread:$0]  %s219, 6144, %s221, [#allocation6], 128, 128, 8
        $region16: #{ricbe_decoder_forward.3} parent=11 // pred_fallthru
          _
        // Predicated region
        $region17: #{ricbe_decoder_forward.3} parent=11 // pred_check
          %p227 = pneg %p109
        $region18: #{ricbe_decoder_forward.3} parent=11 // pred_check_branch
          %229 = sbr.rel (%p227) target = $region20
        $region19: #{ricbe_decoder_forward.3} parent=11 // pred_region
          %231 = vsyncadd [#allocation8], 0
          %s232 = sshll.u32 %s3, 4
          %s233 = int_to_ptr.hbm [resolvable:$true] %s232
          %s234 = sshll.u32 [#allocation7], 4
          %s235 = int_to_ptr.vmem [resolvable:$true] %s234
          %240 = dma.hbm_to_vmem [thread:$0]  %s233, 6144, %s235, [#allocation8], 128, 128, 8
        $region20: #{ricbe_decoder_forward.3} parent=11 // pred_fallthru
          _
        // Predicated region
        $region21: #{ricbe_decoder_forward.3} parent=11 // pred_check
          %p241 = pneg %p130
        $region22: #{ricbe_decoder_forward.3} parent=11 // pred_check_branch
          %243 = sbr.rel (%p241) target = $region24
        $region23: #{ricbe_decoder_forward.3} parent=11 // pred_region
          _
        $region24: #{ricbe_decoder_forward.3} parent=11 // pred_fallthru
          _
        // Predicated region
        $region25: #{ricbe_decoder_forward.3} parent=11 // pred_check
          %p244 = pneg %p151
        $region26: #{ricbe_decoder_forward.3} parent=11 // pred_check_branch
          %246 = sbr.rel (%p244) target = $region28
        $region27: #{ricbe_decoder_forward.3} parent=11 // pred_region
          %248 = vsyncadd [#allocation8], 0
          %s249 = sshll.u32 %s5, 4
          %s250 = int_to_ptr.hbm [resolvable:$true] %s249
          %s251 = sshll.u32 [#allocation9], 4
          %s252 = int_to_ptr.vmem [resolvable:$true] %s251
          %257 = dma.hbm_to_vmem [thread:$0]  %s250, 6144, %s252, [#allocation8], 128, 128, 8
        $region28: #{ricbe_decoder_forward.3} parent=11 // pred_fallthru
          _
        // Predicated region
        $region29: #{ricbe_decoder_forward.3} parent=11 // pred_check
          %p258 = pneg %p172
        $region30: #{ricbe_decoder_forward.3} parent=11 // pred_check_branch
          %260 = sbr.rel (%p258) target = $region32
        $region31: #{ricbe_decoder_forward.3} parent=11 // pred_region
          _
        $region32: #{ricbe_decoder_forward.3} parent=11 // pred_fallthru
          _
      $region12: #{ricbe_decoder_forward.3} parent=5 // pred_fallthru
        _
      %p261 = scmp.lt.s32.totalorder %s15, 2
      // Predicated region
      $region33: #{ricbe_decoder_forward.3} parent=5 // pred_check
        %p262 = pneg %p261
      $region34: #{ricbe_decoder_forward.3} parent=5 // pred_check_branch
        %264 = sbr.rel (%p262) target = $region36
      $region35: #{ricbe_decoder_forward.3} parent=5 // pred_region
        // Predicated region
        $region37: #{ricbe_decoder_forward.3} parent=35 // pred_check
          %p265 = pneg %p35
        $region38: #{ricbe_decoder_forward.3} parent=35 // pred_check_branch
          %267 = sbr.rel (%p265) target = $region40
        $region39: #{ricbe_decoder_forward.3} parent=35 // pred_region
          %p268 = scmp.lt.s32.totalorder %s15, 1
          %s269 = scalar_select %p268, %s15, 1
          %s270 = smul.addr %s269, 2
          %s271 = smul.addr %s270, 4
          %s272 = scalar_lea.vmem %s0, %s271
        $region40: #{ricbe_decoder_forward.3} parent=35 // pred_fallthru
          _
        // Predicated region
        $region41: #{ricbe_decoder_forward.3} parent=35 // pred_check
          %p273 = pneg %p61
        $region42: #{ricbe_decoder_forward.3} parent=35 // pred_check_branch
          %275 = sbr.rel (%p273) target = $region44
        $region43: #{ricbe_decoder_forward.3} parent=35 // pred_region
          %p276 = scmp.lt.s32.totalorder %s15, 1
          %s277 = scalar_select %p276, %s15, 1
          %s278 = smul.addr %s277, 2
          %s279 = smul.addr %s278, 4
          %s280 = scalar_lea.vmem %s1, %s279
        $region44: #{ricbe_decoder_forward.3} parent=35 // pred_fallthru
          _
      $region36: #{ricbe_decoder_forward.3} parent=5 // pred_fallthru
        _
      %p281 = scmp.le.s32.totalorder 1, %s15
      %p282 = scmp.lt.s32.totalorder %s15, 3
      %p283 = pnand %p281, %p282
      %p284 = pneg %p283
      // Predicated region
      $region45: #{ricbe_decoder_forward.3} parent=5 // pred_check
        _
      $region46: #{ricbe_decoder_forward.3} parent=5 // pred_check_branch
        %286 = sbr.rel (%p283) target = $region48
      $region47: #{ricbe_decoder_forward.3} parent=5 // pred_region
        %s287 = ssub.s32 %s15, 1
        // Predicated region
        $region49: #{ricbe_decoder_forward.3} parent=47 // pred_check
          %p288 = pneg %p88
        $region50: #{ricbe_decoder_forward.3} parent=47 // pred_check_branch
          %290 = sbr.rel (%p288) target = $region52
        $region51: #{ricbe_decoder_forward.3} parent=47 // pred_region
          %292 = dma.done [#allocation6], 6144
        $region52: #{ricbe_decoder_forward.3} parent=47 // pred_fallthru
          _
        // Predicated region
        $region53: #{ricbe_decoder_forward.3} parent=47 // pred_check
          %p293 = pneg %p109
        $region54: #{ricbe_decoder_forward.3} parent=47 // pred_check_branch
          %295 = sbr.rel (%p293) target = $region56
        $region55: #{ricbe_decoder_forward.3} parent=47 // pred_region
          %297 = dma.done [#allocation8], 6144
        $region56: #{ricbe_decoder_forward.3} parent=47 // pred_fallthru
          _
        // Predicated region
        $region57: #{ricbe_decoder_forward.3} parent=47 // pred_check
          %p298 = pneg %p151
        $region58: #{ricbe_decoder_forward.3} parent=47 // pred_check_branch
          %300 = sbr.rel (%p298) target = $region60
        $region59: #{ricbe_decoder_forward.3} parent=47 // pred_region
          %302 = dma.done [#allocation8], 6144
        $region60: #{ricbe_decoder_forward.3} parent=47 // pred_fallthru
          _
        %p303 = scmp.lt.s32.totalorder %s20, 1
        %s304 = scalar_select %p303, %s20, 1
        %s305 = smul.addr %s304, 2
        %s306 = smul.addr %s305, 4
        %s307 = scalar_lea.vmem %s0, %s306
        %p308 = pneg %p41
        %p309 = pneg %p38
        %p310 = scmp.lt.s32.totalorder %s20, 1
        %s311 = scalar_select %p310, %s20, 1
        %s312 = smul.addr %s311, 2
        %s313 = smul.addr %s312, 4
        %s314 = scalar_lea.vmem %s1, %s313
        %p315 = pneg %p67
        %p316 = pneg %p64
        %p317 = pneg %p88
        %p318 = pneg %p85
        %p319 = pneg %p109
        %p320 = pneg %p106
        %p321 = pneg %p130
        %p322 = pneg %p127
        %p323 = pneg %p151
        %p324 = pneg %p148
        %p325 = pneg %p172
        %p326 = pneg %p169
        %p327 = pneg %p198
        %p328 = pneg %p195
        %p329 = scmp.lt.s32.totalorder %s20, 1
        %s330 = scalar_select %p329, %s20, 1
        %s331 = smul.addr %s330, 4
        %s332 = smul.addr %s331, 4
        %s333 = scalar_lea.vmem %s7, %s332
        %p334 = scmp.lt.s32.totalorder %s20, 1
        %s335 = scalar_select %p334, %s20, 1
        %s336 = smul.addr %s335, 2
        %s337 = smul.addr %s336, 4
        %s338 = scalar_lea.vmem %s0, %s337
        %p339 = scmp.lt.s32.totalorder %s20, 1
        %s340 = scalar_select %p339, %s20, 1
        %s341 = smul.addr %s340, 2
        %s342 = smul.addr %s341, 4
        %s343 = scalar_lea.vmem %s1, %s342
        %p344 = scmp.lt.s32.totalorder %s20, 1
        %s345 = scalar_select %p344, %s20, 1
        %s346 = smul.addr %s345, 4
        %s347 = smul.addr %s346, 4
        %s348 = scalar_lea.vmem %s7, %s347
        %350 = vst [vmem:[#allocation2] sm:$0xf] 0
        %351 = vst [vmem:[#allocation2 + $0x4] sm:$0xf] 0
        %vm352 = vcmask 1041408
        %vm353 = vsmask.f32 1280
        %vm354 = vmand %vm352, %vm353
        %v355 = vld [vmem:[#allocation2 + $0x8] sm:$0x3]
        %v356 = vsel %vm354, 0, %v355
        %357 = vst [vmem:[#allocation2 + $0x8] sm:$0x3] %v356
        %358 = vst [vmem:[#allocation3] sm:$0xf] 0
        %359 = vst [vmem:[#allocation3 + $0x4] sm:$0xf] 0
        %v360 = vld [vmem:[#allocation3 + $0x8] sm:$0x3]
        %v361 = vsel %vm354, 0, %v360
        %362 = vst [vmem:[#allocation3 + $0x8] sm:$0x3] %v361
        %v363 = vld [vmem:[%s338] sm:$0xf]
        %v364 = vld [vmem:[%s338 + $0x4] sm:$0xf]
        %vm367 = vcmask 1040384
        %vm368 = vcmask 1044484
        %vm369 = vmor %vm367, %vm368
        %v370 = vrot.slane %v363, 7
        %v371 = vrot.slane %v370, 4
        %v372 = vrot.slane %v364, 7
        %v373 = vsel %vm369, %v371, %v372
        %v374 = vrot.slane %v372, 4
        %378 = vst [vmem:[#allocation2] sm:$0xe] %v370
        %379 = vst [vmem:[#allocation2 + $0x4] sm:$0xf] %v373
        %vm380 = vsmask.f32 256
        %vm381 = vmand %vm367, %vm380
        %v382 = vld [vmem:[#allocation2 + $0x8] sm:$0x1]
        %v383 = vsel %vm381, %v374, %v382
        %384 = vst [vmem:[#allocation2 + $0x8] sm:$0x1] %v383
        %v385 = vld [vmem:[%s343] sm:$0xf]
        %v386 = vld [vmem:[%s343 + $0x4] sm:$0xf]
        %v389 = vrot.slane %v385, 7
        %v390 = vrot.slane %v389, 4
        %v391 = vrot.slane %v386, 7
        %v392 = vsel %vm369, %v390, %v391
        %v393 = vrot.slane %v391, 4
        %397 = vst [vmem:[#allocation3] sm:$0xe] %v389
        %398 = vst [vmem:[#allocation3 + $0x4] sm:$0xf] %v392
        %v399 = vld [vmem:[#allocation3 + $0x8] sm:$0x1]
        %v400 = vsel %vm381, %v393, %v399
        %401 = vst [vmem:[#allocation3 + $0x8] sm:$0x1] %v400
        %v402 = vld [vmem:[#allocation2] sm:$0xf]
        %v403 = vld [vmem:[#allocation2 + $0x4] sm:$0xf]
        %v404 = vld [vmem:[#allocation5] sm:$0xff]
        %v405 = vld [vmem:[#allocation5 + $0x8] sm:$0xff]
        %v406 = vld [vmem:[#allocation5 + $0x10] sm:$0xff]
        %v407 = vld [vmem:[#allocation5 + $0x18] sm:$0xff]
        %v408 = vld [vmem:[#allocation5 + $0x20] sm:$0xff]
        %v409 = vld [vmem:[#allocation5 + $0x28] sm:$0xff]
        %v410 = vld [vmem:[#allocation5 + $0x30] sm:$0xff]
        %v411 = vld [vmem:[#allocation5 + $0x38] sm:$0xff]
        %v412 = vld [vmem:[#allocation5 + $0x40] sm:$0xff]
        %v413 = vld [vmem:[#allocation5 + $0x48] sm:$0xff]
        %v414 = vld [vmem:[#allocation5 + $0x50] sm:$0xff]
        %v415 = vld [vmem:[#allocation5 + $0x58] sm:$0xff]
        %v416 = vld [vmem:[#allocation5 + $0x60] sm:$0xff]
        %v417 = vld [vmem:[#allocation5 + $0x68] sm:$0xff]
        %v418 = vld [vmem:[#allocation5 + $0x70] sm:$0xff]
        %v419 = vld [vmem:[#allocation5 + $0x78] sm:$0xff]
        %v420 = vld [vmem:[#allocation3] sm:$0xf]
        %v421 = vld [vmem:[#allocation3 + $0x4] sm:$0xf]
        %v422 = vld [vmem:[#allocation7] sm:$0xff]
        %v423 = vld [vmem:[#allocation7 + $0x8] sm:$0xff]
        %v424 = vld [vmem:[#allocation7 + $0x10] sm:$0xff]
        %v425 = vld [vmem:[#allocation7 + $0x18] sm:$0xff]
        %v426 = vld [vmem:[#allocation7 + $0x20] sm:$0xff]
        %v427 = vld [vmem:[#allocation7 + $0x28] sm:$0xff]
        %v428 = vld [vmem:[#allocation7 + $0x30] sm:$0xff]
        %v429 = vld [vmem:[#allocation7 + $0x38] sm:$0xff]
        %v430 = vld [vmem:[#allocation7 + $0x40] sm:$0xff]
        %v431 = vld [vmem:[#allocation7 + $0x48] sm:$0xff]
        %v432 = vld [vmem:[#allocation7 + $0x50] sm:$0xff]
        %v433 = vld [vmem:[#allocation7 + $0x58] sm:$0xff]
        %v434 = vld [vmem:[#allocation7 + $0x60] sm:$0xff]
        %v435 = vld [vmem:[#allocation7 + $0x68] sm:$0xff]
        %v436 = vld [vmem:[#allocation7 + $0x70] sm:$0xff]
        %v437 = vld [vmem:[#allocation7 + $0x78] sm:$0xff]
        %v440 = vunpack.c.l.b16 %v420
        %v441 = vunpack.c.l.b16 %v421
        %v442 = vpack.c.b16 %v441, %v440
        %v460 = vunpack.c.l.b16 %v422
        %v461 = vunpack.c.h.b16 %v422
        %v462 = vunpack.c.l.b16 %v423
        %v463 = vunpack.c.h.b16 %v423
        %v464 = vunpack.c.l.b16 %v424
        %v465 = vunpack.c.h.b16 %v424
        %v466 = vunpack.c.l.b16 %v425
        %v467 = vunpack.c.h.b16 %v425
        %v468 = vunpack.c.l.b16 %v426
        %v469 = vunpack.c.h.b16 %v426
        %v470 = vunpack.c.l.b16 %v427
        %v471 = vunpack.c.h.b16 %v427
        %v472 = vunpack.c.l.b16 %v428
        %v473 = vunpack.c.h.b16 %v428
        %v474 = vunpack.c.l.b16 %v429
        %v475 = vunpack.c.h.b16 %v429
        %v476 = vunpack.c.l.b16 %v430
        %v477 = vunpack.c.h.b16 %v430
        %v478 = vunpack.c.l.b16 %v431
        %v479 = vunpack.c.h.b16 %v431
        %v480 = vunpack.c.l.b16 %v432
        %v481 = vunpack.c.h.b16 %v432
        %v482 = vunpack.c.l.b16 %v433
        %v483 = vunpack.c.h.b16 %v433
        %v484 = vunpack.c.l.b16 %v434
        %v485 = vunpack.c.h.b16 %v434
        %v486 = vunpack.c.l.b16 %v435
        %v487 = vunpack.c.h.b16 %v435
        %v488 = vunpack.c.l.b16 %v436
        %v489 = vunpack.c.h.b16 %v436
        %v490 = vunpack.c.l.b16 %v437
        %v491 = vunpack.c.h.b16 %v437
        %v492 = vpack.c.b16 %v462, %v460
        %v493 = vpack.c.b16 %v463, %v461
        %v494 = vpack.c.b16 %v466, %v464
        %v495 = vpack.c.b16 %v467, %v465
        %v496 = vpack.c.b16 %v470, %v468
        %v497 = vpack.c.b16 %v471, %v469
        %v498 = vpack.c.b16 %v474, %v472
        %v499 = vpack.c.b16 %v475, %v473
        %v500 = vpack.c.b16 %v478, %v476
        %v501 = vpack.c.b16 %v479, %v477
        %v502 = vpack.c.b16 %v482, %v480
        %v503 = vpack.c.b16 %v483, %v481
        %v504 = vpack.c.b16 %v486, %v484
        %v505 = vpack.c.b16 %v487, %v485
        %v506 = vpack.c.b16 %v490, %v488
        %v507 = vpack.c.b16 %v491, %v489
        %524 = vmatpush.bf16.msra.mxu0 %v506
        %525 = vmatpush.bf16.msra.mxu0 %v504
        %526 = vmatpush.bf16.msra.mxu0 %v502
        %527 = vmatpush.bf16.msra.mxu0 %v500
        %528 = vmatpush.bf16.msra.mxu0 %v498
        %529 = vmatpush.bf16.msra.mxu0 %v496
        %530 = vmatpush.bf16.msra.mxu0 %v494
        %531 = vmatpush.bf16.msra.mxu0 %v492
        %532 = vmatmul.bf16.gmra.mxu0 %v442
        %v533 = vpop.f32.mrf.mxu0
        %v534 = vadd.f32 0.0, %v533
        %v535 = vpop.f32.mrf.mxu0
        %v536 = vadd.f32 0.0, %v535
        %537 = vdwg.mxu0
        %538 = vmatpush.bf16.msra.mxu0 %v507
        %539 = vmatpush.bf16.msra.mxu0 %v505
        %540 = vmatpush.bf16.msra.mxu0 %v503
        %541 = vmatpush.bf16.msra.mxu0 %v501
        %542 = vmatpush.bf16.msra.mxu0 %v499
        %543 = vmatpush.bf16.msra.mxu0 %v497
        %544 = vmatpush.bf16.msra.mxu0 %v495
        %545 = vmatpush.bf16.msra.mxu0 %v493
        %546 = vmatmul.bf16.gmra.mxu0 %v442
        %v547 = vpop.f32.mrf.mxu0
        %v548 = vadd.f32 0.0, %v547
        %v549 = vpop.f32.mrf.mxu0
        %v550 = vadd.f32 0.0, %v549
        %551 = vdwg.mxu0
        %v554 = vunpack.c.l.b16 %v402
        %v555 = vunpack.c.l.b16 %v403
        %v556 = vpack.c.b16 %v555, %v554
        %v574 = vunpack.c.l.b16 %v404
        %v575 = vunpack.c.h.b16 %v404
        %v576 = vunpack.c.l.b16 %v405
        %v577 = vunpack.c.h.b16 %v405
        %v578 = vunpack.c.l.b16 %v406
        %v579 = vunpack.c.h.b16 %v406
        %v580 = vunpack.c.l.b16 %v407
        %v581 = vunpack.c.h.b16 %v407
        %v582 = vunpack.c.l.b16 %v408
        %v583 = vunpack.c.h.b16 %v408
        %v584 = vunpack.c.l.b16 %v409
        %v585 = vunpack.c.h.b16 %v409
        %v586 = vunpack.c.l.b16 %v410
        %v587 = vunpack.c.h.b16 %v410
        %v588 = vunpack.c.l.b16 %v411
        %v589 = vunpack.c.h.b16 %v411
        %v590 = vunpack.c.l.b16 %v412
        %v591 = vunpack.c.h.b16 %v412
        %v592 = vunpack.c.l.b16 %v413
        %v593 = vunpack.c.h.b16 %v413
        %v594 = vunpack.c.l.b16 %v414
        %v595 = vunpack.c.h.b16 %v414
        %v596 = vunpack.c.l.b16 %v415
        %v597 = vunpack.c.h.b16 %v415
        %v598 = vunpack.c.l.b16 %v416
        %v599 = vunpack.c.h.b16 %v416
        %v600 = vunpack.c.l.b16 %v417
        %v601 = vunpack.c.h.b16 %v417
        %v602 = vunpack.c.l.b16 %v418
        %v603 = vunpack.c.h.b16 %v418
        %v604 = vunpack.c.l.b16 %v419
        %v605 = vunpack.c.h.b16 %v419
        %v606 = vpack.c.b16 %v576, %v574
        %v607 = vpack.c.b16 %v577, %v575
        %v608 = vpack.c.b16 %v580, %v578
        %v609 = vpack.c.b16 %v581, %v579
        %v610 = vpack.c.b16 %v584, %v582
        %v611 = vpack.c.b16 %v585, %v583
        %v612 = vpack.c.b16 %v588, %v586
        %v613 = vpack.c.b16 %v589, %v587
        %v614 = vpack.c.b16 %v592, %v590
        %v615 = vpack.c.b16 %v593, %v591
        %v616 = vpack.c.b16 %v596, %v594
        %v617 = vpack.c.b16 %v597, %v595
        %v618 = vpack.c.b16 %v600, %v598
        %v619 = vpack.c.b16 %v601, %v599
        %v620 = vpack.c.b16 %v604, %v602
        %v621 = vpack.c.b16 %v605, %v603
        %638 = vmatpush.bf16.msra.mxu0 %v620
        %639 = vmatpush.bf16.msra.mxu0 %v618
        %640 = vmatpush.bf16.msra.mxu0 %v616
        %641 = vmatpush.bf16.msra.mxu0 %v614
        %642 = vmatpush.bf16.msra.mxu0 %v612
        %643 = vmatpush.bf16.msra.mxu0 %v610
        %644 = vmatpush.bf16.msra.mxu0 %v608
        %645 = vmatpush.bf16.msra.mxu0 %v606
        %646 = vmatmul.bf16.gmra.mxu0 %v556
        %v647 = vpop.f32.mrf.mxu0
        %v648 = vadd.f32 %v534, %v647
        %v649 = vpop.f32.mrf.mxu0
        %v650 = vadd.f32 %v536, %v649
        %651 = vdwg.mxu0
        %652 = vmatpush.bf16.msra.mxu0 %v621
        %653 = vmatpush.bf16.msra.mxu0 %v619
        %654 = vmatpush.bf16.msra.mxu0 %v617
        %655 = vmatpush.bf16.msra.mxu0 %v615
        %656 = vmatpush.bf16.msra.mxu0 %v613
        %657 = vmatpush.bf16.msra.mxu0 %v611
        %658 = vmatpush.bf16.msra.mxu0 %v609
        %659 = vmatpush.bf16.msra.mxu0 %v607
        %660 = vmatmul.bf16.gmra.mxu0 %v556
        %v661 = vpop.f32.mrf.mxu0
        %v662 = vadd.f32 %v548, %v661
        %v663 = vpop.f32.mrf.mxu0
        %v664 = vadd.f32 %v550, %v663
        %665 = vdwg.mxu0
        %v666 = vld [vmem:[#allocation2] sm:$0xe]
        %v667 = vld [vmem:[#allocation2 + $0x4] sm:$0xf]
        %v668 = vld [vmem:[#allocation2 + $0x8] sm:$0x1]
        %s669 = scalar_lea.vmem [#allocation5], 128
        %v670 = vld [vmem:[%s669] sm:$0xff]
        %v671 = vld [vmem:[%s669 + $0x8] sm:$0xff]
        %v672 = vld [vmem:[%s669 + $0x10] sm:$0xff]
        %v673 = vld [vmem:[%s669 + $0x18] sm:$0xff]
        %v674 = vld [vmem:[%s669 + $0x20] sm:$0xff]
        %v675 = vld [vmem:[%s669 + $0x28] sm:$0xff]
        %v676 = vld [vmem:[%s669 + $0x30] sm:$0xff]
        %v677 = vld [vmem:[%s669 + $0x38] sm:$0xff]
        %v678 = vld [vmem:[%s669 + $0x40] sm:$0xff]
        %v679 = vld [vmem:[%s669 + $0x48] sm:$0xff]
        %v680 = vld [vmem:[%s669 + $0x50] sm:$0xff]
        %v681 = vld [vmem:[%s669 + $0x58] sm:$0xff]
        %v682 = vld [vmem:[%s669 + $0x60] sm:$0xff]
        %v683 = vld [vmem:[%s669 + $0x68] sm:$0xff]
        %v684 = vld [vmem:[%s669 + $0x70] sm:$0xff]
        %v685 = vld [vmem:[%s669 + $0x78] sm:$0xff]
        %v689 = vunpack.c.l.b16 %v666
        %v690 = vunpack.c.l.b16 %v667
        %v691 = vunpack.c.l.b16 %v668
        %v692 = vpack.c.b16 %v690, %v689
        %v693 = vpack.c.b16 %v691, %v691
        %vm694 = vcmask 1046528
        %v695 = vrot.slane %v692, 1
        %v696 = vrot.slane %v693, 1
        %v697 = vsel %vm694, %v695, %v696
        %v715 = vunpack.c.l.b16 %v670
        %v716 = vunpack.c.h.b16 %v670
        %v717 = vunpack.c.l.b16 %v671
        %v718 = vunpack.c.h.b16 %v671
        %v719 = vunpack.c.l.b16 %v672
        %v720 = vunpack.c.h.b16 %v672
        %v721 = vunpack.c.l.b16 %v673
        %v722 = vunpack.c.h.b16 %v673
        %v723 = vunpack.c.l.b16 %v674
        %v724 = vunpack.c.h.b16 %v674
        %v725 = vunpack.c.l.b16 %v675
        %v726 = vunpack.c.h.b16 %v675
        %v727 = vunpack.c.l.b16 %v676
        %v728 = vunpack.c.h.b16 %v676
        %v729 = vunpack.c.l.b16 %v677
        %v730 = vunpack.c.h.b16 %v677
        %v731 = vunpack.c.l.b16 %v678
        %v732 = vunpack.c.h.b16 %v678
        %v733 = vunpack.c.l.b16 %v679
        %v734 = vunpack.c.h.b16 %v679
        %v735 = vunpack.c.l.b16 %v680
        %v736 = vunpack.c.h.b16 %v680
        %v737 = vunpack.c.l.b16 %v681
        %v738 = vunpack.c.h.b16 %v681
        %v739 = vunpack.c.l.b16 %v682
        %v740 = vunpack.c.h.b16 %v682
        %v741 = vunpack.c.l.b16 %v683
        %v742 = vunpack.c.h.b16 %v683
        %v743 = vunpack.c.l.b16 %v684
        %v744 = vunpack.c.h.b16 %v684
        %v745 = vunpack.c.l.b16 %v685
        %v746 = vunpack.c.h.b16 %v685
        %v747 = vpack.c.b16 %v717, %v715
        %v748 = vpack.c.b16 %v718, %v716
        %v749 = vpack.c.b16 %v721, %v719
        %v750 = vpack.c.b16 %v722, %v720
        %v751 = vpack.c.b16 %v725, %v723
        %v752 = vpack.c.b16 %v726, %v724
        %v753 = vpack.c.b16 %v729, %v727
        %v754 = vpack.c.b16 %v730, %v728
        %v755 = vpack.c.b16 %v733, %v731
        %v756 = vpack.c.b16 %v734, %v732
        %v757 = vpack.c.b16 %v737, %v735
        %v758 = vpack.c.b16 %v738, %v736
        %v759 = vpack.c.b16 %v741, %v739
        %v760 = vpack.c.b16 %v742, %v740
        %v761 = vpack.c.b16 %v745, %v743
        %v762 = vpack.c.b16 %v746, %v744
        %779 = vmatpush.bf16.msra.mxu0 %v761
        %780 = vmatpush.bf16.msra.mxu0 %v759
        %781 = vmatpush.bf16.msra.mxu0 %v757
        %782 = vmatpush.bf16.msra.mxu0 %v755
        %783 = vmatpush.bf16.msra.mxu0 %v753
        %784 = vmatpush.bf16.msra.mxu0 %v751
        %785 = vmatpush.bf16.msra.mxu0 %v749
        %786 = vmatpush.bf16.msra.mxu0 %v747
        %787 = vmatmul.bf16.gmra.mxu0 %v697
        %v788 = vpop.f32.mrf.mxu0
        %v789 = vadd.f32 0.0, %v788
        %v790 = vpop.f32.mrf.mxu0
        %v791 = vadd.f32 0.0, %v790
        %792 = vdwg.mxu0
        %793 = vmatpush.bf16.msra.mxu0 %v762
        %794 = vmatpush.bf16.msra.mxu0 %v760
        %795 = vmatpush.bf16.msra.mxu0 %v758
        %796 = vmatpush.bf16.msra.mxu0 %v756
        %797 = vmatpush.bf16.msra.mxu0 %v754
        %798 = vmatpush.bf16.msra.mxu0 %v752
        %799 = vmatpush.bf16.msra.mxu0 %v750
        %800 = vmatpush.bf16.msra.mxu0 %v748
        %801 = vmatmul.bf16.gmra.mxu0 %v697
        %v802 = vpop.f32.mrf.mxu0
        %v803 = vadd.f32 0.0, %v802
        %v804 = vpop.f32.mrf.mxu0
        %v805 = vadd.f32 0.0, %v804
        %806 = vdwg.mxu0
        %v807 = vadd.f32 %v648, %v789
        %v808 = vadd.f32 %v662, %v803
        %v809 = vadd.f32 %v650, %v791
        %v810 = vadd.f32 %v664, %v805
        %v811 = vld [vmem:[#allocation3] sm:$0xe]
        %v812 = vld [vmem:[#allocation3 + $0x4] sm:$0xf]
        %v813 = vld [vmem:[#allocation3 + $0x8] sm:$0x1]
        %s814 = scalar_lea.vmem [#allocation7], 128
        %v815 = vld [vmem:[%s814] sm:$0xff]
        %v816 = vld [vmem:[%s814 + $0x8] sm:$0xff]
        %v817 = vld [vmem:[%s814 + $0x10] sm:$0xff]
        %v818 = vld [vmem:[%s814 + $0x18] sm:$0xff]
        %v819 = vld [vmem:[%s814 + $0x20] sm:$0xff]
        %v820 = vld [vmem:[%s814 + $0x28] sm:$0xff]
        %v821 = vld [vmem:[%s814 + $0x30] sm:$0xff]
        %v822 = vld [vmem:[%s814 + $0x38] sm:$0xff]
        %v823 = vld [vmem:[%s814 + $0x40] sm:$0xff]
        %v824 = vld [vmem:[%s814 + $0x48] sm:$0xff]
        %v825 = vld [vmem:[%s814 + $0x50] sm:$0xff]
        %v826 = vld [vmem:[%s814 + $0x58] sm:$0xff]
        %v827 = vld [vmem:[%s814 + $0x60] sm:$0xff]
        %v828 = vld [vmem:[%s814 + $0x68] sm:$0xff]
        %v829 = vld [vmem:[%s814 + $0x70] sm:$0xff]
        %v830 = vld [vmem:[%s814 + $0x78] sm:$0xff]
        %v834 = vunpack.c.l.b16 %v811
        %v835 = vunpack.c.l.b16 %v812
        %v836 = vunpack.c.l.b16 %v813
        %v837 = vpack.c.b16 %v835, %v834
        %v838 = vpack.c.b16 %v836, %v836
        %v839 = vrot.slane %v837, 1
        %v840 = vrot.slane %v838, 1
        %v841 = vsel %vm694, %v839, %v840
        %v859 = vunpack.c.l.b16 %v815
        %v860 = vunpack.c.h.b16 %v815
        %v861 = vunpack.c.l.b16 %v816
        %v862 = vunpack.c.h.b16 %v816
        %v863 = vunpack.c.l.b16 %v817
        %v864 = vunpack.c.h.b16 %v817
        %v865 = vunpack.c.l.b16 %v818
        %v866 = vunpack.c.h.b16 %v818
        %v867 = vunpack.c.l.b16 %v819
        %v868 = vunpack.c.h.b16 %v819
        %v869 = vunpack.c.l.b16 %v820
        %v870 = vunpack.c.h.b16 %v820
        %v871 = vunpack.c.l.b16 %v821
        %v872 = vunpack.c.h.b16 %v821
        %v873 = vunpack.c.l.b16 %v822
        %v874 = vunpack.c.h.b16 %v822
        %v875 = vunpack.c.l.b16 %v823
        %v876 = vunpack.c.h.b16 %v823
        %v877 = vunpack.c.l.b16 %v824
        %v878 = vunpack.c.h.b16 %v824
        %v879 = vunpack.c.l.b16 %v825
        %v880 = vunpack.c.h.b16 %v825
        %v881 = vunpack.c.l.b16 %v826
        %v882 = vunpack.c.h.b16 %v826
        %v883 = vunpack.c.l.b16 %v827
        %v884 = vunpack.c.h.b16 %v827
        %v885 = vunpack.c.l.b16 %v828
        %v886 = vunpack.c.h.b16 %v828
        %v887 = vunpack.c.l.b16 %v829
        %v888 = vunpack.c.h.b16 %v829
        %v889 = vunpack.c.l.b16 %v830
        %v890 = vunpack.c.h.b16 %v830
        %v891 = vpack.c.b16 %v861, %v859
        %v892 = vpack.c.b16 %v862, %v860
        %v893 = vpack.c.b16 %v865, %v863
        %v894 = vpack.c.b16 %v866, %v864
        %v895 = vpack.c.b16 %v869, %v867
        %v896 = vpack.c.b16 %v870, %v868
        %v897 = vpack.c.b16 %v873, %v871
        %v898 = vpack.c.b16 %v874, %v872
        %v899 = vpack.c.b16 %v877, %v875
        %v900 = vpack.c.b16 %v878, %v876
        %v901 = vpack.c.b16 %v881, %v879
        %v902 = vpack.c.b16 %v882, %v880
        %v903 = vpack.c.b16 %v885, %v883
        %v904 = vpack.c.b16 %v886, %v884
        %v905 = vpack.c.b16 %v889, %v887
        %v906 = vpack.c.b16 %v890, %v888
        %923 = vmatpush.bf16.msra.mxu0 %v905
        %924 = vmatpush.bf16.msra.mxu0 %v903
        %925 = vmatpush.bf16.msra.mxu0 %v901
        %926 = vmatpush.bf16.msra.mxu0 %v899
        %927 = vmatpush.bf16.msra.mxu0 %v897
        %928 = vmatpush.bf16.msra.mxu0 %v895
        %929 = vmatpush.bf16.msra.mxu0 %v893
        %930 = vmatpush.bf16.msra.mxu0 %v891
        %931 = vmatmul.bf16.gmra.mxu0 %v841
        %v932 = vpop.f32.mrf.mxu0
        %v933 = vadd.f32 0.0, %v932
        %v934 = vpop.f32.mrf.mxu0
        %v935 = vadd.f32 0.0, %v934
        %936 = vdwg.mxu0
        %937 = vmatpush.bf16.msra.mxu0 %v906
        %938 = vmatpush.bf16.msra.mxu0 %v904
        %939 = vmatpush.bf16.msra.mxu0 %v902
        %940 = vmatpush.bf16.msra.mxu0 %v900
        %941 = vmatpush.bf16.msra.mxu0 %v898
        %942 = vmatpush.bf16.msra.mxu0 %v896
        %943 = vmatpush.bf16.msra.mxu0 %v894
        %944 = vmatpush.bf16.msra.mxu0 %v892
        %945 = vmatmul.bf16.gmra.mxu0 %v841
        %v946 = vpop.f32.mrf.mxu0
        %v947 = vadd.f32 0.0, %v946
        %v948 = vpop.f32.mrf.mxu0
        %v949 = vadd.f32 0.0, %v948
        %950 = vdwg.mxu0
        %v951 = vadd.f32 %v807, %v933
        %v952 = vadd.f32 %v808, %v947
        %v953 = vadd.f32 %v809, %v935
        %v954 = vadd.f32 %v810, %v949
        %v955 = vld [vmem:[#allocation2] sm:$0xc]
        %v956 = vld [vmem:[#allocation2 + $0x8] sm:$0x3]
        %s957 = scalar_lea.vmem [#allocation5], 256
        %v958 = vld [vmem:[%s957] sm:$0xff]
        %v959 = vld [vmem:[%s957 + $0x8] sm:$0xff]
        %v960 = vld [vmem:[%s957 + $0x10] sm:$0xff]
        %v961 = vld [vmem:[%s957 + $0x18] sm:$0xff]
        %v962 = vld [vmem:[%s957 + $0x20] sm:$0xff]
        %v963 = vld [vmem:[%s957 + $0x28] sm:$0xff]
        %v964 = vld [vmem:[%s957 + $0x30] sm:$0xff]
        %v965 = vld [vmem:[%s957 + $0x38] sm:$0xff]
        %v966 = vld [vmem:[%s957 + $0x40] sm:$0xff]
        %v967 = vld [vmem:[%s957 + $0x48] sm:$0xff]
        %v968 = vld [vmem:[%s957 + $0x50] sm:$0xff]
        %v969 = vld [vmem:[%s957 + $0x58] sm:$0xff]
        %v970 = vld [vmem:[%s957 + $0x60] sm:$0xff]
        %v971 = vld [vmem:[%s957 + $0x68] sm:$0xff]
        %v972 = vld [vmem:[%s957 + $0x70] sm:$0xff]
        %v973 = vld [vmem:[%s957 + $0x78] sm:$0xff]
        %v976 = vunpack.c.l.b16 %v955
        %v977 = vunpack.c.l.b16 %v956
        %v978 = vpack.c.b16 %v690, %v976
        %v979 = vpack.c.b16 %v977, %v977
        %vm980 = vcmask 1045504
        %v981 = vrot.slane %v978, 2
        %v982 = vrot.slane %v979, 2
        %v983 = vsel %vm980, %v981, %v982
        %v1001 = vunpack.c.l.b16 %v958
        %v1002 = vunpack.c.h.b16 %v958
        %v1003 = vunpack.c.l.b16 %v959
        %v1004 = vunpack.c.h.b16 %v959
        %v1005 = vunpack.c.l.b16 %v960
        %v1006 = vunpack.c.h.b16 %v960
        %v1007 = vunpack.c.l.b16 %v961
        %v1008 = vunpack.c.h.b16 %v961
        %v1009 = vunpack.c.l.b16 %v962
        %v1010 = vunpack.c.h.b16 %v962
        %v1011 = vunpack.c.l.b16 %v963
        %v1012 = vunpack.c.h.b16 %v963
        %v1013 = vunpack.c.l.b16 %v964
        %v1014 = vunpack.c.h.b16 %v964
        %v1015 = vunpack.c.l.b16 %v965
        %v1016 = vunpack.c.h.b16 %v965
        %v1017 = vunpack.c.l.b16 %v966
        %v1018 = vunpack.c.h.b16 %v966
        %v1019 = vunpack.c.l.b16 %v967
        %v1020 = vunpack.c.h.b16 %v967
        %v1021 = vunpack.c.l.b16 %v968
        %v1022 = vunpack.c.h.b16 %v968
        %v1023 = vunpack.c.l.b16 %v969
        %v1024 = vunpack.c.h.b16 %v969
        %v1025 = vunpack.c.l.b16 %v970
        %v1026 = vunpack.c.h.b16 %v970
        %v1027 = vunpack.c.l.b16 %v971
        %v1028 = vunpack.c.h.b16 %v971
        %v1029 = vunpack.c.l.b16 %v972
        %v1030 = vunpack.c.h.b16 %v972
        %v1031 = vunpack.c.l.b16 %v973
        %v1032 = vunpack.c.h.b16 %v973
        %v1033 = vpack.c.b16 %v1003, %v1001
        %v1034 = vpack.c.b16 %v1004, %v1002
        %v1035 = vpack.c.b16 %v1007, %v1005
        %v1036 = vpack.c.b16 %v1008, %v1006
        %v1037 = vpack.c.b16 %v1011, %v1009
        %v1038 = vpack.c.b16 %v1012, %v1010
        %v1039 = vpack.c.b16 %v1015, %v1013
        %v1040 = vpack.c.b16 %v1016, %v1014
        %v1041 = vpack.c.b16 %v1019, %v1017
        %v1042 = vpack.c.b16 %v1020, %v1018
        %v1043 = vpack.c.b16 %v1023, %v1021
        %v1044 = vpack.c.b16 %v1024, %v1022
        %v1045 = vpack.c.b16 %v1027, %v1025
        %v1046 = vpack.c.b16 %v1028, %v1026
        %v1047 = vpack.c.b16 %v1031, %v1029
        %v1048 = vpack.c.b16 %v1032, %v1030
        %1065 = vmatpush.bf16.msra.mxu0 %v1047
        %1066 = vmatpush.bf16.msra.mxu0 %v1045
        %1067 = vmatpush.bf16.msra.mxu0 %v1043
        %1068 = vmatpush.bf16.msra.mxu0 %v1041
        %1069 = vmatpush.bf16.msra.mxu0 %v1039
        %1070 = vmatpush.bf16.msra.mxu0 %v1037
        %1071 = vmatpush.bf16.msra.mxu0 %v1035
        %1072 = vmatpush.bf16.msra.mxu0 %v1033
        %1073 = vmatmul.bf16.gmra.mxu0 %v983
        %v1074 = vpop.f32.mrf.mxu0
        %v1075 = vadd.f32 0.0, %v1074
        %v1076 = vpop.f32.mrf.mxu0
        %v1077 = vadd.f32 0.0, %v1076
        %1078 = vdwg.mxu0
        %1079 = vmatpush.bf16.msra.mxu0 %v1048
        %1080 = vmatpush.bf16.msra.mxu0 %v1046
        %1081 = vmatpush.bf16.msra.mxu0 %v1044
        %1082 = vmatpush.bf16.msra.mxu0 %v1042
        %1083 = vmatpush.bf16.msra.mxu0 %v1040
        %1084 = vmatpush.bf16.msra.mxu0 %v1038
        %1085 = vmatpush.bf16.msra.mxu0 %v1036
        %1086 = vmatpush.bf16.msra.mxu0 %v1034
        %1087 = vmatmul.bf16.gmra.mxu0 %v983
        %v1088 = vpop.f32.mrf.mxu0
        %v1089 = vadd.f32 0.0, %v1088
        %v1090 = vpop.f32.mrf.mxu0
        %v1091 = vadd.f32 0.0, %v1090
        %1092 = vdwg.mxu0
        %v1093 = vadd.f32 %v951, %v1075
        %v1094 = vadd.f32 %v952, %v1089
        %v1095 = vadd.f32 %v953, %v1077
        %v1096 = vadd.f32 %v954, %v1091
        %v1097 = vld [vmem:[#allocation3] sm:$0xc]
        %v1098 = vld [vmem:[#allocation3 + $0x8] sm:$0x3]
        %s1099 = scalar_lea.vmem [#allocation7], 256
        %v1100 = vld [vmem:[%s1099] sm:$0xff]
        %v1101 = vld [vmem:[%s1099 + $0x8] sm:$0xff]
        %v1102 = vld [vmem:[%s1099 + $0x10] sm:$0xff]
        %v1103 = vld [vmem:[%s1099 + $0x18] sm:$0xff]
        %v1104 = vld [vmem:[%s1099 + $0x20] sm:$0xff]
        %v1105 = vld [vmem:[%s1099 + $0x28] sm:$0xff]
        %v1106 = vld [vmem:[%s1099 + $0x30] sm:$0xff]
        %v1107 = vld [vmem:[%s1099 + $0x38] sm:$0xff]
        %v1108 = vld [vmem:[%s1099 + $0x40] sm:$0xff]
        %v1109 = vld [vmem:[%s1099 + $0x48] sm:$0xff]
        %v1110 = vld [vmem:[%s1099 + $0x50] sm:$0xff]
        %v1111 = vld [vmem:[%s1099 + $0x58] sm:$0xff]
        %v1112 = vld [vmem:[%s1099 + $0x60] sm:$0xff]
        %v1113 = vld [vmem:[%s1099 + $0x68] sm:$0xff]
        %v1114 = vld [vmem:[%s1099 + $0x70] sm:$0xff]
        %v1115 = vld [vmem:[%s1099 + $0x78] sm:$0xff]
        %v1118 = vunpack.c.l.b16 %v1097
        %v1119 = vunpack.c.l.b16 %v1098
        %v1120 = vpack.c.b16 %v835, %v1118
        %v1121 = vpack.c.b16 %v1119, %v1119
        %v1122 = vrot.slane %v1120, 2
        %v1123 = vrot.slane %v1121, 2
        %v1124 = vsel %vm980, %v1122, %v1123
        %v1142 = vunpack.c.l.b16 %v1100
        %v1143 = vunpack.c.h.b16 %v1100
        %v1144 = vunpack.c.l.b16 %v1101
        %v1145 = vunpack.c.h.b16 %v1101
        %v1146 = vunpack.c.l.b16 %v1102
        %v1147 = vunpack.c.h.b16 %v1102
        %v1148 = vunpack.c.l.b16 %v1103
        %v1149 = vunpack.c.h.b16 %v1103
        %v1150 = vunpack.c.l.b16 %v1104
        %v1151 = vunpack.c.h.b16 %v1104
        %v1152 = vunpack.c.l.b16 %v1105
        %v1153 = vunpack.c.h.b16 %v1105
        %v1154 = vunpack.c.l.b16 %v1106
        %v1155 = vunpack.c.h.b16 %v1106
        %v1156 = vunpack.c.l.b16 %v1107
        %v1157 = vunpack.c.h.b16 %v1107
        %v1158 = vunpack.c.l.b16 %v1108
        %v1159 = vunpack.c.h.b16 %v1108
        %v1160 = vunpack.c.l.b16 %v1109
        %v1161 = vunpack.c.h.b16 %v1109
        %v1162 = vunpack.c.l.b16 %v1110
        %v1163 = vunpack.c.h.b16 %v1110
        %v1164 = vunpack.c.l.b16 %v1111
        %v1165 = vunpack.c.h.b16 %v1111
        %v1166 = vunpack.c.l.b16 %v1112
        %v1167 = vunpack.c.h.b16 %v1112
        %v1168 = vunpack.c.l.b16 %v1113
        %v1169 = vunpack.c.h.b16 %v1113
        %v1170 = vunpack.c.l.b16 %v1114
        %v1171 = vunpack.c.h.b16 %v1114
        %v1172 = vunpack.c.l.b16 %v1115
        %v1173 = vunpack.c.h.b16 %v1115
        %v1174 = vpack.c.b16 %v1144, %v1142
        %v1175 = vpack.c.b16 %v1145, %v1143
        %v1176 = vpack.c.b16 %v1148, %v1146
        %v1177 = vpack.c.b16 %v1149, %v1147
        %v1178 = vpack.c.b16 %v1152, %v1150
        %v1179 = vpack.c.b16 %v1153, %v1151
        %v1180 = vpack.c.b16 %v1156, %v1154
        %v1181 = vpack.c.b16 %v1157, %v1155
        %v1182 = vpack.c.b16 %v1160, %v1158
        %v1183 = vpack.c.b16 %v1161, %v1159
        %v1184 = vpack.c.b16 %v1164, %v1162
        %v1185 = vpack.c.b16 %v1165, %v1163
        %v1186 = vpack.c.b16 %v1168, %v1166
        %v1187 = vpack.c.b16 %v1169, %v1167
        %v1188 = vpack.c.b16 %v1172, %v1170
        %v1189 = vpack.c.b16 %v1173, %v1171
        %1206 = vmatpush.bf16.msra.mxu0 %v1188
        %1207 = vmatpush.bf16.msra.mxu0 %v1186
        %1208 = vmatpush.bf16.msra.mxu0 %v1184
        %1209 = vmatpush.bf16.msra.mxu0 %v1182
        %1210 = vmatpush.bf16.msra.mxu0 %v1180
        %1211 = vmatpush.bf16.msra.mxu0 %v1178
        %1212 = vmatpush.bf16.msra.mxu0 %v1176
        %1213 = vmatpush.bf16.msra.mxu0 %v1174
        %1214 = vmatmul.bf16.gmra.mxu0 %v1124
        %v1215 = vpop.f32.mrf.mxu0
        %v1216 = vadd.f32 0.0, %v1215
        %v1217 = vpop.f32.mrf.mxu0
        %v1218 = vadd.f32 0.0, %v1217
        %1219 = vdwg.mxu0
        %1220 = vmatpush.bf16.msra.mxu0 %v1189
        %1221 = vmatpush.bf16.msra.mxu0 %v1187
        %1222 = vmatpush.bf16.msra.mxu0 %v1185
        %1223 = vmatpush.bf16.msra.mxu0 %v1183
        %1224 = vmatpush.bf16.msra.mxu0 %v1181
        %1225 = vmatpush.bf16.msra.mxu0 %v1179
        %1226 = vmatpush.bf16.msra.mxu0 %v1177
        %1227 = vmatpush.bf16.msra.mxu0 %v1175
        %1228 = vmatmul.bf16.gmra.mxu0 %v1124
        %v1229 = vpop.f32.mrf.mxu0
        %v1230 = vadd.f32 0.0, %v1229
        %v1231 = vpop.f32.mrf.mxu0
        %v1232 = vadd.f32 0.0, %v1231
        %1233 = vdwg.mxu0
        %v1234 = vadd.f32 %v1093, %v1216
        %v1235 = vadd.f32 %v1094, %v1230
        %v1236 = vadd.f32 %v1095, %v1218
        %v1237 = vadd.f32 %v1096, %v1232
        %v1238 = vld [vmem:[%s4] sm:$0x3]
        %v1240 = vperm.slane %v1238, 0
        %v1241 = vperm.slane %v1238, 1
        %v1244 = vadd.f32 %v1234, %v1240
        %v1245 = vadd.f32 %v1235, %v1241
        %v1246 = vadd.f32 %v1236, %v1240
        %v1247 = vadd.f32 %v1237, %v1241
        %v1248 = vsub.f32 0.0, %v1245
        %v1249 = vsub.f32 0.0, %v1247
        %v1250 = vmul.f32 %v1248, 1.442695
        %v1251 = vpow.pop %v1250
        %v1252 = vmul.f32 %v1249, 1.442695
        %v1253 = vpow.pop %v1252
        %v1254 = vadd.f32 %v1251, 1.0
        %v1255 = vadd.f32 %v1253, 1.0
        %v1256 = vrcp.pop %v1254
        %v1257 = vrcp.pop %v1255
        %v1258 = vmul.f32 %v1244, %v1256
        %v1259 = vmul.f32 %v1246, %v1257
        %1260 = vst [vmem:[#allocation4] sm:$0xf] 0
        %1261 = vst [vmem:[#allocation4 + $0x4] sm:$0xf] 0
        %v1262 = vld [vmem:[#allocation4 + $0x8] sm:$0x1]
        %v1263 = vsel %vm381, 0, %v1262
        %1264 = vst [vmem:[#allocation4 + $0x8] sm:$0x1] %v1263
        %v1265 = vpack.c.bf16 %v1258, %v1258
        %v1266 = vpack.c.bf16 %v1259, %v1259
        %vm1267 = vsmask.f32 4368
        %vm1268 = vmor %vm380, %vm1267
        %v1270 = vshrl.u32 %v1265, 16
        %v1272 = vrot.slane %v1270, 7
        %v1273 = vshll.u32 %v1265, 16
        %v1275 = vor.u32 %v1272, %v1273
        %v1276 = vrot.slane %v1272, 4
        %v1278 = vshrl.u32 %v1266, 16
        %v1280 = vrot.slane %v1278, 7
        %v1281 = vshll.u32 %v1266, 16
        %v1283 = vor.u32 %v1280, %v1281
        %v1284 = vsel %vm1268, %v1276, %v1283
        %vm1287 = vcmask 1043456
        %vm1288 = vsmask.f32 7938
        %vm1289 = vmand %vm1287, %vm1288
        %v1290 = vld [vmem:[#allocation4] sm:$0xf]
        %v1291 = vsel %vm1289, %v1275, %v1290
        %1292 = vst [vmem:[#allocation4] sm:$0xf] %v1291
        %1293 = vst [vmem:[#allocation4 + $0x4] sm:$0xf] %v1284
        %v1294 = vld [vmem:[#allocation4] sm:$0xf]
        %v1295 = vld [vmem:[#allocation4 + $0x4] sm:$0xf]
        %v1296 = vld [vmem:[#allocation9] sm:$0xff]
        %v1297 = vld [vmem:[#allocation9 + $0x8] sm:$0xff]
        %v1298 = vld [vmem:[#allocation9 + $0x10] sm:$0xff]
        %v1299 = vld [vmem:[#allocation9 + $0x18] sm:$0xff]
        %v1300 = vld [vmem:[#allocation9 + $0x20] sm:$0xff]
        %v1301 = vld [vmem:[#allocation9 + $0x28] sm:$0xff]
        %v1302 = vld [vmem:[#allocation9 + $0x30] sm:$0xff]
        %v1303 = vld [vmem:[#allocation9 + $0x38] sm:$0xff]
        %v1304 = vld [vmem:[#allocation9 + $0x40] sm:$0xff]
        %v1305 = vld [vmem:[#allocation9 + $0x48] sm:$0xff]
        %v1306 = vld [vmem:[#allocation9 + $0x50] sm:$0xff]
        %v1307 = vld [vmem:[#allocation9 + $0x58] sm:$0xff]
        %v1308 = vld [vmem:[#allocation9 + $0x60] sm:$0xff]
        %v1309 = vld [vmem:[#allocation9 + $0x68] sm:$0xff]
        %v1310 = vld [vmem:[#allocation9 + $0x70] sm:$0xff]
        %v1311 = vld [vmem:[#allocation9 + $0x78] sm:$0xff]
        %s1312 = scalar_lea.vmem [#allocation9], 128
        %v1313 = vld [vmem:[%s1312] sm:$0xff]
        %v1314 = vld [vmem:[%s1312 + $0x8] sm:$0xff]
        %v1315 = vld [vmem:[%s1312 + $0x10] sm:$0xff]
        %v1316 = vld [vmem:[%s1312 + $0x18] sm:$0xff]
        %v1317 = vld [vmem:[%s1312 + $0x20] sm:$0xff]
        %v1318 = vld [vmem:[%s1312 + $0x28] sm:$0xff]
        %v1319 = vld [vmem:[%s1312 + $0x30] sm:$0xff]
        %v1320 = vld [vmem:[%s1312 + $0x38] sm:$0xff]
        %v1321 = vld [vmem:[%s1312 + $0x40] sm:$0xff]
        %v1322 = vld [vmem:[%s1312 + $0x48] sm:$0xff]
        %v1323 = vld [vmem:[%s1312 + $0x50] sm:$0xff]
        %v1324 = vld [vmem:[%s1312 + $0x58] sm:$0xff]
        %v1325 = vld [vmem:[%s1312 + $0x60] sm:$0xff]
        %v1326 = vld [vmem:[%s1312 + $0x68] sm:$0xff]
        %v1327 = vld [vmem:[%s1312 + $0x70] sm:$0xff]
        %v1328 = vld [vmem:[%s1312 + $0x78] sm:$0xff]
        %v1331 = vunpack.c.l.b16 %v1294
        %v1332 = vunpack.c.l.b16 %v1295
        %v1333 = vpack.c.b16 %v1332, %v1331
        %v1335 = vshrl.u32 %v1333, 16
        %v1337 = vshll.u32 %v1333, 16
        %v1339 = vrot.slane %v1337, 1
        %v1340 = vor.u32 %v1335, %v1339
        %v1358 = vunpack.c.l.b16 %v1313
        %v1359 = vunpack.c.h.b16 %v1313
        %v1360 = vunpack.c.l.b16 %v1314
        %v1361 = vunpack.c.h.b16 %v1314
        %v1362 = vunpack.c.l.b16 %v1315
        %v1363 = vunpack.c.h.b16 %v1315
        %v1364 = vunpack.c.l.b16 %v1316
        %v1365 = vunpack.c.h.b16 %v1316
        %v1366 = vunpack.c.l.b16 %v1317
        %v1367 = vunpack.c.h.b16 %v1317
        %v1368 = vunpack.c.l.b16 %v1318
        %v1369 = vunpack.c.h.b16 %v1318
        %v1370 = vunpack.c.l.b16 %v1319
        %v1371 = vunpack.c.h.b16 %v1319
        %v1372 = vunpack.c.l.b16 %v1320
        %v1373 = vunpack.c.h.b16 %v1320
        %v1374 = vunpack.c.l.b16 %v1321
        %v1375 = vunpack.c.h.b16 %v1321
        %v1376 = vunpack.c.l.b16 %v1322
        %v1377 = vunpack.c.h.b16 %v1322
        %v1378 = vunpack.c.l.b16 %v1323
        %v1379 = vunpack.c.h.b16 %v1323
        %v1380 = vunpack.c.l.b16 %v1324
        %v1381 = vunpack.c.h.b16 %v1324
        %v1382 = vunpack.c.l.b16 %v1325
        %v1383 = vunpack.c.h.b16 %v1325
        %v1384 = vunpack.c.l.b16 %v1326
        %v1385 = vunpack.c.h.b16 %v1326
        %v1386 = vunpack.c.l.b16 %v1327
        %v1387 = vunpack.c.h.b16 %v1327
        %v1388 = vunpack.c.l.b16 %v1328
        %v1389 = vunpack.c.h.b16 %v1328
        %v1390 = vpack.c.b16 %v1360, %v1358
        %v1391 = vpack.c.b16 %v1361, %v1359
        %v1392 = vpack.c.b16 %v1364, %v1362
        %v1393 = vpack.c.b16 %v1365, %v1363
        %v1394 = vpack.c.b16 %v1368, %v1366
        %v1395 = vpack.c.b16 %v1369, %v1367
        %v1396 = vpack.c.b16 %v1372, %v1370
        %v1397 = vpack.c.b16 %v1373, %v1371
        %v1398 = vpack.c.b16 %v1376, %v1374
        %v1399 = vpack.c.b16 %v1377, %v1375
        %v1400 = vpack.c.b16 %v1380, %v1378
        %v1401 = vpack.c.b16 %v1381, %v1379
        %v1402 = vpack.c.b16 %v1384, %v1382
        %v1403 = vpack.c.b16 %v1385, %v1383
        %v1404 = vpack.c.b16 %v1388, %v1386
        %v1405 = vpack.c.b16 %v1389, %v1387
        %1422 = vmatpush.bf16.msra.mxu0 %v1404
        %1423 = vmatpush.bf16.msra.mxu0 %v1402
        %1424 = vmatpush.bf16.msra.mxu0 %v1400
        %1425 = vmatpush.bf16.msra.mxu0 %v1398
        %1426 = vmatpush.bf16.msra.mxu0 %v1396
        %1427 = vmatpush.bf16.msra.mxu0 %v1394
        %1428 = vmatpush.bf16.msra.mxu0 %v1392
        %1429 = vmatpush.bf16.msra.mxu0 %v1390
        %1430 = vmatmul.bf16.gmra.mxu0 %v1340
        %v1431 = vpop.f32.mrf.mxu0
        %v1432 = vadd.f32 0.0, %v1431
        %v1433 = vpop.f32.mrf.mxu0
        %v1434 = vadd.f32 0.0, %v1433
        %1435 = vdwg.mxu0
        %1436 = vmatpush.bf16.msra.mxu0 %v1405
        %1437 = vmatpush.bf16.msra.mxu0 %v1403
        %1438 = vmatpush.bf16.msra.mxu0 %v1401
        %1439 = vmatpush.bf16.msra.mxu0 %v1399
        %1440 = vmatpush.bf16.msra.mxu0 %v1397
        %1441 = vmatpush.bf16.msra.mxu0 %v1395
        %1442 = vmatpush.bf16.msra.mxu0 %v1393
        %1443 = vmatpush.bf16.msra.mxu0 %v1391
        %1444 = vmatmul.bf16.gmra.mxu0 %v1340
        %v1445 = vpop.f32.mrf.mxu0
        %v1446 = vadd.f32 0.0, %v1445
        %v1447 = vpop.f32.mrf.mxu0
        %v1448 = vadd.f32 0.0, %v1447
        %1449 = vdwg.mxu0
        %v1467 = vunpack.c.l.b16 %v1296
        %v1468 = vunpack.c.h.b16 %v1296
        %v1469 = vunpack.c.l.b16 %v1297
        %v1470 = vunpack.c.h.b16 %v1297
        %v1471 = vunpack.c.l.b16 %v1298
        %v1472 = vunpack.c.h.b16 %v1298
        %v1473 = vunpack.c.l.b16 %v1299
        %v1474 = vunpack.c.h.b16 %v1299
        %v1475 = vunpack.c.l.b16 %v1300
        %v1476 = vunpack.c.h.b16 %v1300
        %v1477 = vunpack.c.l.b16 %v1301
        %v1478 = vunpack.c.h.b16 %v1301
        %v1479 = vunpack.c.l.b16 %v1302
        %v1480 = vunpack.c.h.b16 %v1302
        %v1481 = vunpack.c.l.b16 %v1303
        %v1482 = vunpack.c.h.b16 %v1303
        %v1483 = vunpack.c.l.b16 %v1304
        %v1484 = vunpack.c.h.b16 %v1304
        %v1485 = vunpack.c.l.b16 %v1305
        %v1486 = vunpack.c.h.b16 %v1305
        %v1487 = vunpack.c.l.b16 %v1306
        %v1488 = vunpack.c.h.b16 %v1306
        %v1489 = vunpack.c.l.b16 %v1307
        %v1490 = vunpack.c.h.b16 %v1307
        %v1491 = vunpack.c.l.b16 %v1308
        %v1492 = vunpack.c.h.b16 %v1308
        %v1493 = vunpack.c.l.b16 %v1309
        %v1494 = vunpack.c.h.b16 %v1309
        %v1495 = vunpack.c.l.b16 %v1310
        %v1496 = vunpack.c.h.b16 %v1310
        %v1497 = vunpack.c.l.b16 %v1311
        %v1498 = vunpack.c.h.b16 %v1311
        %v1499 = vpack.c.b16 %v1469, %v1467
        %v1500 = vpack.c.b16 %v1470, %v1468
        %v1501 = vpack.c.b16 %v1473, %v1471
        %v1502 = vpack.c.b16 %v1474, %v1472
        %v1503 = vpack.c.b16 %v1477, %v1475
        %v1504 = vpack.c.b16 %v1478, %v1476
        %v1505 = vpack.c.b16 %v1481, %v1479
        %v1506 = vpack.c.b16 %v1482, %v1480
        %v1507 = vpack.c.b16 %v1485, %v1483
        %v1508 = vpack.c.b16 %v1486, %v1484
        %v1509 = vpack.c.b16 %v1489, %v1487
        %v1510 = vpack.c.b16 %v1490, %v1488
        %v1511 = vpack.c.b16 %v1493, %v1491
        %v1512 = vpack.c.b16 %v1494, %v1492
        %v1513 = vpack.c.b16 %v1497, %v1495
        %v1514 = vpack.c.b16 %v1498, %v1496
        %1531 = vmatpush.bf16.msra.mxu0 %v1513
        %1532 = vmatpush.bf16.msra.mxu0 %v1511
        %1533 = vmatpush.bf16.msra.mxu0 %v1509
        %1534 = vmatpush.bf16.msra.mxu0 %v1507
        %1535 = vmatpush.bf16.msra.mxu0 %v1505
        %1536 = vmatpush.bf16.msra.mxu0 %v1503
        %1537 = vmatpush.bf16.msra.mxu0 %v1501
        %1538 = vmatpush.bf16.msra.mxu0 %v1499
        %1539 = vmatmul.bf16.gmra.mxu0 %v1333
        %v1540 = vpop.f32.mrf.mxu0
        %v1541 = vadd.f32 %v1432, %v1540
        %v1542 = vpop.f32.mrf.mxu0
        %v1543 = vadd.f32 %v1434, %v1542
        %1544 = vdwg.mxu0
        %1545 = vmatpush.bf16.msra.mxu0 %v1514
        %1546 = vmatpush.bf16.msra.mxu0 %v1512
        %1547 = vmatpush.bf16.msra.mxu0 %v1510
        %1548 = vmatpush.bf16.msra.mxu0 %v1508
        %1549 = vmatpush.bf16.msra.mxu0 %v1506
        %1550 = vmatpush.bf16.msra.mxu0 %v1504
        %1551 = vmatpush.bf16.msra.mxu0 %v1502
        %1552 = vmatpush.bf16.msra.mxu0 %v1500
        %1553 = vmatmul.bf16.gmra.mxu0 %v1333
        %v1554 = vpop.f32.mrf.mxu0
        %v1555 = vadd.f32 %v1446, %v1554
        %v1556 = vpop.f32.mrf.mxu0
        %v1557 = vadd.f32 %v1448, %v1556
        %1558 = vdwg.mxu0
        %v1559 = vld [vmem:[#allocation4] sm:$0xe]
        %v1560 = vld [vmem:[#allocation4 + $0x4] sm:$0xf]
        %v1561 = vld [vmem:[#allocation4 + $0x8] sm:$0x1]
        %s1562 = scalar_lea.vmem [#allocation9], 256
        %v1563 = vld [vmem:[%s1562] sm:$0xff]
        %v1564 = vld [vmem:[%s1562 + $0x8] sm:$0xff]
        %v1565 = vld [vmem:[%s1562 + $0x10] sm:$0xff]
        %v1566 = vld [vmem:[%s1562 + $0x18] sm:$0xff]
        %v1567 = vld [vmem:[%s1562 + $0x20] sm:$0xff]
        %v1568 = vld [vmem:[%s1562 + $0x28] sm:$0xff]
        %v1569 = vld [vmem:[%s1562 + $0x30] sm:$0xff]
        %v1570 = vld [vmem:[%s1562 + $0x38] sm:$0xff]
        %v1571 = vld [vmem:[%s1562 + $0x40] sm:$0xff]
        %v1572 = vld [vmem:[%s1562 + $0x48] sm:$0xff]
        %v1573 = vld [vmem:[%s1562 + $0x50] sm:$0xff]
        %v1574 = vld [vmem:[%s1562 + $0x58] sm:$0xff]
        %v1575 = vld [vmem:[%s1562 + $0x60] sm:$0xff]
        %v1576 = vld [vmem:[%s1562 + $0x68] sm:$0xff]
        %v1577 = vld [vmem:[%s1562 + $0x70] sm:$0xff]
        %v1578 = vld [vmem:[%s1562 + $0x78] sm:$0xff]
        %v1582 = vunpack.c.l.b16 %v1559
        %v1583 = vunpack.c.l.b16 %v1560
        %v1584 = vunpack.c.l.b16 %v1561
        %v1585 = vpack.c.b16 %v1583, %v1582
        %v1586 = vpack.c.b16 %v1584, %v1584
        %v1587 = vrot.slane %v1585, 1
        %v1588 = vrot.slane %v1586, 1
        %v1589 = vsel %vm694, %v1587, %v1588
        %v1607 = vunpack.c.l.b16 %v1563
        %v1608 = vunpack.c.h.b16 %v1563
        %v1609 = vunpack.c.l.b16 %v1564
        %v1610 = vunpack.c.h.b16 %v1564
        %v1611 = vunpack.c.l.b16 %v1565
        %v1612 = vunpack.c.h.b16 %v1565
        %v1613 = vunpack.c.l.b16 %v1566
        %v1614 = vunpack.c.h.b16 %v1566
        %v1615 = vunpack.c.l.b16 %v1567
        %v1616 = vunpack.c.h.b16 %v1567
        %v1617 = vunpack.c.l.b16 %v1568
        %v1618 = vunpack.c.h.b16 %v1568
        %v1619 = vunpack.c.l.b16 %v1569
        %v1620 = vunpack.c.h.b16 %v1569
        %v1621 = vunpack.c.l.b16 %v1570
        %v1622 = vunpack.c.h.b16 %v1570
        %v1623 = vunpack.c.l.b16 %v1571
        %v1624 = vunpack.c.h.b16 %v1571
        %v1625 = vunpack.c.l.b16 %v1572
        %v1626 = vunpack.c.h.b16 %v1572
        %v1627 = vunpack.c.l.b16 %v1573
        %v1628 = vunpack.c.h.b16 %v1573
        %v1629 = vunpack.c.l.b16 %v1574
        %v1630 = vunpack.c.h.b16 %v1574
        %v1631 = vunpack.c.l.b16 %v1575
        %v1632 = vunpack.c.h.b16 %v1575
        %v1633 = vunpack.c.l.b16 %v1576
        %v1634 = vunpack.c.h.b16 %v1576
        %v1635 = vunpack.c.l.b16 %v1577
        %v1636 = vunpack.c.h.b16 %v1577
        %v1637 = vunpack.c.l.b16 %v1578
        %v1638 = vunpack.c.h.b16 %v1578
        %v1639 = vpack.c.b16 %v1609, %v1607
        %v1640 = vpack.c.b16 %v1610, %v1608
        %v1641 = vpack.c.b16 %v1613, %v1611
        %v1642 = vpack.c.b16 %v1614, %v1612
        %v1643 = vpack.c.b16 %v1617, %v1615
        %v1644 = vpack.c.b16 %v1618, %v1616
        %v1645 = vpack.c.b16 %v1621, %v1619
        %v1646 = vpack.c.b16 %v1622, %v1620
        %v1647 = vpack.c.b16 %v1625, %v1623
        %v1648 = vpack.c.b16 %v1626, %v1624
        %v1649 = vpack.c.b16 %v1629, %v1627
        %v1650 = vpack.c.b16 %v1630, %v1628
        %v1651 = vpack.c.b16 %v1633, %v1631
        %v1652 = vpack.c.b16 %v1634, %v1632
        %v1653 = vpack.c.b16 %v1637, %v1635
        %v1654 = vpack.c.b16 %v1638, %v1636
        %1671 = vmatpush.bf16.msra.mxu0 %v1653
        %1672 = vmatpush.bf16.msra.mxu0 %v1651
        %1673 = vmatpush.bf16.msra.mxu0 %v1649
        %1674 = vmatpush.bf16.msra.mxu0 %v1647
        %1675 = vmatpush.bf16.msra.mxu0 %v1645
        %1676 = vmatpush.bf16.msra.mxu0 %v1643
        %1677 = vmatpush.bf16.msra.mxu0 %v1641
        %1678 = vmatpush.bf16.msra.mxu0 %v1639
        %1679 = vmatmul.bf16.gmra.mxu0 %v1589
        %v1680 = vpop.f32.mrf.mxu0
        %v1681 = vadd.f32 0.0, %v1680
        %v1682 = vpop.f32.mrf.mxu0
        %v1683 = vadd.f32 0.0, %v1682
        %1684 = vdwg.mxu0
        %1685 = vmatpush.bf16.msra.mxu0 %v1654
        %1686 = vmatpush.bf16.msra.mxu0 %v1652
        %1687 = vmatpush.bf16.msra.mxu0 %v1650
        %1688 = vmatpush.bf16.msra.mxu0 %v1648
        %1689 = vmatpush.bf16.msra.mxu0 %v1646
        %1690 = vmatpush.bf16.msra.mxu0 %v1644
        %1691 = vmatpush.bf16.msra.mxu0 %v1642
        %1692 = vmatpush.bf16.msra.mxu0 %v1640
        %1693 = vmatmul.bf16.gmra.mxu0 %v1589
        %v1694 = vpop.f32.mrf.mxu0
        %v1695 = vadd.f32 0.0, %v1694
        %v1696 = vpop.f32.mrf.mxu0
        %v1697 = vadd.f32 0.0, %v1696
        %1698 = vdwg.mxu0
        %v1699 = vadd.f32 %v1541, %v1681
        %v1700 = vadd.f32 %v1555, %v1695
        %v1701 = vadd.f32 %v1543, %v1683
        %v1702 = vadd.f32 %v1557, %v1697
        %v1703 = vld [vmem:[%s6] sm:$0x3]
        %v1705 = vperm.slane %v1703, 0
        %v1706 = vperm.slane %v1703, 1
        %v1709 = vadd.f32 %v1699, %v1705
        %v1710 = vadd.f32 %v1700, %v1706
        %v1711 = vadd.f32 %v1701, %v1705
        %v1712 = vadd.f32 %v1702, %v1706
        %v1713 = vmax.f32 %v1709, 0.0
        %v1714 = vmax.f32 %v1710, 0.0
        %v1715 = vmax.f32 %v1711, 0.0
        %v1716 = vmax.f32 %v1712, 0.0
        %v1717 = vpack.c.bf16 %v1714, %v1713
        %v1718 = vpack.c.bf16 %v1716, %v1715
        %1719 = vst [vmem:[%s348] sm:$0xff] %v1717
        %vm1720 = vsmask.f32 3328
        %vm1721 = vmand %vm1287, %vm1720
        %vm1722 = vcmask 1047556
        %vm1723 = vsmask.f32 7424
        %vm1724 = vmand %vm1722, %vm1723
        %vm1725 = vmor %vm1724, %vm1721
        %v1726 = vld [vmem:[%s348 + $0x8] sm:$0xff]
        %v1727 = vsel %vm1725, %v1718, %v1726
        %1728 = vst [vmem:[%s348 + $0x8] sm:$0xff] %v1727
        %p1729 = scmp.lt.s32.totalorder %s20, 1
        %s1730 = scalar_select %p1729, %s20, 1
        %s1731 = smul.addr %s1730, 4
        %s1732 = smul.addr %s1731, 4
        %s1733 = scalar_lea.vmem %s7, %s1732
        // Predicated region
        $region61: #{ricbe_decoder_forward.3} parent=47 // pred_check
          %p1734 = pneg %p195
        $region62: #{ricbe_decoder_forward.3} parent=47 // pred_check_branch
          %1736 = sbr.rel (%p1734) target = $region64
        $region63: #{ricbe_decoder_forward.3} parent=47 // pred_region
          _
        $region64: #{ricbe_decoder_forward.3} parent=47 // pred_fallthru
          _
      $region48: #{ricbe_decoder_forward.3} parent=5 // pred_fallthru
        _
      %p1737 = scmp.le.s32.totalorder 2, %s15
      // Predicated region
      $region65: #{ricbe_decoder_forward.3} parent=5 // pred_check
        %p1738 = pneg %p1737
      $region66: #{ricbe_decoder_forward.3} parent=5 // pred_check_branch
        %1740 = sbr.rel (%p1738) target = $region68
      $region67: #{ricbe_decoder_forward.3} parent=5 // pred_region
        %s1741 = ssub.s32 %s15, 2
        // Predicated region
        $region69: #{ricbe_decoder_forward.3} parent=67 // pred_check
          %p1742 = pneg %p201
        $region70: #{ricbe_decoder_forward.3} parent=67 // pred_check_branch
          %1744 = sbr.rel (%p1742) target = $region72
        $region71: #{ricbe_decoder_forward.3} parent=67 // pred_region
          %p1745 = scmp.lt.s32.totalorder %s21, 1
          %s1746 = scalar_select %p1745, %s21, 1
          %s1747 = smul.addr %s1746, 4
          %s1748 = smul.addr %s1747, 4
          %s1749 = scalar_lea.vmem %s7, %s1748
        $region72: #{ricbe_decoder_forward.3} parent=67 // pred_fallthru
          _
      $region68: #{ricbe_decoder_forward.3} parent=5 // pred_fallthru
        _
    $region6: #{ricbe_decoder_forward.3} parent=1 // loop_footer
      %s19 = sadd.s32 1, %s15
    $region7: #{ricbe_decoder_forward.3} parent=1 // loop_footer_branch
      %14 = sbr.rel target = $region3
    $region8: #{ricbe_decoder_forward.3} parent=1 // loop_exit
      _
    %1750 = vsyncpa [#allocation6], 1
    %s1751 = scalar_lea.sflag [#allocation6], 1
    %1752 = vsyncpa %s1751, 1
    %1753 = vsyncpa [#allocation8], 1

</llo_original>
